<compile_context>
chip_gen: v7x
topology: tpu7x:2x2x1
jax: 0.10.0
libtpu: 0.0.40
codegen_flags: <defaults>
</compile_context>

<pallas_src>
import math
import functools

import jax
import jax.numpy as jnp
from jax.experimental import pallas as pl
from jax.experimental.pallas import tpu as pltpu


def _landmark_transformer_kernel(
    x_ref, posb_ref, mask_ref, sel_ref, w_in_ref, a_ref, bstk_ref,
    w1_ref, w2_ref, qb_ref, b1_ref, vecs_ref, wfc_ref,
    out_ref,
    *, B, T, d_model, n_heads, n_layers, eps=1e-5,
):
    f32, bf16 = jnp.float32, jnp.bfloat16

    def layer_norm(v, g, b):
        # E[v^2] - mu^2 (biased, like torch); the two lane-reductions are
        # independent of each other so they can dual-issue on the XLUs.
        mu = jnp.mean(v, axis=-1, keepdims=True)
        ms = jnp.mean(v * v, axis=-1, keepdims=True)
        return (v - mu) * jax.lax.rsqrt(ms - mu * mu + eps) * g + b

    def vrow(r):                          # one packed (1, d_model) f32 param row
        return vecs_ref[pl.ds(r, 1), :]

    mask = mask_ref[...]                  # (BT, BT) cross-batch -inf bias, f32

    # ---- input projection; jpe / b_in / temporal PE pre-folded + pre-replicated
    h = jnp.dot(x_ref[...], w_in_ref[...], preferred_element_type=f32)
    h = h + posb_ref[...]                 # (B*T, d) f32

    for li in range(n_layers):            # post-norm nn.TransformerEncoderLayer
        base = li * 6
        # ---- multi-head self-attention (QKV / out-proj folds pre-applied) ----
        h_bf = h.astype(bf16)
        hT_bf = h.T.astype(bf16)          # one transpose per layer (hoisted)
        # all heads' Q-side projection in one matmul: (BT, H*d)
        qa = jnp.dot(h_bf, a_ref[li], preferred_element_type=f32) \
            + qb_ref[pl.ds(li, 1), :]
        ctx_parts = []
        for hi in range(n_heads):
            qa_h = qa[:, hi * d_model:(hi + 1) * d_model].astype(bf16)
            # scores_h = qa_h @ h^T  (1/sqrt(hd) folded into A / qb at init)
            s = jnp.dot(qa_h, hT_bf, preferred_element_type=f32) + mask
            s = s - jnp.max(s, axis=-1, keepdims=True)
            p = jnp.exp(s)
            p = p * pl.reciprocal(jnp.sum(p, axis=-1, keepdims=True), approx=True)
            ctx_parts.append(jnp.dot(p.astype(bf16), h_bf,
                                     preferred_element_type=f32))   # (BT, d)
        # head-sum as one K=H*d contraction (V / out-proj folded into bstk)
        ctx = jnp.concatenate(ctx_parts, axis=-1).astype(bf16)       # (BT, H*d)
        attn = jnp.dot(ctx, bstk_ref[li], preferred_element_type=f32) + vrow(base)
        # dropout = identity; residual + norm1
        h = layer_norm(h + attn, vrow(base + 1), vrow(base + 2))
        # ---- feed forward (ReLU) ----
        h_bf = h.astype(bf16)
        ff = jnp.dot(h_bf, w1_ref[li], preferred_element_type=f32) \
            + b1_ref[pl.ds(li, 1), :]
        ff = jnp.maximum(ff, 0.0).astype(bf16)
        ff = jnp.dot(ff, w2_ref[li], preferred_element_type=f32) + vrow(base + 3)
        # dropout = identity; residual + norm2
        h = layer_norm(h + ff, vrow(base + 4), vrow(base + 5))

    # ---- epilogue: gather last frame of each batch element with one selection
    #      matmul (LN is per-row, so LN-after-select == select-after-LN) ----
    feat = jnp.dot(sel_ref[...], h, preferred_element_type=f32)      # (B, d)
    gidx = n_layers * 6
    feat = layer_norm(feat, vrow(gidx), vrow(gidx + 1))
    wfc = wfc_ref[...]
    out_ref[...] = jnp.dot(feat, wfc[:d_model, :],
                           preferred_element_type=f32) + wfc[d_model:, :]


def _sinusoid_encoding(n_pos, d_model):
    position = jnp.arange(n_pos, dtype=jnp.float32)[:, None]
    div_term = jnp.exp(
        jnp.arange(0, d_model, 2, dtype=jnp.float32) * (-math.log(10000.0) / d_model))
    pe = jnp.zeros((n_pos, d_model), dtype=jnp.float32)
    pe = pe.at[:, 0::2].set(jnp.sin(position * div_term))
    pe = pe.at[:, 1::2].set(jnp.cos(position * div_term))
    return pe


def pack_params(raw, *, num_joints, num_angles, d_model, n_heads):
    """One-time (init-time) analytic folds + packing into kernel operands."""
    n_layers = raw["wqkv"].shape[0]
    hd = d_model // n_heads
    scale = 1.0 / math.sqrt(hd)

    # fold joint_pos_embed + input-proj bias + temporal PE into one additive
    # (max_frames, d_model) bias applied after the input projection.
    jpe_row = jnp.concatenate(
        [raw["jpe"].reshape(1, num_joints * 4),
         jnp.zeros((1, num_angles), jnp.float32)], axis=-1)           # (1, Din)
    pos_bias = raw["pos"] + raw["b_in"][None, :] + jpe_row @ raw["w_in"]

    a_lane, b_stack, qb_rows, vec_rows = [], [], [], []
    for li in range(n_layers):
        wq = raw["wqkv"][li][:, 0 * d_model:1 * d_model]
        wk = raw["wqkv"][li][:, 1 * d_model:2 * d_model]
        wv = raw["wqkv"][li][:, 2 * d_model:3 * d_model]
        bq = raw["bqkv"][li][0 * d_model:1 * d_model]
        bv = raw["bqkv"][li][2 * d_model:3 * d_model]
        wo, bo = raw["wo"][li], raw["bo"][li]

        a_h, b_h, wkb_h = [], [], []
        bo_fold = bo
        for h in range(n_heads):
            sl = slice(h * hd, (h + 1) * hd)
            a_h.append(scale * (wq[:, sl] @ wk[:, sl].T))             # (d, d)
            wkb_h.append(scale * (wk[:, sl] @ bq[sl]))                # (d,) K-side bias fold
            b_h.append(wv[:, sl] @ wo[sl, :])                         # (d, d)
            bo_fold = bo_fold + bv[sl] @ wo[sl, :]                    # V-bias into out bias
        a_lane.append(jnp.concatenate(a_h, axis=1))                   # (d, H*d)
        b_stack.append(jnp.concatenate(b_h, axis=0))                  # (H*d, d)
        qb_rows.append(jnp.concatenate(wkb_h, axis=0))                # (H*d,)
        vec_rows.extend([bo_fold, raw["ln1_g"][li], raw["ln1_b"][li], raw["b2"][li],
                         raw["ln2_g"][li], raw["ln2_b"][li]])
    vec_rows.extend([raw["tn_g"], raw["tn_b"]])

    return dict(
        w_in=raw["w_in"].astype(jnp.float32),                         # (Din, d)
        pos_bias=pos_bias.astype(jnp.float32),                        # (max_frames, d)
        a_lane=jnp.stack(a_lane).astype(jnp.bfloat16),                # (L, d, H*d)
        b_stack=jnp.stack(b_stack).astype(jnp.bfloat16),              # (L, H*d, d)
        qb=jnp.stack(qb_rows).astype(jnp.float32),                    # (L, H*d)
        w1=raw["w1"].astype(jnp.bfloat16),                            # (L, d, 4d)
        b1=raw["b1"].astype(jnp.float32),                             # (L, 4d)
        w2=raw["w2"].astype(jnp.bfloat16),                            # (L, 4d, d)
        vecs=jnp.stack(vec_rows).astype(jnp.float32),                 # (L*6+2, d)
        wfc_aug=jnp.concatenate([raw["w_fc"], raw["b_fc"][None, :]],
                                axis=0).astype(jnp.float32),          # (d+1, C)
    )


def init_params(key, *, num_joints=21, num_angles=15, d_model=64, n_heads=4,
                n_layers=2, max_frames=30, num_classes=8):
    din = num_joints * 4 + num_angles
    dff = 4 * d_model
    keys = iter(jax.random.split(key, 7))

    def nrm(shape, scale=0.02):
        return (scale * jax.random.normal(next(keys), shape)).astype(jnp.float32)

    # NOTE: the module initializes joint_pos_embed to zeros; use a small random
    # value instead so the coords-offset path is actually exercised.
    raw = dict(
        jpe=nrm((num_joints, 4)),
        w_in=nrm((din, d_model)), b_in=jnp.zeros((d_model,), jnp.float32),
        pos=_sinusoid_encoding(max_frames, d_model),
        wqkv=nrm((n_layers, d_model, 3 * d_model)),
        bqkv=jnp.zeros((n_layers, 3 * d_model), jnp.float32),
        wo=nrm((n_layers, d_model, d_model)),
        bo=jnp.zeros((n_layers, d_model), jnp.float32),
        ln1_g=jnp.ones((n_layers, d_model), jnp.float32),
        ln1_b=jnp.zeros((n_layers, d_model), jnp.float32),
        w1=nrm((n_layers, d_model, dff)), b1=jnp.zeros((n_layers, dff), jnp.float32),
        w2=nrm((n_layers, dff, d_model)), b2=jnp.zeros((n_layers, d_model), jnp.float32),
        ln2_g=jnp.ones((n_layers, d_model), jnp.float32),
        ln2_b=jnp.zeros((n_layers, d_model), jnp.float32),
        tn_g=jnp.ones((d_model,), jnp.float32), tn_b=jnp.zeros((d_model,), jnp.float32),
        w_fc=nrm((d_model, num_classes)), b_fc=jnp.zeros((num_classes,), jnp.float32),
    )
    return pack_params(raw, num_joints=num_joints, num_angles=num_angles,
                       d_model=d_model, n_heads=n_heads)


def landmark_transformer_forward(x, params, *, d_model, n_heads, n_layers, num_classes):
    B, T, din = x.shape
    BT = B * T
    x2 = x.reshape(BT, din)              # fold batch into the matmul M dimension

    # constants moved out of the kernel (perf review): block-diagonal mask,
    # B-replicated positional bias, last-frame row-selection matrix.
    row = jnp.arange(BT, dtype=jnp.int32) // T
    mask = jnp.where(row[:, None] == row[None, :], 0.0, -1e30).astype(jnp.float32)
    sel = (jnp.arange(BT, dtype=jnp.int32)[None, :]
           == (jnp.arange(B, dtype=jnp.int32) * T + T - 1)[:, None]).astype(jnp.float32)
    posb = jnp.tile(params["pos_bias"][:T], (B, 1))                   # (B*T, d)

    inputs = (
        x2, posb, mask, sel, params["w_in"],
        params["a_lane"], params["b_stack"], params["w1"], params["w2"],
        params["qb"], params["b1"], params["vecs"], params["wfc_aug"],
    )
    kernel = functools.partial(
        _landmark_transformer_kernel,
        B=B, T=T, d_model=d_model, n_heads=n_heads, n_layers=n_layers,
    )
    vmem = pltpu.MemorySpace.VMEM
    return pl.pallas_call(
        kernel,
        out_shape=jax.ShapeDtypeStruct((B, num_classes), jnp.float32),
        in_specs=[pl.BlockSpec(memory_space=vmem)] * len(inputs),
        out_specs=pl.BlockSpec(memory_space=vmem),
    )(*inputs)


if __name__ == "__main__":
    num_joints, num_angles = 21, 15
    d_model, n_heads, n_layers = 64, 4, 2
    max_frames, num_classes = 30, 8
    B, T = 2, 8
    din = num_joints * 4 + num_angles  # 99

    key = jax.random.PRNGKey(0)
    k_x, k_p = jax.random.split(key)
    x = jax.random.normal(k_x, (B, T, din), dtype=jnp.float32)
    params = init_params(
        k_p, num_joints=num_joints, num_angles=num_angles, d_model=d_model,
        n_heads=n_heads, n_layers=n_layers, max_frames=max_frames,
        num_classes=num_classes)

    logits = landmark_transformer_forward(
        x, params, d_model=d_model, n_heads=n_heads, n_layers=n_layers,
        num_classes=num_classes)
    jax.block_until_ready(logits)
    assert logits.shape == (B, num_classes) and logits.dtype == jnp.float32
    assert bool(jnp.all(jnp.isfinite(logits)))
    print("KERNEL_OK")
</pallas_src>

<mosaic_0001>
module attributes {stable_mosaic.version = 11 : i64} {
  func.func @_landmark_transformer_kernel(%arg0: memref<16x99xf32, #tpu.memory_space<vmem>>, %arg1: memref<16x64xf32, #tpu.memory_space<vmem>>, %arg2: memref<16x16xf32, #tpu.memory_space<vmem>>, %arg3: memref<2x16xf32, #tpu.memory_space<vmem>>, %arg4: memref<99x64xf32, #tpu.memory_space<vmem>>, %arg5: memref<2x64x256xbf16, #tpu.memory_space<vmem>>, %arg6: memref<2x256x64xbf16, #tpu.memory_space<vmem>>, %arg7: memref<2x64x256xbf16, #tpu.memory_space<vmem>>, %arg8: memref<2x256x64xbf16, #tpu.memory_space<vmem>>, %arg9: memref<2x256xf32, #tpu.memory_space<vmem>>, %arg10: memref<2x256xf32, #tpu.memory_space<vmem>>, %arg11: memref<14x64xf32, #tpu.memory_space<vmem>>, %arg12: memref<65x8xf32, #tpu.memory_space<vmem>>, %arg13: memref<2x8xf32, #tpu.memory_space<vmem>>) attributes {dimension_semantics = [], scalar_prefetch = 0 : i64, scratch_operands = 0 : i64, tpu.core_type = #tpu.core_type<tc>} {
    %c0 = arith.constant 0 : index
    %c0_0 = arith.constant 0 : index
    %0 = vector.load %arg2[%c0, %c0_0] : memref<16x16xf32, #tpu.memory_space<vmem>>, vector<16x16xf32>
    %c0_1 = arith.constant 0 : index
    %c0_2 = arith.constant 0 : index
    %1 = vector.load %arg0[%c0_1, %c0_2] : memref<16x99xf32, #tpu.memory_space<vmem>>, vector<16x99xf32>
    %c0_3 = arith.constant 0 : index
    %c0_4 = arith.constant 0 : index
    %2 = vector.load %arg4[%c0_3, %c0_4] : memref<99x64xf32, #tpu.memory_space<vmem>>, vector<99x64xf32>
    %cst = arith.constant dense<0.000000e+00> : vector<16x64xf32>
    %3 = tpu.matmul %1, %2, %cst {dimension_numbers = #tpu.dot_dimension_numbers<[1], [0], [0], [1], [0, 0, 1, 1], [], []>} : vector<16x99xf32>, vector<99x64xf32>, vector<16x64xf32> -> vector<16x64xf32>
    %c0_5 = arith.constant 0 : index
    %c0_6 = arith.constant 0 : index
    %4 = vector.load %arg1[%c0_5, %c0_6] : memref<16x64xf32, #tpu.memory_space<vmem>>, vector<16x64xf32>
    %5 = arith.addf %3, %4 : vector<16x64xf32>
    %6 = arith.truncf %5 : vector<16x64xf32> to vector<16x64xbf16>
    %7 = tpu.transpose %5, [1, 0] : vector<16x64xf32> -> vector<64x16xf32>
    %8 = arith.truncf %7 : vector<64x16xf32> to vector<64x16xbf16>
    %c0_7 = arith.constant 0 : index
    %c0_8 = arith.constant 0 : index
    %c0_9 = arith.constant 0 : index
    %9 = vector.load %arg5[%c0_7, %c0_8, %c0_9] : memref<2x64x256xbf16, #tpu.memory_space<vmem>>, vector<1x64x256xbf16>
    %10 = vector.shape_cast %9 : vector<1x64x256xbf16> to vector<64x256xbf16>
    %cst_10 = arith.constant dense<0.000000e+00> : vector<16x256xf32>
    %11 = tpu.matmul %6, %10, %cst_10 {dimension_numbers = #tpu.dot_dimension_numbers<[1], [0], [0], [1], [0, 0, 1, 1], [], []>} : vector<16x64xbf16>, vector<64x256xbf16>, vector<16x256xf32> -> vector<16x256xf32>
    %c0_11 = arith.constant 0 : index
    %c0_12 = arith.constant 0 : index
    %12 = vector.load %arg9[%c0_11, %c0_12] : memref<2x256xf32, #tpu.memory_space<vmem>>, vector<1x256xf32>
    %13 = vector.broadcast %12 : vector<1x256xf32> to vector<16x256xf32>
    %14 = arith.addf %11, %13 : vector<16x256xf32>
    %15 = vector.extract_strided_slice %14 {offsets = [0, 0], sizes = [16, 64], strides = [1, 1]} : vector<16x256xf32> to vector<16x64xf32>
    %16 = arith.truncf %15 : vector<16x64xf32> to vector<16x64xbf16>
    %cst_13 = arith.constant dense<0.000000e+00> : vector<16x16xf32>
    %17 = tpu.matmul %16, %8, %cst_13 {dimension_numbers = #tpu.dot_dimension_numbers<[1], [0], [0], [1], [0, 0, 1, 1], [], []>} : vector<16x64xbf16>, vector<64x16xbf16>, vector<16x16xf32> -> vector<16x16xf32>
    %18 = arith.addf %17, %0 : vector<16x16xf32>
    %cst_14 = arith.constant dense<0xFF800000> : vector<16xf32>
    %19 = vector.multi_reduction <maximumf>, %18, %cst_14 [1] : vector<16x16xf32> to vector<16xf32>
    %20 = vector.shape_cast %19 : vector<16xf32> to vector<16x1xf32>
    %21 = vector.broadcast %20 : vector<16x1xf32> to vector<16x16xf32>
    %22 = arith.subf %18, %21 : vector<16x16xf32>
    %23 = math.exp %22 : vector<16x16xf32>
    %cst_15 = arith.constant dense<0.000000e+00> : vector<16xf32>
    %24 = vector.multi_reduction <add>, %23, %cst_15 [1] : vector<16x16xf32> to vector<16xf32>
    %25 = vector.shape_cast %24 : vector<16xf32> to vector<16x1xf32>
    %26 = tpu.reciprocal %25 {approx = true} : vector<16x1xf32> -> vector<16x1xf32>
    %27 = vector.broadcast %26 : vector<16x1xf32> to vector<16x16xf32>
    %28 = arith.mulf %23, %27 : vector<16x16xf32>
    %29 = arith.truncf %28 : vector<16x16xf32> to vector<16x16xbf16>
    %cst_16 = arith.constant dense<0.000000e+00> : vector<16x64xf32>
    %30 = tpu.matmul %29, %6, %cst_16 {dimension_numbers = #tpu.dot_dimension_numbers<[1], [0], [0], [1], [0, 0, 1, 1], [], []>} : vector<16x16xbf16>, vector<16x64xbf16>, vector<16x64xf32> -> vector<16x64xf32>
    %31 = vector.extract_strided_slice %14 {offsets = [0, 64], sizes = [16, 64], strides = [1, 1]} : vector<16x256xf32> to vector<16x64xf32>
    %32 = arith.truncf %31 : vector<16x64xf32> to vector<16x64xbf16>
    %cst_17 = arith.constant dense<0.000000e+00> : vector<16x16xf32>
    %33 = tpu.matmul %32, %8, %cst_17 {dimension_numbers = #tpu.dot_dimension_numbers<[1], [0], [0], [1], [0, 0, 1, 1], [], []>} : vector<16x64xbf16>, vector<64x16xbf16>, vector<16x16xf32> -> vector<16x16xf32>
    %34 = arith.addf %33, %0 : vector<16x16xf32>
    %cst_18 = arith.constant dense<0xFF800000> : vector<16xf32>
    %35 = vector.multi_reduction <maximumf>, %34, %cst_18 [1] : vector<16x16xf32> to vector<16xf32>
    %36 = vector.shape_cast %35 : vector<16xf32> to vector<16x1xf32>
    %37 = vector.broadcast %36 : vector<16x1xf32> to vector<16x16xf32>
    %38 = arith.subf %34, %37 : vector<16x16xf32>
    %39 = math.exp %38 : vector<16x16xf32>
    %cst_19 = arith.constant dense<0.000000e+00> : vector<16xf32>
    %40 = vector.multi_reduction <add>, %39, %cst_19 [1] : vector<16x16xf32> to vector<16xf32>
    %41 = vector.shape_cast %40 : vector<16xf32> to vector<16x1xf32>
    %42 = tpu.reciprocal %41 {approx = true} : vector<16x1xf32> -> vector<16x1xf32>
    %43 = vector.broadcast %42 : vector<16x1xf32> to vector<16x16xf32>
    %44 = arith.mulf %39, %43 : vector<16x16xf32>
    %45 = arith.truncf %44 : vector<16x16xf32> to vector<16x16xbf16>
    %cst_20 = arith.constant dense<0.000000e+00> : vector<16x64xf32>
    %46 = tpu.matmul %45, %6, %cst_20 {dimension_numbers = #tpu.dot_dimension_numbers<[1], [0], [0], [1], [0, 0, 1, 1], [], []>} : vector<16x16xbf16>, vector<16x64xbf16>, vector<16x64xf32> -> vector<16x64xf32>
    %47 = vector.extract_strided_slice %14 {offsets = [0, 128], sizes = [16, 64], strides = [1, 1]} : vector<16x256xf32> to vector<16x64xf32>
    %48 = arith.truncf %47 : vector<16x64xf32> to vector<16x64xbf16>
    %cst_21 = arith.constant dense<0.000000e+00> : vector<16x16xf32>
    %49 = tpu.matmul %48, %8, %cst_21 {dimension_numbers = #tpu.dot_dimension_numbers<[1], [0], [0], [1], [0, 0, 1, 1], [], []>} : vector<16x64xbf16>, vector<64x16xbf16>, vector<16x16xf32> -> vector<16x16xf32>
    %50 = arith.addf %49, %0 : vector<16x16xf32>
    %cst_22 = arith.constant dense<0xFF800000> : vector<16xf32>
    %51 = vector.multi_reduction <maximumf>, %50, %cst_22 [1] : vector<16x16xf32> to vector<16xf32>
    %52 = vector.shape_cast %51 : vector<16xf32> to vector<16x1xf32>
    %53 = vector.broadcast %52 : vector<16x1xf32> to vector<16x16xf32>
    %54 = arith.subf %50, %53 : vector<16x16xf32>
    %55 = math.exp %54 : vector<16x16xf32>
    %cst_23 = arith.constant dense<0.000000e+00> : vector<16xf32>
    %56 = vector.multi_reduction <add>, %55, %cst_23 [1] : vector<16x16xf32> to vector<16xf32>
    %57 = vector.shape_cast %56 : vector<16xf32> to vector<16x1xf32>
    %58 = tpu.reciprocal %57 {approx = true} : vector<16x1xf32> -> vector<16x1xf32>
    %59 = vector.broadcast %58 : vector<16x1xf32> to vector<16x16xf32>
    %60 = arith.mulf %55, %59 : vector<16x16xf32>
    %61 = arith.truncf %60 : vector<16x16xf32> to vector<16x16xbf16>
    %cst_24 = arith.constant dense<0.000000e+00> : vector<16x64xf32>
    %62 = tpu.matmul %61, %6, %cst_24 {dimension_numbers = #tpu.dot_dimension_numbers<[1], [0], [0], [1], [0, 0, 1, 1], [], []>} : vector<16x16xbf16>, vector<16x64xbf16>, vector<16x64xf32> -> vector<16x64xf32>
    %63 = vector.extract_strided_slice %14 {offsets = [0, 192], sizes = [16, 64], strides = [1, 1]} : vector<16x256xf32> to vector<16x64xf32>
    %64 = arith.truncf %63 : vector<16x64xf32> to vector<16x64xbf16>
    %cst_25 = arith.constant dense<0.000000e+00> : vector<16x16xf32>
    %65 = tpu.matmul %64, %8, %cst_25 {dimension_numbers = #tpu.dot_dimension_numbers<[1], [0], [0], [1], [0, 0, 1, 1], [], []>} : vector<16x64xbf16>, vector<64x16xbf16>, vector<16x16xf32> -> vector<16x16xf32>
    %66 = arith.addf %65, %0 : vector<16x16xf32>
    %cst_26 = arith.constant dense<0xFF800000> : vector<16xf32>
    %67 = vector.multi_reduction <maximumf>, %66, %cst_26 [1] : vector<16x16xf32> to vector<16xf32>
    %68 = vector.shape_cast %67 : vector<16xf32> to vector<16x1xf32>
    %69 = vector.broadcast %68 : vector<16x1xf32> to vector<16x16xf32>
    %70 = arith.subf %66, %69 : vector<16x16xf32>
    %71 = math.exp %70 : vector<16x16xf32>
    %cst_27 = arith.constant dense<0.000000e+00> : vector<16xf32>
    %72 = vector.multi_reduction <add>, %71, %cst_27 [1] : vector<16x16xf32> to vector<16xf32>
    %73 = vector.shape_cast %72 : vector<16xf32> to vector<16x1xf32>
    %74 = tpu.reciprocal %73 {approx = true} : vector<16x1xf32> -> vector<16x1xf32>
    %75 = vector.broadcast %74 : vector<16x1xf32> to vector<16x16xf32>
    %76 = arith.mulf %71, %75 : vector<16x16xf32>
    %77 = arith.truncf %76 : vector<16x16xf32> to vector<16x16xbf16>
    %cst_28 = arith.constant dense<0.000000e+00> : vector<16x64xf32>
    %78 = tpu.matmul %77, %6, %cst_28 {dimension_numbers = #tpu.dot_dimension_numbers<[1], [0], [0], [1], [0, 0, 1, 1], [], []>} : vector<16x16xbf16>, vector<16x64xbf16>, vector<16x64xf32> -> vector<16x64xf32>
    %79 = tpu.concatenate %30, %46, %62, %78 in 1 : vector<16x64xf32>, vector<16x64xf32>, vector<16x64xf32>, vector<16x64xf32> -> vector<16x256xf32>
    %80 = arith.truncf %79 : vector<16x256xf32> to vector<16x256xbf16>
    %c0_29 = arith.constant 0 : index
    %c0_30 = arith.constant 0 : index
    %c0_31 = arith.constant 0 : index
    %81 = vector.load %arg6[%c0_29, %c0_30, %c0_31] : memref<2x256x64xbf16, #tpu.memory_space<vmem>>, vector<1x256x64xbf16>
    %82 = vector.shape_cast %81 : vector<1x256x64xbf16> to vector<256x64xbf16>
    %cst_32 = arith.constant dense<0.000000e+00> : vector<16x64xf32>
    %83 = tpu.matmul %80, %82, %cst_32 {dimension_numbers = #tpu.dot_dimension_numbers<[1], [0], [0], [1], [0, 0, 1, 1], [], []>} : vector<16x256xbf16>, vector<256x64xbf16>, vector<16x64xf32> -> vector<16x64xf32>
    %c0_33 = arith.constant 0 : index
    %c0_34 = arith.constant 0 : index
    %84 = vector.load %arg11[%c0_33, %c0_34] : memref<14x64xf32, #tpu.memory_space<vmem>>, vector<1x64xf32>
    %85 = vector.broadcast %84 : vector<1x64xf32> to vector<16x64xf32>
    %86 = arith.addf %83, %85 : vector<16x64xf32>
    %87 = arith.addf %5, %86 : vector<16x64xf32>
    %c1 = arith.constant 1 : index
    %c0_35 = arith.constant 0 : index
    %88 = vector.load %arg11[%c1, %c0_35] : memref<14x64xf32, #tpu.memory_space<vmem>>, vector<1x64xf32>
    %c2 = arith.constant 2 : index
    %c0_36 = arith.constant 0 : index
    %89 = vector.load %arg11[%c2, %c0_36] : memref<14x64xf32, #tpu.memory_space<vmem>>, vector<1x64xf32>
    %cst_37 = arith.constant dense<0.000000e+00> : vector<16xf32>
    %90 = vector.multi_reduction <add>, %87, %cst_37 [1] : vector<16x64xf32> to vector<16xf32>
    %91 = vector.shape_cast %90 : vector<16xf32> to vector<16x1xf32>
    %cst_38 = arith.constant 6.400000e+01 : f32
    %92 = vector.broadcast %cst_38 : f32 to vector<16x1xf32>
    %93 = arith.divf %91, %92 : vector<16x1xf32>
    %94 = arith.mulf %87, %87 : vector<16x64xf32>
    %cst_39 = arith.constant dense<0.000000e+00> : vector<16xf32>
    %95 = vector.multi_reduction <add>, %94, %cst_39 [1] : vector<16x64xf32> to vector<16xf32>
    %96 = vector.shape_cast %95 : vector<16xf32> to vector<16x1xf32>
    %cst_40 = arith.constant 6.400000e+01 : f32
    %97 = vector.broadcast %cst_40 : f32 to vector<16x1xf32>
    %98 = arith.divf %96, %97 : vector<16x1xf32>
    %99 = vector.broadcast %93 : vector<16x1xf32> to vector<16x64xf32>
    %100 = arith.subf %87, %99 : vector<16x64xf32>
    %101 = arith.mulf %93, %93 : vector<16x1xf32>
    %102 = arith.subf %98, %101 : vector<16x1xf32>
    %cst_41 = arith.constant 9.99999974E-6 : f32
    %103 = vector.broadcast %cst_41 : f32 to vector<16x1xf32>
    %104 = arith.addf %102, %103 : vector<16x1xf32>
    %105 = math.rsqrt %104 : vector<16x1xf32>
    %106 = vector.broadcast %105 : vector<16x1xf32> to vector<16x64xf32>
    %107 = arith.mulf %100, %106 : vector<16x64xf32>
    %108 = vector.broadcast %88 : vector<1x64xf32> to vector<16x64xf32>
    %109 = arith.mulf %107, %108 : vector<16x64xf32>
    %110 = vector.broadcast %89 : vector<1x64xf32> to vector<16x64xf32>
    %111 = arith.addf %109, %110 : vector<16x64xf32>
    %112 = arith.truncf %111 : vector<16x64xf32> to vector<16x64xbf16>
    %c0_42 = arith.constant 0 : index
    %c0_43 = arith.constant 0 : index
    %c0_44 = arith.constant 0 : index
    %113 = vector.load %arg7[%c0_42, %c0_43, %c0_44] : memref<2x64x256xbf16, #tpu.memory_space<vmem>>, vector<1x64x256xbf16>
    %114 = vector.shape_cast %113 : vector<1x64x256xbf16> to vector<64x256xbf16>
    %cst_45 = arith.constant dense<0.000000e+00> : vector<16x256xf32>
    %115 = tpu.matmul %112, %114, %cst_45 {dimension_numbers = #tpu.dot_dimension_numbers<[1], [0], [0], [1], [0, 0, 1, 1], [], []>} : vector<16x64xbf16>, vector<64x256xbf16>, vector<16x256xf32> -> vector<16x256xf32>
    %c0_46 = arith.constant 0 : index
    %c0_47 = arith.constant 0 : index
    %116 = vector.load %arg10[%c0_46, %c0_47] : memref<2x256xf32, #tpu.memory_space<vmem>>, vector<1x256xf32>
    %117 = vector.broadcast %116 : vector<1x256xf32> to vector<16x256xf32>
    %118 = arith.addf %115, %117 : vector<16x256xf32>
    %cst_48 = arith.constant 0.000000e+00 : f32
    %119 = vector.broadcast %cst_48 : f32 to vector<16x256xf32>
    %120 = arith.maximumf %118, %119 : vector<16x256xf32>
    %121 = arith.truncf %120 : vector<16x256xf32> to vector<16x256xbf16>
    %c0_49 = arith.constant 0 : index
    %c0_50 = arith.constant 0 : index
    %c0_51 = arith.constant 0 : index
    %122 = vector.load %arg8[%c0_49, %c0_50, %c0_51] : memref<2x256x64xbf16, #tpu.memory_space<vmem>>, vector<1x256x64xbf16>
    %123 = vector.shape_cast %122 : vector<1x256x64xbf16> to vector<256x64xbf16>
    %cst_52 = arith.constant dense<0.000000e+00> : vector<16x64xf32>
    %124 = tpu.matmul %121, %123, %cst_52 {dimension_numbers = #tpu.dot_dimension_numbers<[1], [0], [0], [1], [0, 0, 1, 1], [], []>} : vector<16x256xbf16>, vector<256x64xbf16>, vector<16x64xf32> -> vector<16x64xf32>
    %c3 = arith.constant 3 : index
    %c0_53 = arith.constant 0 : index
    %125 = vector.load %arg11[%c3, %c0_53] : memref<14x64xf32, #tpu.memory_space<vmem>>, vector<1x64xf32>
    %126 = vector.broadcast %125 : vector<1x64xf32> to vector<16x64xf32>
    %127 = arith.addf %124, %126 : vector<16x64xf32>
    %128 = arith.addf %111, %127 : vector<16x64xf32>
    %c4 = arith.constant 4 : index
    %c0_54 = arith.constant 0 : index
    %129 = vector.load %arg11[%c4, %c0_54] : memref<14x64xf32, #tpu.memory_space<vmem>>, vector<1x64xf32>
    %c5 = arith.constant 5 : index
    %c0_55 = arith.constant 0 : index
    %130 = vector.load %arg11[%c5, %c0_55] : memref<14x64xf32, #tpu.memory_space<vmem>>, vector<1x64xf32>
    %cst_56 = arith.constant dense<0.000000e+00> : vector<16xf32>
    %131 = vector.multi_reduction <add>, %128, %cst_56 [1] : vector<16x64xf32> to vector<16xf32>
    %132 = vector.shape_cast %131 : vector<16xf32> to vector<16x1xf32>
    %cst_57 = arith.constant 6.400000e+01 : f32
    %133 = vector.broadcast %cst_57 : f32 to vector<16x1xf32>
    %134 = arith.divf %132, %133 : vector<16x1xf32>
    %135 = arith.mulf %128, %128 : vector<16x64xf32>
    %cst_58 = arith.constant dense<0.000000e+00> : vector<16xf32>
    %136 = vector.multi_reduction <add>, %135, %cst_58 [1] : vector<16x64xf32> to vector<16xf32>
    %137 = vector.shape_cast %136 : vector<16xf32> to vector<16x1xf32>
    %cst_59 = arith.constant 6.400000e+01 : f32
    %138 = vector.broadcast %cst_59 : f32 to vector<16x1xf32>
    %139 = arith.divf %137, %138 : vector<16x1xf32>
    %140 = vector.broadcast %134 : vector<16x1xf32> to vector<16x64xf32>
    %141 = arith.subf %128, %140 : vector<16x64xf32>
    %142 = arith.mulf %134, %134 : vector<16x1xf32>
    %143 = arith.subf %139, %142 : vector<16x1xf32>
    %cst_60 = arith.constant 9.99999974E-6 : f32
    %144 = vector.broadcast %cst_60 : f32 to vector<16x1xf32>
    %145 = arith.addf %143, %144 : vector<16x1xf32>
    %146 = math.rsqrt %145 : vector<16x1xf32>
    %147 = vector.broadcast %146 : vector<16x1xf32> to vector<16x64xf32>
    %148 = arith.mulf %141, %147 : vector<16x64xf32>
    %149 = vector.broadcast %129 : vector<1x64xf32> to vector<16x64xf32>
    %150 = arith.mulf %148, %149 : vector<16x64xf32>
    %151 = vector.broadcast %130 : vector<1x64xf32> to vector<16x64xf32>
    %152 = arith.addf %150, %151 : vector<16x64xf32>
    %153 = arith.truncf %152 : vector<16x64xf32> to vector<16x64xbf16>
    %154 = tpu.transpose %152, [1, 0] : vector<16x64xf32> -> vector<64x16xf32>
    %155 = arith.truncf %154 : vector<64x16xf32> to vector<64x16xbf16>
    %c1_61 = arith.constant 1 : index
    %c0_62 = arith.constant 0 : index
    %c0_63 = arith.constant 0 : index
    %156 = vector.load %arg5[%c1_61, %c0_62, %c0_63] : memref<2x64x256xbf16, #tpu.memory_space<vmem>>, vector<1x64x256xbf16>
    %157 = vector.shape_cast %156 : vector<1x64x256xbf16> to vector<64x256xbf16>
    %cst_64 = arith.constant dense<0.000000e+00> : vector<16x256xf32>
    %158 = tpu.matmul %153, %157, %cst_64 {dimension_numbers = #tpu.dot_dimension_numbers<[1], [0], [0], [1], [0, 0, 1, 1], [], []>} : vector<16x64xbf16>, vector<64x256xbf16>, vector<16x256xf32> -> vector<16x256xf32>
    %c1_65 = arith.constant 1 : index
    %c0_66 = arith.constant 0 : index
    %159 = vector.load %arg9[%c1_65, %c0_66] : memref<2x256xf32, #tpu.memory_space<vmem>>, vector<1x256xf32>
    %160 = vector.broadcast %159 : vector<1x256xf32> to vector<16x256xf32>
    %161 = arith.addf %158, %160 : vector<16x256xf32>
    %162 = vector.extract_strided_slice %161 {offsets = [0, 0], sizes = [16, 64], strides = [1, 1]} : vector<16x256xf32> to vector<16x64xf32>
    %163 = arith.truncf %162 : vector<16x64xf32> to vector<16x64xbf16>
    %cst_67 = arith.constant dense<0.000000e+00> : vector<16x16xf32>
    %164 = tpu.matmul %163, %155, %cst_67 {dimension_numbers = #tpu.dot_dimension_numbers<[1], [0], [0], [1], [0, 0, 1, 1], [], []>} : vector<16x64xbf16>, vector<64x16xbf16>, vector<16x16xf32> -> vector<16x16xf32>
    %165 = arith.addf %164, %0 : vector<16x16xf32>
    %cst_68 = arith.constant dense<0xFF800000> : vector<16xf32>
    %166 = vector.multi_reduction <maximumf>, %165, %cst_68 [1] : vector<16x16xf32> to vector<16xf32>
    %167 = vector.shape_cast %166 : vector<16xf32> to vector<16x1xf32>
    %168 = vector.broadcast %167 : vector<16x1xf32> to vector<16x16xf32>
    %169 = arith.subf %165, %168 : vector<16x16xf32>
    %170 = math.exp %169 : vector<16x16xf32>
    %cst_69 = arith.constant dense<0.000000e+00> : vector<16xf32>
    %171 = vector.multi_reduction <add>, %170, %cst_69 [1] : vector<16x16xf32> to vector<16xf32>
    %172 = vector.shape_cast %171 : vector<16xf32> to vector<16x1xf32>
    %173 = tpu.reciprocal %172 {approx = true} : vector<16x1xf32> -> vector<16x1xf32>
    %174 = vector.broadcast %173 : vector<16x1xf32> to vector<16x16xf32>
    %175 = arith.mulf %170, %174 : vector<16x16xf32>
    %176 = arith.truncf %175 : vector<16x16xf32> to vector<16x16xbf16>
    %cst_70 = arith.constant dense<0.000000e+00> : vector<16x64xf32>
    %177 = tpu.matmul %176, %153, %cst_70 {dimension_numbers = #tpu.dot_dimension_numbers<[1], [0], [0], [1], [0, 0, 1, 1], [], []>} : vector<16x16xbf16>, vector<16x64xbf16>, vector<16x64xf32> -> vector<16x64xf32>
    %178 = vector.extract_strided_slice %161 {offsets = [0, 64], sizes = [16, 64], strides = [1, 1]} : vector<16x256xf32> to vector<16x64xf32>
    %179 = arith.truncf %178 : vector<16x64xf32> to vector<16x64xbf16>
    %cst_71 = arith.constant dense<0.000000e+00> : vector<16x16xf32>
    %180 = tpu.matmul %179, %155, %cst_71 {dimension_numbers = #tpu.dot_dimension_numbers<[1], [0], [0], [1], [0, 0, 1, 1], [], []>} : vector<16x64xbf16>, vector<64x16xbf16>, vector<16x16xf32> -> vector<16x16xf32>
    %181 = arith.addf %180, %0 : vector<16x16xf32>
    %cst_72 = arith.constant dense<0xFF800000> : vector<16xf32>
    %182 = vector.multi_reduction <maximumf>, %181, %cst_72 [1] : vector<16x16xf32> to vector<16xf32>
    %183 = vector.shape_cast %182 : vector<16xf32> to vector<16x1xf32>
    %184 = vector.broadcast %183 : vector<16x1xf32> to vector<16x16xf32>
    %185 = arith.subf %181, %184 : vector<16x16xf32>
    %186 = math.exp %185 : vector<16x16xf32>
    %cst_73 = arith.constant dense<0.000000e+00> : vector<16xf32>
    %187 = vector.multi_reduction <add>, %186, %cst_73 [1] : vector<16x16xf32> to vector<16xf32>
    %188 = vector.shape_cast %187 : vector<16xf32> to vector<16x1xf32>
    %189 = tpu.reciprocal %188 {approx = true} : vector<16x1xf32> -> vector<16x1xf32>
    %190 = vector.broadcast %189 : vector<16x1xf32> to vector<16x16xf32>
    %191 = arith.mulf %186, %190 : vector<16x16xf32>
    %192 = arith.truncf %191 : vector<16x16xf32> to vector<16x16xbf16>
    %cst_74 = arith.constant dense<0.000000e+00> : vector<16x64xf32>
    %193 = tpu.matmul %192, %153, %cst_74 {dimension_numbers = #tpu.dot_dimension_numbers<[1], [0], [0], [1], [0, 0, 1, 1], [], []>} : vector<16x16xbf16>, vector<16x64xbf16>, vector<16x64xf32> -> vector<16x64xf32>
    %194 = vector.extract_strided_slice %161 {offsets = [0, 128], sizes = [16, 64], strides = [1, 1]} : vector<16x256xf32> to vector<16x64xf32>
    %195 = arith.truncf %194 : vector<16x64xf32> to vector<16x64xbf16>
    %cst_75 = arith.constant dense<0.000000e+00> : vector<16x16xf32>
    %196 = tpu.matmul %195, %155, %cst_75 {dimension_numbers = #tpu.dot_dimension_numbers<[1], [0], [0], [1], [0, 0, 1, 1], [], []>} : vector<16x64xbf16>, vector<64x16xbf16>, vector<16x16xf32> -> vector<16x16xf32>
    %197 = arith.addf %196, %0 : vector<16x16xf32>
    %cst_76 = arith.constant dense<0xFF800000> : vector<16xf32>
    %198 = vector.multi_reduction <maximumf>, %197, %cst_76 [1] : vector<16x16xf32> to vector<16xf32>
    %199 = vector.shape_cast %198 : vector<16xf32> to vector<16x1xf32>
    %200 = vector.broadcast %199 : vector<16x1xf32> to vector<16x16xf32>
    %201 = arith.subf %197, %200 : vector<16x16xf32>
    %202 = math.exp %201 : vector<16x16xf32>
    %cst_77 = arith.constant dense<0.000000e+00> : vector<16xf32>
    %203 = vector.multi_reduction <add>, %202, %cst_77 [1] : vector<16x16xf32> to vector<16xf32>
    %204 = vector.shape_cast %203 : vector<16xf32> to vector<16x1xf32>
    %205 = tpu.reciprocal %204 {approx = true} : vector<16x1xf32> -> vector<16x1xf32>
    %206 = vector.broadcast %205 : vector<16x1xf32> to vector<16x16xf32>
    %207 = arith.mulf %202, %206 : vector<16x16xf32>
    %208 = arith.truncf %207 : vector<16x16xf32> to vector<16x16xbf16>
    %cst_78 = arith.constant dense<0.000000e+00> : vector<16x64xf32>
    %209 = tpu.matmul %208, %153, %cst_78 {dimension_numbers = #tpu.dot_dimension_numbers<[1], [0], [0], [1], [0, 0, 1, 1], [], []>} : vector<16x16xbf16>, vector<16x64xbf16>, vector<16x64xf32> -> vector<16x64xf32>
    %210 = vector.extract_strided_slice %161 {offsets = [0, 192], sizes = [16, 64], strides = [1, 1]} : vector<16x256xf32> to vector<16x64xf32>
    %211 = arith.truncf %210 : vector<16x64xf32> to vector<16x64xbf16>
    %cst_79 = arith.constant dense<0.000000e+00> : vector<16x16xf32>
    %212 = tpu.matmul %211, %155, %cst_79 {dimension_numbers = #tpu.dot_dimension_numbers<[1], [0], [0], [1], [0, 0, 1, 1], [], []>} : vector<16x64xbf16>, vector<64x16xbf16>, vector<16x16xf32> -> vector<16x16xf32>
    %213 = arith.addf %212, %0 : vector<16x16xf32>
    %cst_80 = arith.constant dense<0xFF800000> : vector<16xf32>
    %214 = vector.multi_reduction <maximumf>, %213, %cst_80 [1] : vector<16x16xf32> to vector<16xf32>
    %215 = vector.shape_cast %214 : vector<16xf32> to vector<16x1xf32>
    %216 = vector.broadcast %215 : vector<16x1xf32> to vector<16x16xf32>
    %217 = arith.subf %213, %216 : vector<16x16xf32>
    %218 = math.exp %217 : vector<16x16xf32>
    %cst_81 = arith.constant dense<0.000000e+00> : vector<16xf32>
    %219 = vector.multi_reduction <add>, %218, %cst_81 [1] : vector<16x16xf32> to vector<16xf32>
    %220 = vector.shape_cast %219 : vector<16xf32> to vector<16x1xf32>
    %221 = tpu.reciprocal %220 {approx = true} : vector<16x1xf32> -> vector<16x1xf32>
    %222 = vector.broadcast %221 : vector<16x1xf32> to vector<16x16xf32>
    %223 = arith.mulf %218, %222 : vector<16x16xf32>
    %224 = arith.truncf %223 : vector<16x16xf32> to vector<16x16xbf16>
    %cst_82 = arith.constant dense<0.000000e+00> : vector<16x64xf32>
    %225 = tpu.matmul %224, %153, %cst_82 {dimension_numbers = #tpu.dot_dimension_numbers<[1], [0], [0], [1], [0, 0, 1, 1], [], []>} : vector<16x16xbf16>, vector<16x64xbf16>, vector<16x64xf32> -> vector<16x64xf32>
    %226 = tpu.concatenate %177, %193, %209, %225 in 1 : vector<16x64xf32>, vector<16x64xf32>, vector<16x64xf32>, vector<16x64xf32> -> vector<16x256xf32>
    %227 = arith.truncf %226 : vector<16x256xf32> to vector<16x256xbf16>
    %c1_83 = arith.constant 1 : index
    %c0_84 = arith.constant 0 : index
    %c0_85 = arith.constant 0 : index
    %228 = vector.load %arg6[%c1_83, %c0_84, %c0_85] : memref<2x256x64xbf16, #tpu.memory_space<vmem>>, vector<1x256x64xbf16>
    %229 = vector.shape_cast %228 : vector<1x256x64xbf16> to vector<256x64xbf16>
    %cst_86 = arith.constant dense<0.000000e+00> : vector<16x64xf32>
    %230 = tpu.matmul %227, %229, %cst_86 {dimension_numbers = #tpu.dot_dimension_numbers<[1], [0], [0], [1], [0, 0, 1, 1], [], []>} : vector<16x256xbf16>, vector<256x64xbf16>, vector<16x64xf32> -> vector<16x64xf32>
    %c6 = arith.constant 6 : index
    %c0_87 = arith.constant 0 : index
    %231 = vector.load %arg11[%c6, %c0_87] : memref<14x64xf32, #tpu.memory_space<vmem>>, vector<1x64xf32>
    %232 = vector.broadcast %231 : vector<1x64xf32> to vector<16x64xf32>
    %233 = arith.addf %230, %232 : vector<16x64xf32>
    %234 = arith.addf %152, %233 : vector<16x64xf32>
    %c7 = arith.constant 7 : index
    %c0_88 = arith.constant 0 : index
    %235 = vector.load %arg11[%c7, %c0_88] : memref<14x64xf32, #tpu.memory_space<vmem>>, vector<1x64xf32>
    %c8 = arith.constant 8 : index
    %c0_89 = arith.constant 0 : index
    %236 = vector.load %arg11[%c8, %c0_89] : memref<14x64xf32, #tpu.memory_space<vmem>>, vector<1x64xf32>
    %cst_90 = arith.constant dense<0.000000e+00> : vector<16xf32>
    %237 = vector.multi_reduction <add>, %234, %cst_90 [1] : vector<16x64xf32> to vector<16xf32>
    %238 = vector.shape_cast %237 : vector<16xf32> to vector<16x1xf32>
    %cst_91 = arith.constant 6.400000e+01 : f32
    %239 = vector.broadcast %cst_91 : f32 to vector<16x1xf32>
    %240 = arith.divf %238, %239 : vector<16x1xf32>
    %241 = arith.mulf %234, %234 : vector<16x64xf32>
    %cst_92 = arith.constant dense<0.000000e+00> : vector<16xf32>
    %242 = vector.multi_reduction <add>, %241, %cst_92 [1] : vector<16x64xf32> to vector<16xf32>
    %243 = vector.shape_cast %242 : vector<16xf32> to vector<16x1xf32>
    %cst_93 = arith.constant 6.400000e+01 : f32
    %244 = vector.broadcast %cst_93 : f32 to vector<16x1xf32>
    %245 = arith.divf %243, %244 : vector<16x1xf32>
    %246 = vector.broadcast %240 : vector<16x1xf32> to vector<16x64xf32>
    %247 = arith.subf %234, %246 : vector<16x64xf32>
    %248 = arith.mulf %240, %240 : vector<16x1xf32>
    %249 = arith.subf %245, %248 : vector<16x1xf32>
    %cst_94 = arith.constant 9.99999974E-6 : f32
    %250 = vector.broadcast %cst_94 : f32 to vector<16x1xf32>
    %251 = arith.addf %249, %250 : vector<16x1xf32>
    %252 = math.rsqrt %251 : vector<16x1xf32>
    %253 = vector.broadcast %252 : vector<16x1xf32> to vector<16x64xf32>
    %254 = arith.mulf %247, %253 : vector<16x64xf32>
    %255 = vector.broadcast %235 : vector<1x64xf32> to vector<16x64xf32>
    %256 = arith.mulf %254, %255 : vector<16x64xf32>
    %257 = vector.broadcast %236 : vector<1x64xf32> to vector<16x64xf32>
    %258 = arith.addf %256, %257 : vector<16x64xf32>
    %259 = arith.truncf %258 : vector<16x64xf32> to vector<16x64xbf16>
    %c1_95 = arith.constant 1 : index
    %c0_96 = arith.constant 0 : index
    %c0_97 = arith.constant 0 : index
    %260 = vector.load %arg7[%c1_95, %c0_96, %c0_97] : memref<2x64x256xbf16, #tpu.memory_space<vmem>>, vector<1x64x256xbf16>
    %261 = vector.shape_cast %260 : vector<1x64x256xbf16> to vector<64x256xbf16>
    %cst_98 = arith.constant dense<0.000000e+00> : vector<16x256xf32>
    %262 = tpu.matmul %259, %261, %cst_98 {dimension_numbers = #tpu.dot_dimension_numbers<[1], [0], [0], [1], [0, 0, 1, 1], [], []>} : vector<16x64xbf16>, vector<64x256xbf16>, vector<16x256xf32> -> vector<16x256xf32>
    %c1_99 = arith.constant 1 : index
    %c0_100 = arith.constant 0 : index
    %263 = vector.load %arg10[%c1_99, %c0_100] : memref<2x256xf32, #tpu.memory_space<vmem>>, vector<1x256xf32>
    %264 = vector.broadcast %263 : vector<1x256xf32> to vector<16x256xf32>
    %265 = arith.addf %262, %264 : vector<16x256xf32>
    %cst_101 = arith.constant 0.000000e+00 : f32
    %266 = vector.broadcast %cst_101 : f32 to vector<16x256xf32>
    %267 = arith.maximumf %265, %266 : vector<16x256xf32>
    %268 = arith.truncf %267 : vector<16x256xf32> to vector<16x256xbf16>
    %c1_102 = arith.constant 1 : index
    %c0_103 = arith.constant 0 : index
    %c0_104 = arith.constant 0 : index
    %269 = vector.load %arg8[%c1_102, %c0_103, %c0_104] : memref<2x256x64xbf16, #tpu.memory_space<vmem>>, vector<1x256x64xbf16>
    %270 = vector.shape_cast %269 : vector<1x256x64xbf16> to vector<256x64xbf16>
    %cst_105 = arith.constant dense<0.000000e+00> : vector<16x64xf32>
    %271 = tpu.matmul %268, %270, %cst_105 {dimension_numbers = #tpu.dot_dimension_numbers<[1], [0], [0], [1], [0, 0, 1, 1], [], []>} : vector<16x256xbf16>, vector<256x64xbf16>, vector<16x64xf32> -> vector<16x64xf32>
    %c9 = arith.constant 9 : index
    %c0_106 = arith.constant 0 : index
    %272 = vector.load %arg11[%c9, %c0_106] : memref<14x64xf32, #tpu.memory_space<vmem>>, vector<1x64xf32>
    %273 = vector.broadcast %272 : vector<1x64xf32> to vector<16x64xf32>
    %274 = arith.addf %271, %273 : vector<16x64xf32>
    %275 = arith.addf %258, %274 : vector<16x64xf32>
    %c10 = arith.constant 10 : index
    %c0_107 = arith.constant 0 : index
    %276 = vector.load %arg11[%c10, %c0_107] : memref<14x64xf32, #tpu.memory_space<vmem>>, vector<1x64xf32>
    %c11 = arith.constant 11 : index
    %c0_108 = arith.constant 0 : index
    %277 = vector.load %arg11[%c11, %c0_108] : memref<14x64xf32, #tpu.memory_space<vmem>>, vector<1x64xf32>
    %cst_109 = arith.constant dense<0.000000e+00> : vector<16xf32>
    %278 = vector.multi_reduction <add>, %275, %cst_109 [1] : vector<16x64xf32> to vector<16xf32>
    %279 = vector.shape_cast %278 : vector<16xf32> to vector<16x1xf32>
    %cst_110 = arith.constant 6.400000e+01 : f32
    %280 = vector.broadcast %cst_110 : f32 to vector<16x1xf32>
    %281 = arith.divf %279, %280 : vector<16x1xf32>
    %282 = arith.mulf %275, %275 : vector<16x64xf32>
    %cst_111 = arith.constant dense<0.000000e+00> : vector<16xf32>
    %283 = vector.multi_reduction <add>, %282, %cst_111 [1] : vector<16x64xf32> to vector<16xf32>
    %284 = vector.shape_cast %283 : vector<16xf32> to vector<16x1xf32>
    %cst_112 = arith.constant 6.400000e+01 : f32
    %285 = vector.broadcast %cst_112 : f32 to vector<16x1xf32>
    %286 = arith.divf %284, %285 : vector<16x1xf32>
    %287 = vector.broadcast %281 : vector<16x1xf32> to vector<16x64xf32>
    %288 = arith.subf %275, %287 : vector<16x64xf32>
    %289 = arith.mulf %281, %281 : vector<16x1xf32>
    %290 = arith.subf %286, %289 : vector<16x1xf32>
    %cst_113 = arith.constant 9.99999974E-6 : f32
    %291 = vector.broadcast %cst_113 : f32 to vector<16x1xf32>
    %292 = arith.addf %290, %291 : vector<16x1xf32>
    %293 = math.rsqrt %292 : vector<16x1xf32>
    %294 = vector.broadcast %293 : vector<16x1xf32> to vector<16x64xf32>
    %295 = arith.mulf %288, %294 : vector<16x64xf32>
    %296 = vector.broadcast %276 : vector<1x64xf32> to vector<16x64xf32>
    %297 = arith.mulf %295, %296 : vector<16x64xf32>
    %298 = vector.broadcast %277 : vector<1x64xf32> to vector<16x64xf32>
    %299 = arith.addf %297, %298 : vector<16x64xf32>
    %c0_114 = arith.constant 0 : index
    %c0_115 = arith.constant 0 : index
    %300 = vector.load %arg3[%c0_114, %c0_115] : memref<2x16xf32, #tpu.memory_space<vmem>>, vector<2x16xf32>
    %cst_116 = arith.constant dense<0.000000e+00> : vector<2x64xf32>
    %301 = tpu.matmul %300, %299, %cst_116 {dimension_numbers = #tpu.dot_dimension_numbers<[1], [0], [0], [1], [0, 0, 1, 1], [], []>} : vector<2x16xf32>, vector<16x64xf32>, vector<2x64xf32> -> vector<2x64xf32>
    %c12 = arith.constant 12 : index
    %c0_117 = arith.constant 0 : index
    %302 = vector.load %arg11[%c12, %c0_117] : memref<14x64xf32, #tpu.memory_space<vmem>>, vector<1x64xf32>
    %c13 = arith.constant 13 : index
    %c0_118 = arith.constant 0 : index
    %303 = vector.load %arg11[%c13, %c0_118] : memref<14x64xf32, #tpu.memory_space<vmem>>, vector<1x64xf32>
    %cst_119 = arith.constant dense<0.000000e+00> : vector<2xf32>
    %304 = vector.multi_reduction <add>, %301, %cst_119 [1] : vector<2x64xf32> to vector<2xf32>
    %305 = vector.shape_cast %304 : vector<2xf32> to vector<2x1xf32>
    %cst_120 = arith.constant 6.400000e+01 : f32
    %306 = vector.broadcast %cst_120 : f32 to vector<2x1xf32>
    %307 = arith.divf %305, %306 : vector<2x1xf32>
    %308 = arith.mulf %301, %301 : vector<2x64xf32>
    %cst_121 = arith.constant dense<0.000000e+00> : vector<2xf32>
    %309 = vector.multi_reduction <add>, %308, %cst_121 [1] : vector<2x64xf32> to vector<2xf32>
    %310 = vector.shape_cast %309 : vector<2xf32> to vector<2x1xf32>
    %cst_122 = arith.constant 6.400000e+01 : f32
    %311 = vector.broadcast %cst_122 : f32 to vector<2x1xf32>
    %312 = arith.divf %310, %311 : vector<2x1xf32>
    %313 = vector.broadcast %307 : vector<2x1xf32> to vector<2x64xf32>
    %314 = arith.subf %301, %313 : vector<2x64xf32>
    %315 = arith.mulf %307, %307 : vector<2x1xf32>
    %316 = arith.subf %312, %315 : vector<2x1xf32>
    %cst_123 = arith.constant 9.99999974E-6 : f32
    %317 = vector.broadcast %cst_123 : f32 to vector<2x1xf32>
    %318 = arith.addf %316, %317 : vector<2x1xf32>
    %319 = math.rsqrt %318 : vector<2x1xf32>
    %320 = vector.broadcast %319 : vector<2x1xf32> to vector<2x64xf32>
    %321 = arith.mulf %314, %320 : vector<2x64xf32>
    %322 = vector.broadcast %302 : vector<1x64xf32> to vector<2x64xf32>
    %323 = arith.mulf %321, %322 : vector<2x64xf32>
    %324 = vector.broadcast %303 : vector<1x64xf32> to vector<2x64xf32>
    %325 = arith.addf %323, %324 : vector<2x64xf32>
    %c0_124 = arith.constant 0 : index
    %c0_125 = arith.constant 0 : index
    %326 = vector.load %arg12[%c0_124, %c0_125] : memref<65x8xf32, #tpu.memory_space<vmem>>, vector<65x8xf32>
    %327 = vector.extract_strided_slice %326 {offsets = [0, 0], sizes = [64, 8], strides = [1, 1]} : vector<65x8xf32> to vector<64x8xf32>
    %cst_126 = arith.constant dense<0.000000e+00> : vector<2x8xf32>
    %328 = tpu.matmul %325, %327, %cst_126 {dimension_numbers = #tpu.dot_dimension_numbers<[1], [0], [0], [1], [0, 0, 1, 1], [], []>} : vector<2x64xf32>, vector<64x8xf32>, vector<2x8xf32> -> vector<2x8xf32>
    %329 = vector.extract_strided_slice %326 {offsets = [64, 0], sizes = [1, 8], strides = [1, 1]} : vector<65x8xf32> to vector<1x8xf32>
    %330 = vector.broadcast %329 : vector<1x8xf32> to vector<2x8xf32>
    %331 = arith.addf %328, %330 : vector<2x8xf32>
    %c0_127 = arith.constant 0 : index
    %c0_128 = arith.constant 0 : index
    %332 = vector.load %arg13[%c0_127, %c0_128] : memref<2x8xf32, #tpu.memory_space<vmem>>, vector<2x8xf32>
    tpu.vector_store %arg13[%c0_127, %c0_128], %331 {strides = array<i32>} : memref<2x8xf32, #tpu.memory_space<vmem>>, vector<2x8xf32>,
    return
  }
}

</mosaic_0001>

<llo_original>
// kernel: tpu_custom_call.1
$region0: #{tpu_custom_call.1}
  #allocation0 [shape = 'u32[]', space=smem, size = 0x4, offset = 0x4, fixed_abs, tag = 'smem constant byte address 0x4 - core index']
  #allocation1 [shape = 'u32[144,128]{1,0:T(1,128)}', space=vmem, size = 0x12000, scoped, tag = 'internal scratch']
  %s0 = inlined_call_operand.vmem [shape: f32[16,99], index: 0, kind: input, shape index: {}]
  %s1 = inlined_call_operand.vmem [shape: f32[16,64], index: 1, kind: input, shape index: {}]
  %s2 = inlined_call_operand.vmem [shape: f32[16,16], index: 2, kind: input, shape index: {}]
  %s3 = inlined_call_operand.vmem [shape: f32[2,16], index: 3, kind: input, shape index: {}]
  %s4 = inlined_call_operand.vmem [shape: f32[99,64], index: 4, kind: input, shape index: {}]
  %s5 = inlined_call_operand.vmem [shape: bf16[2,64,256], index: 5, kind: input, shape index: {}]
  %s6 = inlined_call_operand.vmem [shape: bf16[2,256,64], index: 6, kind: input, shape index: {}]
  %s7 = inlined_call_operand.vmem [shape: bf16[2,64,256], index: 7, kind: input, shape index: {}]
  %s8 = inlined_call_operand.vmem [shape: bf16[2,256,64], index: 8, kind: input, shape index: {}]
  %s9 = inlined_call_operand.vmem [shape: f32[2,256], index: 9, kind: input, shape index: {}]
  %s10 = inlined_call_operand.vmem [shape: f32[2,256], index: 10, kind: input, shape index: {}]
  %s11 = inlined_call_operand.vmem [shape: f32[14,64], index: 11, kind: input, shape index: {}]
  %s12 = inlined_call_operand.vmem [shape: f32[65,8], index: 12, kind: input, shape index: {}]
  %s13 = inlined_call_operand.hbm [shape: f32[2,8], index: 13, kind: output, shape index: {}]
  %s14 = sld [smem:[#allocation0]]
  $region62: #{tpu_custom_call.1} parent=0
    _
  %s16 = ssub.s32 1, %s14
  %s17 = scalar_select 0, %s16, %s14
  $region1: #{tpu_custom_call.1} parent=0
    #allocation2 [shape = 'u8[1024]{0}', space=vmem, size = 0x400, scoped, tag = 'output window, operand 0, single buffered']
    #allocation3 [shape = 's32[1]{0}', space=sflag, size = 0x4, scoped, tag = 'scoped memory for tpu_custom_call.1']
    %18 = vsyncpa [#allocation3], 0
    // Predicated region
    $region2: #{tpu_custom_call.1} parent=1 // pred_check
      _
    $region3: #{tpu_custom_call.1} parent=1 // pred_check_branch
      %20 = sbr.rel (0) target = $region5
    $region4: #{tpu_custom_call.1} parent=1 // pred_region
      _
    $region5: #{tpu_custom_call.1} parent=1 // pred_fallthru
      _
    // Predicated region
    $region6: #{tpu_custom_call.1} parent=1 // pred_check
      _
    $region7: #{tpu_custom_call.1} parent=1 // pred_check_branch
      %22 = sbr.rel (0) target = $region9
    $region8: #{tpu_custom_call.1} parent=1 // pred_region
      _
    $region9: #{tpu_custom_call.1} parent=1 // pred_fallthru
      _
    // Predicated region
    $region10: #{tpu_custom_call.1} parent=1 // pred_check
      _
    $region11: #{tpu_custom_call.1} parent=1 // pred_check_branch
      %24 = sbr.rel (0) target = $region13
    $region12: #{tpu_custom_call.1} parent=1 // pred_region
      _
    $region13: #{tpu_custom_call.1} parent=1 // pred_fallthru
      _
    // Predicated region
    $region14: #{tpu_custom_call.1} parent=1 // pred_check
      _
    $region15: #{tpu_custom_call.1} parent=1 // pred_check_branch
      %26 = sbr.rel (0) target = $region17
    $region16: #{tpu_custom_call.1} parent=1 // pred_region
      _
    $region17: #{tpu_custom_call.1} parent=1 // pred_fallthru
      _
    // Predicated region
    $region18: #{tpu_custom_call.1} parent=1 // pred_check
      _
    $region19: #{tpu_custom_call.1} parent=1 // pred_check_branch
      %28 = sbr.rel (0) target = $region21
    $region20: #{tpu_custom_call.1} parent=1 // pred_region
      _
    $region21: #{tpu_custom_call.1} parent=1 // pred_fallthru
      _
    // Predicated region
    $region22: #{tpu_custom_call.1} parent=1 // pred_check
      _
    $region23: #{tpu_custom_call.1} parent=1 // pred_check_branch
      %30 = sbr.rel (0) target = $region25
    $region24: #{tpu_custom_call.1} parent=1 // pred_region
      _
    $region25: #{tpu_custom_call.1} parent=1 // pred_fallthru
      _
    // Predicated region
    $region26: #{tpu_custom_call.1} parent=1 // pred_check
      _
    $region27: #{tpu_custom_call.1} parent=1 // pred_check_branch
      %32 = sbr.rel (0) target = $region29
    $region28: #{tpu_custom_call.1} parent=1 // pred_region
      _
    $region29: #{tpu_custom_call.1} parent=1 // pred_fallthru
      _
    // Predicated region
    $region30: #{tpu_custom_call.1} parent=1 // pred_check
      _
    $region31: #{tpu_custom_call.1} parent=1 // pred_check_branch
      %34 = sbr.rel (0) target = $region33
    $region32: #{tpu_custom_call.1} parent=1 // pred_region
      _
    $region33: #{tpu_custom_call.1} parent=1 // pred_fallthru
      _
    // Predicated region
    $region34: #{tpu_custom_call.1} parent=1 // pred_check
      _
    $region35: #{tpu_custom_call.1} parent=1 // pred_check_branch
      %36 = sbr.rel (0) target = $region37
    $region36: #{tpu_custom_call.1} parent=1 // pred_region
      _
    $region37: #{tpu_custom_call.1} parent=1 // pred_fallthru
      _
    // Predicated region
    $region38: #{tpu_custom_call.1} parent=1 // pred_check
      _
    $region39: #{tpu_custom_call.1} parent=1 // pred_check_branch
      %38 = sbr.rel (0) target = $region41
    $region40: #{tpu_custom_call.1} parent=1 // pred_region
      _
    $region41: #{tpu_custom_call.1} parent=1 // pred_fallthru
      _
    // Predicated region
    $region42: #{tpu_custom_call.1} parent=1 // pred_check
      _
    $region43: #{tpu_custom_call.1} parent=1 // pred_check_branch
      %40 = sbr.rel (0) target = $region45
    $region44: #{tpu_custom_call.1} parent=1 // pred_region
      _
    $region45: #{tpu_custom_call.1} parent=1 // pred_fallthru
      _
    // Predicated region
    $region46: #{tpu_custom_call.1} parent=1 // pred_check
      _
    $region47: #{tpu_custom_call.1} parent=1 // pred_check_branch
      %42 = sbr.rel (0) target = $region49
    $region48: #{tpu_custom_call.1} parent=1 // pred_region
      _
    $region49: #{tpu_custom_call.1} parent=1 // pred_fallthru
      _
    // Predicated region
    $region50: #{tpu_custom_call.1} parent=1 // pred_check
      _
    $region51: #{tpu_custom_call.1} parent=1 // pred_check_branch
      %44 = sbr.rel (0) target = $region53
    $region52: #{tpu_custom_call.1} parent=1 // pred_region
      _
    $region53: #{tpu_custom_call.1} parent=1 // pred_fallthru
      _
    %v46 = vld [vmem:[%s2] sm:$0xff]
    %v47 = vld [vmem:[%s2 + $0x8] sm:$0xff]
    %v48 = vld [vmem:[%s0] sm:$0xff]
    %v49 = vld [vmem:[%s0 + $0x8] sm:$0xff]
    %v50 = vld [vmem:[%s4] sm:$0xff]
    %v51 = vld [vmem:[%s4 + $0x8] sm:$0xff]
    %v52 = vld [vmem:[%s4 + $0x10] sm:$0xff]
    %v53 = vld [vmem:[%s4 + $0x18] sm:$0xff]
    %v54 = vld [vmem:[%s4 + $0x20] sm:$0xff]
    %v55 = vld [vmem:[%s4 + $0x28] sm:$0xff]
    %v56 = vld [vmem:[%s4 + $0x30] sm:$0xff]
    %v57 = vld [vmem:[%s4 + $0x38] sm:$0xff]
    %v58 = vld [vmem:[%s4 + $0x40] sm:$0xff]
    %v59 = vld [vmem:[%s4 + $0x48] sm:$0xff]
    %v60 = vld [vmem:[%s4 + $0x50] sm:$0xff]
    %v61 = vld [vmem:[%s4 + $0x58] sm:$0xff]
    %v62 = vld [vmem:[%s4 + $0x60] sm:$0x7]
    %v63 = vld [vmem:[%s1] sm:$0xff]
    %v64 = vld [vmem:[%s1 + $0x8] sm:$0xff]
    %vm65 = vcmask 809984
    %v67 = vsel %vm65, %v48, 0
    %v70 = vsel %vm65, %v49, 0
    %vm72 = vcmask 1042432
    %v74 = vsel %vm72, %v62, 0
    %76 = vmatprep.subr.mxu0 0.0
    %77 = vmatpush1.msra.mxu0 %v50
    %78 = vmatprep.subr.mxu0 0.0
    %79 = vmatpush1.msra.mxu0 %v51
    %80 = vmatprep.subr.mxu0 0.0
    %81 = vmatpush1.msra.mxu0 %v52
    %82 = vmatprep.subr.mxu0 0.0
    %83 = vmatpush1.msra.mxu0 %v53
    %84 = vmatprep.subr.mxu0 0.0
    %85 = vmatpush1.msra.mxu0 %v54
    %86 = vmatprep.subr.mxu0 0.0
    %87 = vmatpush1.msra.mxu0 %v55
    %88 = vmatprep.subr.mxu0 0.0
    %89 = vmatpush1.msra.mxu0 %v56
    %90 = vmatprep.subr.mxu0 0.0
    %91 = vmatpush1.msra.mxu0 %v57
    %92 = vmatprep.subr.mxu0 0.0
    %93 = vmatpush1.msra.mxu0 %v58
    %94 = vmatprep.subr.mxu0 0.0
    %95 = vmatpush1.msra.mxu0 %v59
    %96 = vmatprep.subr.mxu0 0.0
    %97 = vmatpush1.msra.mxu0 %v60
    %98 = vmatprep.subr.mxu0 0.0
    %99 = vmatpush1.msra.mxu0 %v61
    %100 = vmatprep.subr.mxu0 0.0
    %101 = vmatpush1.msra.mxu0 %v74
    %102 = vmatprep.subr.mxu0 0.0
    %103 = vmatpush1.msra.mxu0 0.0
    %104 = vmatprep.subr.mxu0 0.0
    %105 = vmatpush1.msra.mxu0 0.0
    %106 = vmatprep.subr.mxu0 0.0
    %107 = vmatpush1.msra.mxu0 0.0
    %108 = vmatprep.subr.mxu0 0.0
    %109 = vmatpush1.msra.mxu0 0.0
    %110 = vmatprep.subr.mxu0 0.0
    %111 = vmatpush1.msra.mxu0 0.0
    %112 = vmatprep.subr.mxu0 0.0
    %113 = vmatpush1.msra.mxu0 0.0
    %114 = vmatprep.subr.mxu0 0.0
    %115 = vmatpush1.msra.mxu0 0.0
    %116 = vmatprep.subr.mxu0 0.0
    %117 = vmatpush1.msra.mxu0 0.0
    %118 = vmatprep.subr.mxu0 0.0
    %119 = vmatpush1.msra.mxu0 0.0
    %120 = vmatprep.subr.mxu0 0.0
    %121 = vmatpush1.msra.mxu0 0.0
    %122 = vmatprep.subr.mxu0 0.0
    %123 = vmatpush1.msra.mxu0 0.0
    %124 = vmatprep.subr.mxu0 0.0
    %125 = vmatpush1.msra.mxu0 0.0
    %126 = vmatprep.subr.mxu0 0.0
    %127 = vmatpush1.msra.mxu0 0.0
    %128 = vmatprep.subr.mxu0 0.0
    %129 = vmatpush1.msra.mxu0 0.0
    %130 = vmatprep.subr.mxu0 0.0
    %131 = vmatpush1.msra.mxu0 0.0
    %132 = vmatprep.subr.mxu0 0.0
    %133 = vmatpush1.msra.mxu0 0.0
    %134 = vmatprep.subr.mxu0 0.0
    %135 = vmatpush1.msra.mxu0 0.0
    %136 = vmatprep.subr.mxu0 0.0
    %137 = vmatpush1.msra.mxu0 0.0
    %138 = vmatprep.subr.mxu0 0.0
    %139 = vmatpush1.msra.mxu0 0.0
    %140 = vmatprep.mubr.f32.mxu0 0.0
    %141 = vmatmul.mubr.f32.gmra.mrb[0].mxu0 %v67
    %v142 = vpop.f32.mrb[0].mxu0
    %v143 = vadd.f32 %v63, %v142
    %v144 = vpop.f32.mrb[0].mxu0
    %145 = vmatprep.mubr.f32.mxu0 0.0
    %146 = vmatmul.mubr.f32.gmra.mrb[0].mxu0 %v70
    %v147 = vpop.f32.mrb[0].mxu0
    %v148 = vadd.f32 %v64, %v147
    %v149 = vpop.f32.mrb[0].mxu0
    %150 = vdwg.mxu0
    %v151 = vpack.c.bf16 %v148, %v143
    %152 = vxpose.xlu0.b32.start [1/16] %v143, 128
    %153 = vxpose.xlu0.b32.cont [2/16] %v148, 128
    %154 = vxpose.xlu0.b32.cont [3/16] 0.0, 128
    %155 = vxpose.xlu0.b32.cont [4/16] 0.0, 128
    %156 = vxpose.xlu0.b32.cont [5/16] 0.0, 128
    %157 = vxpose.xlu0.b32.cont [6/16] 0.0, 128
    %158 = vxpose.xlu0.b32.cont [7/16] 0.0, 128
    %159 = vxpose.xlu0.b32.cont [8/16] 0.0, 128
    %160 = vxpose.xlu0.b32.cont [9/16] 0.0, 128
    %161 = vxpose.xlu0.b32.cont [10/16] 0.0, 128
    %162 = vxpose.xlu0.b32.cont [11/16] 0.0, 128
    %163 = vxpose.xlu0.b32.cont [12/16] 0.0, 128
    %164 = vxpose.xlu0.b32.cont [13/16] 0.0, 128
    %165 = vxpose.xlu0.b32.cont [14/16] 0.0, 128
    %166 = vxpose.xlu0.b32.cont [15/16] 0.0, 128
    %167 = vxpose.xlu0.b32.end [16/16] 0.0, 128
    %v168 = vpop.trf.xlu0
    %v169 = vpop.trf.xlu0
    %v170 = vpop.trf.xlu0
    %v171 = vpop.trf.xlu0
    %v172 = vpop.trf.xlu0
    %v173 = vpop.trf.xlu0
    %v174 = vpop.trf.xlu0
    %v175 = vpop.trf.xlu0
    %v176 = vpop.trf.xlu0
    %v177 = vpop.trf.xlu0
    %v178 = vpop.trf.xlu0
    %v179 = vpop.trf.xlu0
    %v180 = vpop.trf.xlu0
    %v181 = vpop.trf.xlu0
    %v182 = vpop.trf.xlu0
    %v183 = vpop.trf.xlu0
    %v184 = vpack.c.bf16 %v169, %v168
    %v185 = vpack.c.bf16 %v171, %v170
    %v186 = vpack.c.bf16 %v173, %v172
    %v187 = vpack.c.bf16 %v175, %v174
    %v188 = vld [vmem:[%s5] sm:$0xff]
    %v189 = vld [vmem:[%s5 + $0x8] sm:$0xff]
    %v190 = vld [vmem:[%s5 + $0x10] sm:$0xff]
    %v191 = vld [vmem:[%s5 + $0x18] sm:$0xff]
    %v192 = vld [vmem:[%s5 + $0x20] sm:$0xff]
    %v193 = vld [vmem:[%s5 + $0x28] sm:$0xff]
    %v194 = vld [vmem:[%s5 + $0x30] sm:$0xff]
    %v195 = vld [vmem:[%s5 + $0x38] sm:$0xff]
    %v196 = vld [vmem:[%s9] ss:$2 sm:$0x3]
    %v198 = vlaneseq
    %v199 = vshrl.u32 %v198, 7
    %v200 = vsub.s32 0, %v199
    %v201 = vrot.slane %v196, %v200
    %v202 = vlaneseq
    %v203 = vshrl.u32 %v202, 7
    %v204 = vsub.s32 1, %v203
    %v205 = vrot.slane %v196, %v204
    %v216 = vunpack.c.l.b16 %v188
    %v217 = vunpack.c.h.b16 %v188
    %v218 = vunpack.c.l.b16 %v189
    %v219 = vunpack.c.h.b16 %v189
    %v220 = vunpack.c.l.b16 %v190
    %v221 = vunpack.c.h.b16 %v190
    %v222 = vunpack.c.l.b16 %v191
    %v223 = vunpack.c.h.b16 %v191
    %v224 = vunpack.c.l.b16 %v192
    %v225 = vunpack.c.h.b16 %v192
    %v226 = vunpack.c.l.b16 %v193
    %v227 = vunpack.c.h.b16 %v193
    %v228 = vunpack.c.l.b16 %v194
    %v229 = vunpack.c.h.b16 %v194
    %v230 = vunpack.c.l.b16 %v195
    %v231 = vunpack.c.h.b16 %v195
    %v232 = vpack.c.b16 %v218, %v216
    %v233 = vpack.c.b16 %v219, %v217
    %v234 = vpack.c.b16 %v222, %v220
    %v235 = vpack.c.b16 %v223, %v221
    %v236 = vpack.c.b16 %v226, %v224
    %v237 = vpack.c.b16 %v227, %v225
    %v238 = vpack.c.b16 %v230, %v228
    %v239 = vpack.c.b16 %v231, %v229
    %vm248 = vcmask 523264
    %v250 = vsel %vm248, %v151, 0
    %252 = vmatprep.subr.bf16.mxu0 %v233
    %253 = vmatpush1.bf16.msra.mxu0 %v232
    %254 = vmatprep.subr.bf16.mxu0 %v235
    %255 = vmatpush1.bf16.msra.mxu0 %v234
    %256 = vmatprep.subr.bf16.mxu0 %v237
    %257 = vmatpush1.bf16.msra.mxu0 %v236
    %258 = vmatprep.subr.bf16.mxu0 %v239
    %259 = vmatpush1.bf16.msra.mxu0 %v238
    %260 = vmatprep.subr.bf16.mxu0 0
    %261 = vmatpush1.bf16.msra.mxu0 0
    %262 = vmatprep.subr.bf16.mxu0 0
    %263 = vmatpush1.bf16.msra.mxu0 0
    %264 = vmatprep.subr.bf16.mxu0 0
    %265 = vmatpush1.bf16.msra.mxu0 0
    %266 = vmatprep.subr.bf16.mxu0 0
    %267 = vmatpush1.bf16.msra.mxu0 0
    %268 = vmatprep.subr.bf16.mxu0 0
    %269 = vmatpush1.bf16.msra.mxu0 0
    %270 = vmatprep.subr.bf16.mxu0 0
    %271 = vmatpush1.bf16.msra.mxu0 0
    %272 = vmatprep.subr.bf16.mxu0 0
    %273 = vmatpush1.bf16.msra.mxu0 0
    %274 = vmatprep.subr.bf16.mxu0 0
    %275 = vmatpush1.bf16.msra.mxu0 0
    %276 = vmatprep.subr.bf16.mxu0 0
    %277 = vmatpush1.bf16.msra.mxu0 0
    %278 = vmatprep.subr.bf16.mxu0 0
    %279 = vmatpush1.bf16.msra.mxu0 0
    %280 = vmatprep.subr.bf16.mxu0 0
    %281 = vmatpush1.bf16.msra.mxu0 0
    %282 = vmatprep.subr.bf16.mxu0 0
    %283 = vmatpush1.bf16.msra.mxu0 0
    %284 = vmatprep.mubr.bf16.mxu0 0
    %285 = vmatmul.mubr.bf16.gmra.mrb[0].mxu0 %v250
    %v286 = vpop.f32.mrb[0].mxu0
    %v287 = vadd.f32 %v201, %v286
    %v288 = vpop.f32.mrb[0].mxu0
    %v289 = vadd.f32 %v205, %v288
    %v290 = vpop.f32.mrb[0].mxu0
    %v291 = vadd.f32 %v201, %v290
    %v292 = vpop.f32.mrb[0].mxu0
    %v293 = vadd.f32 %v205, %v292
    %294 = vdwg.mxu0
    %v295 = vpack.c.bf16 %v291, %v287
    %v297 = vsel %vm248, %v295, 0
    %299 = vmatprep.subr.bf16.mxu0 0
    %300 = vmatpush1.bf16.msra.mxu0 %v184
    %301 = vmatprep.subr.bf16.mxu0 0
    %302 = vmatpush1.bf16.msra.mxu0 %v185
    %303 = vmatprep.subr.bf16.mxu0 0
    %304 = vmatpush1.bf16.msra.mxu0 %v186
    %305 = vmatprep.subr.bf16.mxu0 0
    %306 = vmatpush1.bf16.msra.mxu0 %v187
    %307 = vmatprep.subr.bf16.mxu0 0
    %308 = vmatpush1.bf16.msra.mxu0 0
    %309 = vmatprep.subr.bf16.mxu0 0
    %310 = vmatpush1.bf16.msra.mxu0 0
    %311 = vmatprep.subr.bf16.mxu0 0
    %312 = vmatpush1.bf16.msra.mxu0 0
    %313 = vmatprep.subr.bf16.mxu0 0
    %314 = vmatpush1.bf16.msra.mxu0 0
    %315 = vmatprep.subr.bf16.mxu0 0
    %316 = vmatpush1.bf16.msra.mxu0 0
    %317 = vmatprep.subr.bf16.mxu0 0
    %318 = vmatpush1.bf16.msra.mxu0 0
    %319 = vmatprep.subr.bf16.mxu0 0
    %320 = vmatpush1.bf16.msra.mxu0 0
    %321 = vmatprep.subr.bf16.mxu0 0
    %322 = vmatpush1.bf16.msra.mxu0 0
    %323 = vmatprep.subr.bf16.mxu0 0
    %324 = vmatpush1.bf16.msra.mxu0 0
    %325 = vmatprep.subr.bf16.mxu0 0
    %326 = vmatpush1.bf16.msra.mxu0 0
    %327 = vmatprep.subr.bf16.mxu0 0
    %328 = vmatpush1.bf16.msra.mxu0 0
    %329 = vmatprep.subr.bf16.mxu0 0
    %330 = vmatpush1.bf16.msra.mxu0 0
    %331 = vmatprep.mubr.bf16.mxu0 0
    %332 = vmatmul.mubr.bf16.gmra.mrb[0].mxu0 %v297
    %v333 = vpop.f32.mrb[0].mxu0
    %v334 = vadd.f32 %v46, %v333
    %v335 = vpop.f32.mrb[0].mxu0
    %v336 = vpop.f32.mrb[0].mxu0
    %v337 = vadd.f32 %v47, %v336
    %v338 = vpop.f32.mrb[0].mxu0
    %339 = vdwg.mxu0
    %vm340 = vcmask 130048
    %v341 = vsel %vm340, %v334, -inf
    %342 = vmax.xlane.f32.xlu0 %v341
    %v343 = vpop.xlane.xlu0 %342
    %v344 = vsel %vm340, %v337, -inf
    %345 = vmax.xlane.f32.xlu0 %v344
    %v346 = vpop.xlane.xlu0 %345
    %v347 = vsub.f32 %v334, %v343
    %v348 = vsub.f32 %v337, %v346
    %v349 = vmul.f32 %v347, 1.442695
    %v350 = vpow.pop %v349
    %v351 = vmul.f32 %v348, 1.442695
    %v352 = vpow.pop %v351
    %v353 = vsel %vm340, %v350, 0.0
    %354 = vadd.xlane.f32.xlu0 %v353
    %v355 = vpop.xlane.xlu0 %354
    %v356 = vsel %vm340, %v352, 0.0
    %357 = vadd.xlane.f32.xlu0 %v356
    %v358 = vpop.xlane.xlu0 %357
    %v359 = vrcp.pop %v355
    %v360 = vrcp.pop %v358
    %v361 = vmul.f32 %v350, %v359
    %v362 = vmul.f32 %v352, %v360
    %v363 = vpack.c.bf16 %v362, %v361
    %v365 = vsel %vm340, %v363, 0
    %367 = vmatprep.subr.bf16.mxu0 0
    %368 = vmatpush1.bf16.msra.mxu0 %v151
    %369 = vmatprep.subr.bf16.mxu0 0
    %370 = vmatpush1.bf16.msra.mxu0 0
    %371 = vmatprep.subr.bf16.mxu0 0
    %372 = vmatpush1.bf16.msra.mxu0 0
    %373 = vmatprep.subr.bf16.mxu0 0
    %374 = vmatpush1.bf16.msra.mxu0 0
    %375 = vmatprep.subr.bf16.mxu0 0
    %376 = vmatpush1.bf16.msra.mxu0 0
    %377 = vmatprep.subr.bf16.mxu0 0
    %378 = vmatpush1.bf16.msra.mxu0 0
    %379 = vmatprep.subr.bf16.mxu0 0
    %380 = vmatpush1.bf16.msra.mxu0 0
    %381 = vmatprep.subr.bf16.mxu0 0
    %382 = vmatpush1.bf16.msra.mxu0 0
    %383 = vmatprep.subr.bf16.mxu0 0
    %384 = vmatpush1.bf16.msra.mxu0 0
    %385 = vmatprep.subr.bf16.mxu0 0
    %386 = vmatpush1.bf16.msra.mxu0 0
    %387 = vmatprep.subr.bf16.mxu0 0
    %388 = vmatpush1.bf16.msra.mxu0 0
    %389 = vmatprep.subr.bf16.mxu0 0
    %390 = vmatpush1.bf16.msra.mxu0 0
    %391 = vmatprep.subr.bf16.mxu0 0
    %392 = vmatpush1.bf16.msra.mxu0 0
    %393 = vmatprep.subr.bf16.mxu0 0
    %394 = vmatpush1.bf16.msra.mxu0 0
    %395 = vmatprep.subr.bf16.mxu0 0
    %396 = vmatpush1.bf16.msra.mxu0 0
    %397 = vmatprep.subr.bf16.mxu0 0
    %398 = vmatpush1.bf16.msra.mxu0 0
    %399 = vmatprep.mubr.bf16.mxu0 0
    %400 = vmatmul.mubr.bf16.gmra.mrb[0].mxu0 %v365
    %v401 = vpop.f32.mrb[0].mxu0
    %v402 = vadd.f32 0.0, %v401
    %v403 = vpop.f32.mrb[0].mxu0
    %v404 = vpop.f32.mrb[0].mxu0
    %v405 = vadd.f32 0.0, %v404
    %v406 = vpop.f32.mrb[0].mxu0
    %407 = vdwg.mxu0
    %409 = vrot.lane.b32.xlu0 %v295, 64
    %v410 = vpop.permute.xlu0 %409
    %v412 = vsel %vm248, %v410, 0
    %414 = vmatprep.subr.bf16.mxu0 0
    %415 = vmatpush1.bf16.msra.mxu0 %v184
    %416 = vmatprep.subr.bf16.mxu0 0
    %417 = vmatpush1.bf16.msra.mxu0 %v185
    %418 = vmatprep.subr.bf16.mxu0 0
    %419 = vmatpush1.bf16.msra.mxu0 %v186
    %420 = vmatprep.subr.bf16.mxu0 0
    %421 = vmatpush1.bf16.msra.mxu0 %v187
    %422 = vmatprep.subr.bf16.mxu0 0
    %423 = vmatpush1.bf16.msra.mxu0 0
    %424 = vmatprep.subr.bf16.mxu0 0
    %425 = vmatpush1.bf16.msra.mxu0 0
    %426 = vmatprep.subr.bf16.mxu0 0
    %427 = vmatpush1.bf16.msra.mxu0 0
    %428 = vmatprep.subr.bf16.mxu0 0
    %429 = vmatpush1.bf16.msra.mxu0 0
    %430 = vmatprep.subr.bf16.mxu0 0
    %431 = vmatpush1.bf16.msra.mxu0 0
    %432 = vmatprep.subr.bf16.mxu0 0
    %433 = vmatpush1.bf16.msra.mxu0 0
    %434 = vmatprep.subr.bf16.mxu0 0
    %435 = vmatpush1.bf16.msra.mxu0 0
    %436 = vmatprep.subr.bf16.mxu0 0
    %437 = vmatpush1.bf16.msra.mxu0 0
    %438 = vmatprep.subr.bf16.mxu0 0
    %439 = vmatpush1.bf16.msra.mxu0 0
    %440 = vmatprep.subr.bf16.mxu0 0
    %441 = vmatpush1.bf16.msra.mxu0 0
    %442 = vmatprep.subr.bf16.mxu0 0
    %443 = vmatpush1.bf16.msra.mxu0 0
    %444 = vmatprep.subr.bf16.mxu0 0
    %445 = vmatpush1.bf16.msra.mxu0 0
    %446 = vmatprep.mubr.bf16.mxu0 0
    %447 = vmatmul.mubr.bf16.gmra.mrb[0].mxu0 %v412
    %v448 = vpop.f32.mrb[0].mxu0
    %v449 = vadd.f32 %v46, %v448
    %v450 = vpop.f32.mrb[0].mxu0
    %v451 = vpop.f32.mrb[0].mxu0
    %v452 = vadd.f32 %v47, %v451
    %v453 = vpop.f32.mrb[0].mxu0
    %454 = vdwg.mxu0
    %v455 = vsel %vm340, %v449, -inf
    %456 = vmax.xlane.f32.xlu0 %v455
    %v457 = vpop.xlane.xlu0 %456
    %v458 = vsel %vm340, %v452, -inf
    %459 = vmax.xlane.f32.xlu0 %v458
    %v460 = vpop.xlane.xlu0 %459
    %v461 = vsub.f32 %v449, %v457
    %v462 = vsub.f32 %v452, %v460
    %v463 = vmul.f32 %v461, 1.442695
    %v464 = vpow.pop %v463
    %v465 = vmul.f32 %v462, 1.442695
    %v466 = vpow.pop %v465
    %v467 = vsel %vm340, %v464, 0.0
    %468 = vadd.xlane.f32.xlu0 %v467
    %v469 = vpop.xlane.xlu0 %468
    %v470 = vsel %vm340, %v466, 0.0
    %471 = vadd.xlane.f32.xlu0 %v470
    %v472 = vpop.xlane.xlu0 %471
    %v473 = vrcp.pop %v469
    %v474 = vrcp.pop %v472
    %v475 = vmul.f32 %v464, %v473
    %v476 = vmul.f32 %v466, %v474
    %v477 = vpack.c.bf16 %v476, %v475
    %v479 = vsel %vm340, %v477, 0
    %481 = vmatprep.subr.bf16.mxu0 0
    %482 = vmatpush1.bf16.msra.mxu0 %v151
    %483 = vmatprep.subr.bf16.mxu0 0
    %484 = vmatpush1.bf16.msra.mxu0 0
    %485 = vmatprep.subr.bf16.mxu0 0
    %486 = vmatpush1.bf16.msra.mxu0 0
    %487 = vmatprep.subr.bf16.mxu0 0
    %488 = vmatpush1.bf16.msra.mxu0 0
    %489 = vmatprep.subr.bf16.mxu0 0
    %490 = vmatpush1.bf16.msra.mxu0 0
    %491 = vmatprep.subr.bf16.mxu0 0
    %492 = vmatpush1.bf16.msra.mxu0 0
    %493 = vmatprep.subr.bf16.mxu0 0
    %494 = vmatpush1.bf16.msra.mxu0 0
    %495 = vmatprep.subr.bf16.mxu0 0
    %496 = vmatpush1.bf16.msra.mxu0 0
    %497 = vmatprep.subr.bf16.mxu0 0
    %498 = vmatpush1.bf16.msra.mxu0 0
    %499 = vmatprep.subr.bf16.mxu0 0
    %500 = vmatpush1.bf16.msra.mxu0 0
    %501 = vmatprep.subr.bf16.mxu0 0
    %502 = vmatpush1.bf16.msra.mxu0 0
    %503 = vmatprep.subr.bf16.mxu0 0
    %504 = vmatpush1.bf16.msra.mxu0 0
    %505 = vmatprep.subr.bf16.mxu0 0
    %506 = vmatpush1.bf16.msra.mxu0 0
    %507 = vmatprep.subr.bf16.mxu0 0
    %508 = vmatpush1.bf16.msra.mxu0 0
    %509 = vmatprep.subr.bf16.mxu0 0
    %510 = vmatpush1.bf16.msra.mxu0 0
    %511 = vmatprep.subr.bf16.mxu0 0
    %512 = vmatpush1.bf16.msra.mxu0 0
    %513 = vmatprep.mubr.bf16.mxu0 0
    %514 = vmatmul.mubr.bf16.gmra.mrb[0].mxu0 %v479
    %v515 = vpop.f32.mrb[0].mxu0
    %v516 = vadd.f32 0.0, %v515
    %v517 = vpop.f32.mrb[0].mxu0
    %v518 = vpop.f32.mrb[0].mxu0
    %v519 = vadd.f32 0.0, %v518
    %v520 = vpop.f32.mrb[0].mxu0
    %521 = vdwg.mxu0
    %v522 = vpack.c.bf16 %v293, %v289
    %v524 = vsel %vm248, %v522, 0
    %526 = vmatprep.subr.bf16.mxu0 0
    %527 = vmatpush1.bf16.msra.mxu0 %v184
    %528 = vmatprep.subr.bf16.mxu0 0
    %529 = vmatpush1.bf16.msra.mxu0 %v185
    %530 = vmatprep.subr.bf16.mxu0 0
    %531 = vmatpush1.bf16.msra.mxu0 %v186
    %532 = vmatprep.subr.bf16.mxu0 0
    %533 = vmatpush1.bf16.msra.mxu0 %v187
    %534 = vmatprep.subr.bf16.mxu0 0
    %535 = vmatpush1.bf16.msra.mxu0 0
    %536 = vmatprep.subr.bf16.mxu0 0
    %537 = vmatpush1.bf16.msra.mxu0 0
    %538 = vmatprep.subr.bf16.mxu0 0
    %539 = vmatpush1.bf16.msra.mxu0 0
    %540 = vmatprep.subr.bf16.mxu0 0
    %541 = vmatpush1.bf16.msra.mxu0 0
    %542 = vmatprep.subr.bf16.mxu0 0
    %543 = vmatpush1.bf16.msra.mxu0 0
    %544 = vmatprep.subr.bf16.mxu0 0
    %545 = vmatpush1.bf16.msra.mxu0 0
    %546 = vmatprep.subr.bf16.mxu0 0
    %547 = vmatpush1.bf16.msra.mxu0 0
    %548 = vmatprep.subr.bf16.mxu0 0
    %549 = vmatpush1.bf16.msra.mxu0 0
    %550 = vmatprep.subr.bf16.mxu0 0
    %551 = vmatpush1.bf16.msra.mxu0 0
    %552 = vmatprep.subr.bf16.mxu0 0
    %553 = vmatpush1.bf16.msra.mxu0 0
    %554 = vmatprep.subr.bf16.mxu0 0
    %555 = vmatpush1.bf16.msra.mxu0 0
    %556 = vmatprep.subr.bf16.mxu0 0
    %557 = vmatpush1.bf16.msra.mxu0 0
    %558 = vmatprep.mubr.bf16.mxu0 0
    %559 = vmatmul.mubr.bf16.gmra.mrb[0].mxu0 %v524
    %v560 = vpop.f32.mrb[0].mxu0
    %v561 = vadd.f32 %v46, %v560
    %v562 = vpop.f32.mrb[0].mxu0
    %v563 = vpop.f32.mrb[0].mxu0
    %v564 = vadd.f32 %v47, %v563
    %v565 = vpop.f32.mrb[0].mxu0
    %566 = vdwg.mxu0
    %v567 = vsel %vm340, %v561, -inf
    %568 = vmax.xlane.f32.xlu0 %v567
    %v569 = vpop.xlane.xlu0 %568
    %v570 = vsel %vm340, %v564, -inf
    %571 = vmax.xlane.f32.xlu0 %v570
    %v572 = vpop.xlane.xlu0 %571
    %v573 = vsub.f32 %v561, %v569
    %v574 = vsub.f32 %v564, %v572
    %v575 = vmul.f32 %v573, 1.442695
    %v576 = vpow.pop %v575
    %v577 = vmul.f32 %v574, 1.442695
    %v578 = vpow.pop %v577
    %v579 = vsel %vm340, %v576, 0.0
    %580 = vadd.xlane.f32.xlu0 %v579
    %v581 = vpop.xlane.xlu0 %580
    %v582 = vsel %vm340, %v578, 0.0
    %583 = vadd.xlane.f32.xlu0 %v582
    %v584 = vpop.xlane.xlu0 %583
    %v585 = vrcp.pop %v581
    %v586 = vrcp.pop %v584
    %v587 = vmul.f32 %v576, %v585
    %v588 = vmul.f32 %v578, %v586
    %v589 = vpack.c.bf16 %v588, %v587
    %v591 = vsel %vm340, %v589, 0
    %593 = vmatprep.subr.bf16.mxu0 0
    %594 = vmatpush1.bf16.msra.mxu0 %v151
    %595 = vmatprep.subr.bf16.mxu0 0
    %596 = vmatpush1.bf16.msra.mxu0 0
    %597 = vmatprep.subr.bf16.mxu0 0
    %598 = vmatpush1.bf16.msra.mxu0 0
    %599 = vmatprep.subr.bf16.mxu0 0
    %600 = vmatpush1.bf16.msra.mxu0 0
    %601 = vmatprep.subr.bf16.mxu0 0
    %602 = vmatpush1.bf16.msra.mxu0 0
    %603 = vmatprep.subr.bf16.mxu0 0
    %604 = vmatpush1.bf16.msra.mxu0 0
    %605 = vmatprep.subr.bf16.mxu0 0
    %606 = vmatpush1.bf16.msra.mxu0 0
    %607 = vmatprep.subr.bf16.mxu0 0
    %608 = vmatpush1.bf16.msra.mxu0 0
    %609 = vmatprep.subr.bf16.mxu0 0
    %610 = vmatpush1.bf16.msra.mxu0 0
    %611 = vmatprep.subr.bf16.mxu0 0
    %612 = vmatpush1.bf16.msra.mxu0 0
    %613 = vmatprep.subr.bf16.mxu0 0
    %614 = vmatpush1.bf16.msra.mxu0 0
    %615 = vmatprep.subr.bf16.mxu0 0
    %616 = vmatpush1.bf16.msra.mxu0 0
    %617 = vmatprep.subr.bf16.mxu0 0
    %618 = vmatpush1.bf16.msra.mxu0 0
    %619 = vmatprep.subr.bf16.mxu0 0
    %620 = vmatpush1.bf16.msra.mxu0 0
    %621 = vmatprep.subr.bf16.mxu0 0
    %622 = vmatpush1.bf16.msra.mxu0 0
    %623 = vmatprep.subr.bf16.mxu0 0
    %624 = vmatpush1.bf16.msra.mxu0 0
    %625 = vmatprep.mubr.bf16.mxu0 0
    %626 = vmatmul.mubr.bf16.gmra.mrb[0].mxu0 %v591
    %v627 = vpop.f32.mrb[0].mxu0
    %v628 = vadd.f32 0.0, %v627
    %v629 = vpop.f32.mrb[0].mxu0
    %v630 = vpop.f32.mrb[0].mxu0
    %v631 = vadd.f32 0.0, %v630
    %v632 = vpop.f32.mrb[0].mxu0
    %633 = vdwg.mxu0
    %635 = vrot.lane.b32.xlu0 %v522, 64
    %v636 = vpop.permute.xlu0 %635
    %v638 = vsel %vm248, %v636, 0
    %640 = vmatprep.subr.bf16.mxu0 0
    %641 = vmatpush1.bf16.msra.mxu0 %v184
    %642 = vmatprep.subr.bf16.mxu0 0
    %643 = vmatpush1.bf16.msra.mxu0 %v185
    %644 = vmatprep.subr.bf16.mxu0 0
    %645 = vmatpush1.bf16.msra.mxu0 %v186
    %646 = vmatprep.subr.bf16.mxu0 0
    %647 = vmatpush1.bf16.msra.mxu0 %v187
    %648 = vmatprep.subr.bf16.mxu0 0
    %649 = vmatpush1.bf16.msra.mxu0 0
    %650 = vmatprep.subr.bf16.mxu0 0
    %651 = vmatpush1.bf16.msra.mxu0 0
    %652 = vmatprep.subr.bf16.mxu0 0
    %653 = vmatpush1.bf16.msra.mxu0 0
    %654 = vmatprep.subr.bf16.mxu0 0
    %655 = vmatpush1.bf16.msra.mxu0 0
    %656 = vmatprep.subr.bf16.mxu0 0
    %657 = vmatpush1.bf16.msra.mxu0 0
    %658 = vmatprep.subr.bf16.mxu0 0
    %659 = vmatpush1.bf16.msra.mxu0 0
    %660 = vmatprep.subr.bf16.mxu0 0
    %661 = vmatpush1.bf16.msra.mxu0 0
    %662 = vmatprep.subr.bf16.mxu0 0
    %663 = vmatpush1.bf16.msra.mxu0 0
    %664 = vmatprep.subr.bf16.mxu0 0
    %665 = vmatpush1.bf16.msra.mxu0 0
    %666 = vmatprep.subr.bf16.mxu0 0
    %667 = vmatpush1.bf16.msra.mxu0 0
    %668 = vmatprep.subr.bf16.mxu0 0
    %669 = vmatpush1.bf16.msra.mxu0 0
    %670 = vmatprep.subr.bf16.mxu0 0
    %671 = vmatpush1.bf16.msra.mxu0 0
    %672 = vmatprep.mubr.bf16.mxu0 0
    %673 = vmatmul.mubr.bf16.gmra.mrb[0].mxu0 %v638
    %v674 = vpop.f32.mrb[0].mxu0
    %v675 = vadd.f32 %v46, %v674
    %v676 = vpop.f32.mrb[0].mxu0
    %v677 = vpop.f32.mrb[0].mxu0
    %v678 = vadd.f32 %v47, %v677
    %v679 = vpop.f32.mrb[0].mxu0
    %680 = vdwg.mxu0
    %v681 = vsel %vm340, %v675, -inf
    %682 = vmax.xlane.f32.xlu0 %v681
    %v683 = vpop.xlane.xlu0 %682
    %v684 = vsel %vm340, %v678, -inf
    %685 = vmax.xlane.f32.xlu0 %v684
    %v686 = vpop.xlane.xlu0 %685
    %v687 = vsub.f32 %v675, %v683
    %v688 = vsub.f32 %v678, %v686
    %v689 = vmul.f32 %v687, 1.442695
    %v690 = vpow.pop %v689
    %v691 = vmul.f32 %v688, 1.442695
    %v692 = vpow.pop %v691
    %v693 = vsel %vm340, %v690, 0.0
    %694 = vadd.xlane.f32.xlu0 %v693
    %v695 = vpop.xlane.xlu0 %694
    %v696 = vsel %vm340, %v692, 0.0
    %697 = vadd.xlane.f32.xlu0 %v696
    %v698 = vpop.xlane.xlu0 %697
    %v699 = vrcp.pop %v695
    %v700 = vrcp.pop %v698
    %v701 = vmul.f32 %v690, %v699
    %v702 = vmul.f32 %v692, %v700
    %v703 = vpack.c.bf16 %v702, %v701
    %v705 = vsel %vm340, %v703, 0
    %707 = vmatprep.subr.bf16.mxu0 0
    %708 = vmatpush1.bf16.msra.mxu0 %v151
    %709 = vmatprep.subr.bf16.mxu0 0
    %710 = vmatpush1.bf16.msra.mxu0 0
    %711 = vmatprep.subr.bf16.mxu0 0
    %712 = vmatpush1.bf16.msra.mxu0 0
    %713 = vmatprep.subr.bf16.mxu0 0
    %714 = vmatpush1.bf16.msra.mxu0 0
    %715 = vmatprep.subr.bf16.mxu0 0
    %716 = vmatpush1.bf16.msra.mxu0 0
    %717 = vmatprep.subr.bf16.mxu0 0
    %718 = vmatpush1.bf16.msra.mxu0 0
    %719 = vmatprep.subr.bf16.mxu0 0
    %720 = vmatpush1.bf16.msra.mxu0 0
    %721 = vmatprep.subr.bf16.mxu0 0
    %722 = vmatpush1.bf16.msra.mxu0 0
    %723 = vmatprep.subr.bf16.mxu0 0
    %724 = vmatpush1.bf16.msra.mxu0 0
    %725 = vmatprep.subr.bf16.mxu0 0
    %726 = vmatpush1.bf16.msra.mxu0 0
    %727 = vmatprep.subr.bf16.mxu0 0
    %728 = vmatpush1.bf16.msra.mxu0 0
    %729 = vmatprep.subr.bf16.mxu0 0
    %730 = vmatpush1.bf16.msra.mxu0 0
    %731 = vmatprep.subr.bf16.mxu0 0
    %732 = vmatpush1.bf16.msra.mxu0 0
    %733 = vmatprep.subr.bf16.mxu0 0
    %734 = vmatpush1.bf16.msra.mxu0 0
    %735 = vmatprep.subr.bf16.mxu0 0
    %736 = vmatpush1.bf16.msra.mxu0 0
    %737 = vmatprep.subr.bf16.mxu0 0
    %738 = vmatpush1.bf16.msra.mxu0 0
    %739 = vmatprep.mubr.bf16.mxu0 0
    %740 = vmatmul.mubr.bf16.gmra.mrb[0].mxu0 %v705
    %v741 = vpop.f32.mrb[0].mxu0
    %v742 = vadd.f32 0.0, %v741
    %v743 = vpop.f32.mrb[0].mxu0
    %v744 = vpop.f32.mrb[0].mxu0
    %v745 = vadd.f32 0.0, %v744
    %v746 = vpop.f32.mrb[0].mxu0
    %747 = vdwg.mxu0
    %750 = vrot.lane.b32.xlu0 %v516, 64
    %v751 = vpop.permute.xlu0 %750
    %752 = vrot.lane.b32.xlu0 %v519, 64
    %v753 = vpop.permute.xlu0 %752
    %758 = vrot.lane.b32.xlu0 %v742, 64
    %v759 = vpop.permute.xlu0 %758
    %760 = vrot.lane.b32.xlu0 %v745, 64
    %v761 = vpop.permute.xlu0 %760
    %v764 = vsel %vm248, %v402, %v751
    %v765 = vsel %vm248, %v405, %v753
    %v766 = vsel %vm248, %v628, %v759
    %v767 = vsel %vm248, %v631, %v761
    %v768 = vpack.c.bf16 %v765, %v764
    %v769 = vpack.c.bf16 %v767, %v766
    %v770 = vld [vmem:[%s6] sm:$0xf]
    %v771 = vld [vmem:[%s6 + $0x4] sm:$0xf]
    %v772 = vld [vmem:[%s6 + $0x8] sm:$0xf]
    %v773 = vld [vmem:[%s6 + $0xc] sm:$0xf]
    %v774 = vld [vmem:[%s6 + $0x10] sm:$0xf]
    %v775 = vld [vmem:[%s6 + $0x14] sm:$0xf]
    %v776 = vld [vmem:[%s6 + $0x18] sm:$0xf]
    %v777 = vld [vmem:[%s6 + $0x1c] sm:$0xf]
    %v778 = vld [vmem:[%s6 + $0x20] sm:$0xf]
    %v779 = vld [vmem:[%s6 + $0x24] sm:$0xf]
    %v780 = vld [vmem:[%s6 + $0x28] sm:$0xf]
    %v781 = vld [vmem:[%s6 + $0x2c] sm:$0xf]
    %v782 = vld [vmem:[%s6 + $0x30] sm:$0xf]
    %v783 = vld [vmem:[%s6 + $0x34] sm:$0xf]
    %v784 = vld [vmem:[%s6 + $0x38] sm:$0xf]
    %v785 = vld [vmem:[%s6 + $0x3c] sm:$0xf]
    %v786 = vld [vmem:[%s6 + $0x40] sm:$0xf]
    %v787 = vld [vmem:[%s6 + $0x44] sm:$0xf]
    %v788 = vld [vmem:[%s6 + $0x48] sm:$0xf]
    %v789 = vld [vmem:[%s6 + $0x4c] sm:$0xf]
    %v790 = vld [vmem:[%s6 + $0x50] sm:$0xf]
    %v791 = vld [vmem:[%s6 + $0x54] sm:$0xf]
    %v792 = vld [vmem:[%s6 + $0x58] sm:$0xf]
    %v793 = vld [vmem:[%s6 + $0x5c] sm:$0xf]
    %v794 = vld [vmem:[%s6 + $0x60] sm:$0xf]
    %v795 = vld [vmem:[%s6 + $0x64] sm:$0xf]
    %v796 = vld [vmem:[%s6 + $0x68] sm:$0xf]
    %v797 = vld [vmem:[%s6 + $0x6c] sm:$0xf]
    %v798 = vld [vmem:[%s6 + $0x70] sm:$0xf]
    %v799 = vld [vmem:[%s6 + $0x74] sm:$0xf]
    %v800 = vld [vmem:[%s6 + $0x78] sm:$0xf]
    %v801 = vld [vmem:[%s6 + $0x7c] sm:$0xf]
    %v802 = vld [vmem:[%s11] sm:$0x1]
    %v803 = vlaneseq
    %v804 = vshrl.u32 %v803, 7
    %v805 = vsub.s32 0, %v804
    %v806 = vrot.slane %v802, %v805
    %v839 = vunpack.c.l.b16 %v770
    %v840 = vunpack.c.l.b16 %v771
    %v841 = vunpack.c.l.b16 %v772
    %v842 = vunpack.c.l.b16 %v773
    %v843 = vunpack.c.l.b16 %v774
    %v844 = vunpack.c.l.b16 %v775
    %v845 = vunpack.c.l.b16 %v776
    %v846 = vunpack.c.l.b16 %v777
    %v847 = vunpack.c.l.b16 %v778
    %v848 = vunpack.c.l.b16 %v779
    %v849 = vunpack.c.l.b16 %v780
    %v850 = vunpack.c.l.b16 %v781
    %v851 = vunpack.c.l.b16 %v782
    %v852 = vunpack.c.l.b16 %v783
    %v853 = vunpack.c.l.b16 %v784
    %v854 = vunpack.c.l.b16 %v785
    %v855 = vunpack.c.l.b16 %v786
    %v856 = vunpack.c.l.b16 %v787
    %v857 = vunpack.c.l.b16 %v788
    %v858 = vunpack.c.l.b16 %v789
    %v859 = vunpack.c.l.b16 %v790
    %v860 = vunpack.c.l.b16 %v791
    %v861 = vunpack.c.l.b16 %v792
    %v862 = vunpack.c.l.b16 %v793
    %v863 = vunpack.c.l.b16 %v794
    %v864 = vunpack.c.l.b16 %v795
    %v865 = vunpack.c.l.b16 %v796
    %v866 = vunpack.c.l.b16 %v797
    %v867 = vunpack.c.l.b16 %v798
    %v868 = vunpack.c.l.b16 %v799
    %v869 = vunpack.c.l.b16 %v800
    %v870 = vunpack.c.l.b16 %v801
    %v871 = vpack.c.b16 %v840, %v839
    %v872 = vpack.c.b16 %v842, %v841
    %v873 = vpack.c.b16 %v844, %v843
    %v874 = vpack.c.b16 %v846, %v845
    %v875 = vpack.c.b16 %v848, %v847
    %v876 = vpack.c.b16 %v850, %v849
    %v877 = vpack.c.b16 %v852, %v851
    %v878 = vpack.c.b16 %v854, %v853
    %v879 = vpack.c.b16 %v856, %v855
    %v880 = vpack.c.b16 %v858, %v857
    %v881 = vpack.c.b16 %v860, %v859
    %v882 = vpack.c.b16 %v862, %v861
    %v883 = vpack.c.b16 %v864, %v863
    %v884 = vpack.c.b16 %v866, %v865
    %v885 = vpack.c.b16 %v868, %v867
    %v886 = vpack.c.b16 %v870, %v869
    %903 = vmatprep.subr.bf16.mxu0 0
    %904 = vmatpush1.bf16.msra.mxu0 %v871
    %905 = vmatprep.subr.bf16.mxu0 0
    %906 = vmatpush1.bf16.msra.mxu0 %v872
    %907 = vmatprep.subr.bf16.mxu0 0
    %908 = vmatpush1.bf16.msra.mxu0 %v873
    %909 = vmatprep.subr.bf16.mxu0 0
    %910 = vmatpush1.bf16.msra.mxu0 %v874
    %911 = vmatprep.subr.bf16.mxu0 0
    %912 = vmatpush1.bf16.msra.mxu0 %v875
    %913 = vmatprep.subr.bf16.mxu0 0
    %914 = vmatpush1.bf16.msra.mxu0 %v876
    %915 = vmatprep.subr.bf16.mxu0 0
    %916 = vmatpush1.bf16.msra.mxu0 %v877
    %917 = vmatprep.subr.bf16.mxu0 0
    %918 = vmatpush1.bf16.msra.mxu0 %v878
    %919 = vmatprep.subr.bf16.mxu0 0
    %920 = vmatpush1.bf16.msra.mxu0 %v879
    %921 = vmatprep.subr.bf16.mxu0 0
    %922 = vmatpush1.bf16.msra.mxu0 %v880
    %923 = vmatprep.subr.bf16.mxu0 0
    %924 = vmatpush1.bf16.msra.mxu0 %v881
    %925 = vmatprep.subr.bf16.mxu0 0
    %926 = vmatpush1.bf16.msra.mxu0 %v882
    %927 = vmatprep.subr.bf16.mxu0 0
    %928 = vmatpush1.bf16.msra.mxu0 %v883
    %929 = vmatprep.subr.bf16.mxu0 0
    %930 = vmatpush1.bf16.msra.mxu0 %v884
    %931 = vmatprep.subr.bf16.mxu0 0
    %932 = vmatpush1.bf16.msra.mxu0 %v885
    %933 = vmatprep.subr.bf16.mxu0 0
    %934 = vmatpush1.bf16.msra.mxu0 %v886
    %935 = vmatprep.mubr.bf16.mxu0 %v769
    %936 = vmatmul.mubr.bf16.gmra.mrb[0].mxu0 %v768
    %v937 = vpop.f32.mrb[0].mxu0
    %v938 = vadd.f32 %v806, %v937
    %v939 = vpop.f32.mrb[0].mxu0
    %v940 = vpop.f32.mrb[0].mxu0
    %v941 = vadd.f32 %v806, %v940
    %v942 = vpop.f32.mrb[0].mxu0
    %943 = vdwg.mxu0
    %v944 = vadd.f32 %v143, %v938
    %v945 = vadd.f32 %v148, %v941
    %v946 = vld [vmem:[%s11 + $0x1] sm:$0x1]
    %v947 = vld [vmem:[%s11 + $0x2] sm:$0x1]
    %v948 = vsel %vm248, %v944, 0.0
    %949 = vadd.xlane.f32.xlu0 %v948
    %v950 = vpop.xlane.xlu0 %949
    %v951 = vsel %vm248, %v945, 0.0
    %952 = vadd.xlane.f32.xlu0 %v951
    %v953 = vpop.xlane.xlu0 %952
    %v954 = vrcp.pop 64.0
    %v955 = vmul.f32 %v950, %v954
    %v956 = vmul.f32 %v953, %v954
    %v957 = vmul.f32 %v944, %v944
    %v958 = vmul.f32 %v945, %v945
    %v959 = vsel %vm248, %v957, 0.0
    %960 = vadd.xlane.f32.xlu0 %v959
    %v961 = vpop.xlane.xlu0 %960
    %v962 = vsel %vm248, %v958, 0.0
    %963 = vadd.xlane.f32.xlu0 %v962
    %v964 = vpop.xlane.xlu0 %963
    %v965 = vmul.f32 %v961, %v954
    %v966 = vmul.f32 %v964, %v954
    %v967 = vsub.f32 %v944, %v955
    %v968 = vsub.f32 %v945, %v956
    %v969 = vmul.f32 %v955, %v955
    %v970 = vmul.f32 %v956, %v956
    %v971 = vsub.f32 %v965, %v969
    %v972 = vsub.f32 %v966, %v970
    %v973 = vadd.f32 %v971, 1e-05
    %v974 = vadd.f32 %v972, 1e-05
    %v975 = vrsqrt.pop %v973
    %v976 = vrsqrt.pop %v974
    %v977 = vmul.f32 %v967, %v975
    %v978 = vmul.f32 %v968, %v976
    %v979 = vlaneseq
    %v980 = vshrl.u32 %v979, 7
    %v981 = vsub.s32 0, %v980
    %v982 = vrot.slane %v946, %v981
    %v983 = vmul.f32 %v977, %v982
    %v984 = vmul.f32 %v978, %v982
    %v985 = vlaneseq
    %v986 = vshrl.u32 %v985, 7
    %v987 = vsub.s32 0, %v986
    %v988 = vrot.slane %v947, %v987
    %v989 = vadd.f32 %v983, %v988
    %v990 = vadd.f32 %v984, %v988
    %v991 = vpack.c.bf16 %v990, %v989
    %v992 = vld [vmem:[%s7] sm:$0xff]
    %v993 = vld [vmem:[%s7 + $0x8] sm:$0xff]
    %v994 = vld [vmem:[%s7 + $0x10] sm:$0xff]
    %v995 = vld [vmem:[%s7 + $0x18] sm:$0xff]
    %v996 = vld [vmem:[%s7 + $0x20] sm:$0xff]
    %v997 = vld [vmem:[%s7 + $0x28] sm:$0xff]
    %v998 = vld [vmem:[%s7 + $0x30] sm:$0xff]
    %v999 = vld [vmem:[%s7 + $0x38] sm:$0xff]
    %v1000 = vld [vmem:[%s10] ss:$2 sm:$0x3]
    %v1002 = vlaneseq
    %v1003 = vshrl.u32 %v1002, 7
    %v1004 = vsub.s32 0, %v1003
    %v1005 = vrot.slane %v1000, %v1004
    %v1006 = vlaneseq
    %v1007 = vshrl.u32 %v1006, 7
    %v1008 = vsub.s32 1, %v1007
    %v1009 = vrot.slane %v1000, %v1008
    %v1020 = vunpack.c.l.b16 %v992
    %v1021 = vunpack.c.h.b16 %v992
    %v1022 = vunpack.c.l.b16 %v993
    %v1023 = vunpack.c.h.b16 %v993
    %v1024 = vunpack.c.l.b16 %v994
    %v1025 = vunpack.c.h.b16 %v994
    %v1026 = vunpack.c.l.b16 %v995
    %v1027 = vunpack.c.h.b16 %v995
    %v1028 = vunpack.c.l.b16 %v996
    %v1029 = vunpack.c.h.b16 %v996
    %v1030 = vunpack.c.l.b16 %v997
    %v1031 = vunpack.c.h.b16 %v997
    %v1032 = vunpack.c.l.b16 %v998
    %v1033 = vunpack.c.h.b16 %v998
    %v1034 = vunpack.c.l.b16 %v999
    %v1035 = vunpack.c.h.b16 %v999
    %v1036 = vpack.c.b16 %v1022, %v1020
    %v1037 = vpack.c.b16 %v1023, %v1021
    %v1038 = vpack.c.b16 %v1026, %v1024
    %v1039 = vpack.c.b16 %v1027, %v1025
    %v1040 = vpack.c.b16 %v1030, %v1028
    %v1041 = vpack.c.b16 %v1031, %v1029
    %v1042 = vpack.c.b16 %v1034, %v1032
    %v1043 = vpack.c.b16 %v1035, %v1033
    %v1053 = vsel %vm248, %v991, 0
    %1055 = vmatprep.subr.bf16.mxu0 %v1037
    %1056 = vmatpush1.bf16.msra.mxu0 %v1036
    %1057 = vmatprep.subr.bf16.mxu0 %v1039
    %1058 = vmatpush1.bf16.msra.mxu0 %v1038
    %1059 = vmatprep.subr.bf16.mxu0 %v1041
    %1060 = vmatpush1.bf16.msra.mxu0 %v1040
    %1061 = vmatprep.subr.bf16.mxu0 %v1043
    %1062 = vmatpush1.bf16.msra.mxu0 %v1042
    %1063 = vmatprep.subr.bf16.mxu0 0
    %1064 = vmatpush1.bf16.msra.mxu0 0
    %1065 = vmatprep.subr.bf16.mxu0 0
    %1066 = vmatpush1.bf16.msra.mxu0 0
    %1067 = vmatprep.subr.bf16.mxu0 0
    %1068 = vmatpush1.bf16.msra.mxu0 0
    %1069 = vmatprep.subr.bf16.mxu0 0
    %1070 = vmatpush1.bf16.msra.mxu0 0
    %1071 = vmatprep.subr.bf16.mxu0 0
    %1072 = vmatpush1.bf16.msra.mxu0 0
    %1073 = vmatprep.subr.bf16.mxu0 0
    %1074 = vmatpush1.bf16.msra.mxu0 0
    %1075 = vmatprep.subr.bf16.mxu0 0
    %1076 = vmatpush1.bf16.msra.mxu0 0
    %1077 = vmatprep.subr.bf16.mxu0 0
    %1078 = vmatpush1.bf16.msra.mxu0 0
    %1079 = vmatprep.subr.bf16.mxu0 0
    %1080 = vmatpush1.bf16.msra.mxu0 0
    %1081 = vmatprep.subr.bf16.mxu0 0
    %1082 = vmatpush1.bf16.msra.mxu0 0
    %1083 = vmatprep.subr.bf16.mxu0 0
    %1084 = vmatpush1.bf16.msra.mxu0 0
    %1085 = vmatprep.subr.bf16.mxu0 0
    %1086 = vmatpush1.bf16.msra.mxu0 0
    %1087 = vmatprep.mubr.bf16.mxu0 0
    %1088 = vmatmul.mubr.bf16.gmra.mrb[0].mxu0 %v1053
    %v1089 = vpop.f32.mrb[0].mxu0
    %v1090 = vadd.f32 %v1005, %v1089
    %v1091 = vpop.f32.mrb[0].mxu0
    %v1092 = vadd.f32 %v1009, %v1091
    %v1093 = vpop.f32.mrb[0].mxu0
    %v1094 = vadd.f32 %v1005, %v1093
    %v1095 = vpop.f32.mrb[0].mxu0
    %v1096 = vadd.f32 %v1009, %v1095
    %1097 = vdwg.mxu0
    %v1098 = vmax.f32 %v1090, 0.0
    %v1099 = vmax.f32 %v1092, 0.0
    %v1100 = vmax.f32 %v1094, 0.0
    %v1101 = vmax.f32 %v1096, 0.0
    %v1102 = vpack.c.bf16 %v1100, %v1098
    %v1103 = vpack.c.bf16 %v1101, %v1099
    %v1104 = vld [vmem:[%s8] sm:$0xf]
    %v1105 = vld [vmem:[%s8 + $0x4] sm:$0xf]
    %v1106 = vld [vmem:[%s8 + $0x8] sm:$0xf]
    %v1107 = vld [vmem:[%s8 + $0xc] sm:$0xf]
    %v1108 = vld [vmem:[%s8 + $0x10] sm:$0xf]
    %v1109 = vld [vmem:[%s8 + $0x14] sm:$0xf]
    %v1110 = vld [vmem:[%s8 + $0x18] sm:$0xf]
    %v1111 = vld [vmem:[%s8 + $0x1c] sm:$0xf]
    %v1112 = vld [vmem:[%s8 + $0x20] sm:$0xf]
    %v1113 = vld [vmem:[%s8 + $0x24] sm:$0xf]
    %v1114 = vld [vmem:[%s8 + $0x28] sm:$0xf]
    %v1115 = vld [vmem:[%s8 + $0x2c] sm:$0xf]
    %v1116 = vld [vmem:[%s8 + $0x30] sm:$0xf]
    %v1117 = vld [vmem:[%s8 + $0x34] sm:$0xf]
    %v1118 = vld [vmem:[%s8 + $0x38] sm:$0xf]
    %v1119 = vld [vmem:[%s8 + $0x3c] sm:$0xf]
    %v1120 = vld [vmem:[%s8 + $0x40] sm:$0xf]
    %v1121 = vld [vmem:[%s8 + $0x44] sm:$0xf]
    %v1122 = vld [vmem:[%s8 + $0x48] sm:$0xf]
    %v1123 = vld [vmem:[%s8 + $0x4c] sm:$0xf]
    %v1124 = vld [vmem:[%s8 + $0x50] sm:$0xf]
    %v1125 = vld [vmem:[%s8 + $0x54] sm:$0xf]
    %v1126 = vld [vmem:[%s8 + $0x58] sm:$0xf]
    %v1127 = vld [vmem:[%s8 + $0x5c] sm:$0xf]
    %v1128 = vld [vmem:[%s8 + $0x60] sm:$0xf]
    %v1129 = vld [vmem:[%s8 + $0x64] sm:$0xf]
    %v1130 = vld [vmem:[%s8 + $0x68] sm:$0xf]
    %v1131 = vld [vmem:[%s8 + $0x6c] sm:$0xf]
    %v1132 = vld [vmem:[%s8 + $0x70] sm:$0xf]
    %v1133 = vld [vmem:[%s8 + $0x74] sm:$0xf]
    %v1134 = vld [vmem:[%s8 + $0x78] sm:$0xf]
    %v1135 = vld [vmem:[%s8 + $0x7c] sm:$0xf]
    %v1136 = vld [vmem:[%s11 + $0x3] sm:$0x1]
    %v1137 = vlaneseq
    %v1138 = vshrl.u32 %v1137, 7
    %v1139 = vsub.s32 0, %v1138
    %v1140 = vrot.slane %v1136, %v1139
    %v1173 = vunpack.c.l.b16 %v1104
    %v1174 = vunpack.c.l.b16 %v1105
    %v1175 = vunpack.c.l.b16 %v1106
    %v1176 = vunpack.c.l.b16 %v1107
    %v1177 = vunpack.c.l.b16 %v1108
    %v1178 = vunpack.c.l.b16 %v1109
    %v1179 = vunpack.c.l.b16 %v1110
    %v1180 = vunpack.c.l.b16 %v1111
    %v1181 = vunpack.c.l.b16 %v1112
    %v1182 = vunpack.c.l.b16 %v1113
    %v1183 = vunpack.c.l.b16 %v1114
    %v1184 = vunpack.c.l.b16 %v1115
    %v1185 = vunpack.c.l.b16 %v1116
    %v1186 = vunpack.c.l.b16 %v1117
    %v1187 = vunpack.c.l.b16 %v1118
    %v1188 = vunpack.c.l.b16 %v1119
    %v1189 = vunpack.c.l.b16 %v1120
    %v1190 = vunpack.c.l.b16 %v1121
    %v1191 = vunpack.c.l.b16 %v1122
    %v1192 = vunpack.c.l.b16 %v1123
    %v1193 = vunpack.c.l.b16 %v1124
    %v1194 = vunpack.c.l.b16 %v1125
    %v1195 = vunpack.c.l.b16 %v1126
    %v1196 = vunpack.c.l.b16 %v1127
    %v1197 = vunpack.c.l.b16 %v1128
    %v1198 = vunpack.c.l.b16 %v1129
    %v1199 = vunpack.c.l.b16 %v1130
    %v1200 = vunpack.c.l.b16 %v1131
    %v1201 = vunpack.c.l.b16 %v1132
    %v1202 = vunpack.c.l.b16 %v1133
    %v1203 = vunpack.c.l.b16 %v1134
    %v1204 = vunpack.c.l.b16 %v1135
    %v1205 = vpack.c.b16 %v1174, %v1173
    %v1206 = vpack.c.b16 %v1176, %v1175
    %v1207 = vpack.c.b16 %v1178, %v1177
    %v1208 = vpack.c.b16 %v1180, %v1179
    %v1209 = vpack.c.b16 %v1182, %v1181
    %v1210 = vpack.c.b16 %v1184, %v1183
    %v1211 = vpack.c.b16 %v1186, %v1185
    %v1212 = vpack.c.b16 %v1188, %v1187
    %v1213 = vpack.c.b16 %v1190, %v1189
    %v1214 = vpack.c.b16 %v1192, %v1191
    %v1215 = vpack.c.b16 %v1194, %v1193
    %v1216 = vpack.c.b16 %v1196, %v1195
    %v1217 = vpack.c.b16 %v1198, %v1197
    %v1218 = vpack.c.b16 %v1200, %v1199
    %v1219 = vpack.c.b16 %v1202, %v1201
    %v1220 = vpack.c.b16 %v1204, %v1203
    %1237 = vmatprep.subr.bf16.mxu0 0
    %1238 = vmatpush1.bf16.msra.mxu0 %v1205
    %1239 = vmatprep.subr.bf16.mxu0 0
    %1240 = vmatpush1.bf16.msra.mxu0 %v1206
    %1241 = vmatprep.subr.bf16.mxu0 0
    %1242 = vmatpush1.bf16.msra.mxu0 %v1207
    %1243 = vmatprep.subr.bf16.mxu0 0
    %1244 = vmatpush1.bf16.msra.mxu0 %v1208
    %1245 = vmatprep.subr.bf16.mxu0 0
    %1246 = vmatpush1.bf16.msra.mxu0 %v1209
    %1247 = vmatprep.subr.bf16.mxu0 0
    %1248 = vmatpush1.bf16.msra.mxu0 %v1210
    %1249 = vmatprep.subr.bf16.mxu0 0
    %1250 = vmatpush1.bf16.msra.mxu0 %v1211
    %1251 = vmatprep.subr.bf16.mxu0 0
    %1252 = vmatpush1.bf16.msra.mxu0 %v1212
    %1253 = vmatprep.subr.bf16.mxu0 0
    %1254 = vmatpush1.bf16.msra.mxu0 %v1213
    %1255 = vmatprep.subr.bf16.mxu0 0
    %1256 = vmatpush1.bf16.msra.mxu0 %v1214
    %1257 = vmatprep.subr.bf16.mxu0 0
    %1258 = vmatpush1.bf16.msra.mxu0 %v1215
    %1259 = vmatprep.subr.bf16.mxu0 0
    %1260 = vmatpush1.bf16.msra.mxu0 %v1216
    %1261 = vmatprep.subr.bf16.mxu0 0
    %1262 = vmatpush1.bf16.msra.mxu0 %v1217
    %1263 = vmatprep.subr.bf16.mxu0 0
    %1264 = vmatpush1.bf16.msra.mxu0 %v1218
    %1265 = vmatprep.subr.bf16.mxu0 0
    %1266 = vmatpush1.bf16.msra.mxu0 %v1219
    %1267 = vmatprep.subr.bf16.mxu0 0
    %1268 = vmatpush1.bf16.msra.mxu0 %v1220
    %1269 = vmatprep.mubr.bf16.mxu0 %v1103
    %1270 = vmatmul.mubr.bf16.gmra.mrb[0].mxu0 %v1102
    %v1271 = vpop.f32.mrb[0].mxu0
    %v1272 = vadd.f32 %v1140, %v1271
    %v1273 = vpop.f32.mrb[0].mxu0
    %v1274 = vpop.f32.mrb[0].mxu0
    %v1275 = vadd.f32 %v1140, %v1274
    %v1276 = vpop.f32.mrb[0].mxu0
    %1277 = vdwg.mxu0
    %v1278 = vadd.f32 %v989, %v1272
    %v1279 = vadd.f32 %v990, %v1275
    %v1280 = vld [vmem:[%s11 + $0x4] sm:$0x1]
    %v1281 = vld [vmem:[%s11 + $0x5] sm:$0x1]
    %v1282 = vsel %vm248, %v1278, 0.0
    %1283 = vadd.xlane.f32.xlu0 %v1282
    %v1284 = vpop.xlane.xlu0 %1283
    %v1285 = vsel %vm248, %v1279, 0.0
    %1286 = vadd.xlane.f32.xlu0 %v1285
    %v1287 = vpop.xlane.xlu0 %1286
    %v1288 = vmul.f32 %v1284, %v954
    %v1289 = vmul.f32 %v1287, %v954
    %v1290 = vmul.f32 %v1278, %v1278
    %v1291 = vmul.f32 %v1279, %v1279
    %v1292 = vsel %vm248, %v1290, 0.0
    %1293 = vadd.xlane.f32.xlu0 %v1292
    %v1294 = vpop.xlane.xlu0 %1293
    %v1295 = vsel %vm248, %v1291, 0.0
    %1296 = vadd.xlane.f32.xlu0 %v1295
    %v1297 = vpop.xlane.xlu0 %1296
    %v1298 = vmul.f32 %v1294, %v954
    %v1299 = vmul.f32 %v1297, %v954
    %v1300 = vsub.f32 %v1278, %v1288
    %v1301 = vsub.f32 %v1279, %v1289
    %v1302 = vmul.f32 %v1288, %v1288
    %v1303 = vmul.f32 %v1289, %v1289
    %v1304 = vsub.f32 %v1298, %v1302
    %v1305 = vsub.f32 %v1299, %v1303
    %v1306 = vadd.f32 %v1304, 1e-05
    %v1307 = vadd.f32 %v1305, 1e-05
    %v1308 = vrsqrt.pop %v1306
    %v1309 = vrsqrt.pop %v1307
    %v1310 = vmul.f32 %v1300, %v1308
    %v1311 = vmul.f32 %v1301, %v1309
    %v1312 = vlaneseq
    %v1313 = vshrl.u32 %v1312, 7
    %v1314 = vsub.s32 0, %v1313
    %v1315 = vrot.slane %v1280, %v1314
    %v1316 = vmul.f32 %v1310, %v1315
    %v1317 = vmul.f32 %v1311, %v1315
    %v1318 = vlaneseq
    %v1319 = vshrl.u32 %v1318, 7
    %v1320 = vsub.s32 0, %v1319
    %v1321 = vrot.slane %v1281, %v1320
    %v1322 = vadd.f32 %v1316, %v1321
    %v1323 = vadd.f32 %v1317, %v1321
    %v1324 = vpack.c.bf16 %v1323, %v1322
    %1325 = vxpose.xlu0.b32.start [1/16] %v1322, 128
    %1326 = vxpose.xlu0.b32.cont [2/16] %v1323, 128
    %1327 = vxpose.xlu0.b32.cont [3/16] 0.0, 128
    %1328 = vxpose.xlu0.b32.cont [4/16] 0.0, 128
    %1329 = vxpose.xlu0.b32.cont [5/16] 0.0, 128
    %1330 = vxpose.xlu0.b32.cont [6/16] 0.0, 128
    %1331 = vxpose.xlu0.b32.cont [7/16] 0.0, 128
    %1332 = vxpose.xlu0.b32.cont [8/16] 0.0, 128
    %1333 = vxpose.xlu0.b32.cont [9/16] 0.0, 128
    %1334 = vxpose.xlu0.b32.cont [10/16] 0.0, 128
    %1335 = vxpose.xlu0.b32.cont [11/16] 0.0, 128
    %1336 = vxpose.xlu0.b32.cont [12/16] 0.0, 128
    %1337 = vxpose.xlu0.b32.cont [13/16] 0.0, 128
    %1338 = vxpose.xlu0.b32.cont [14/16] 0.0, 128
    %1339 = vxpose.xlu0.b32.cont [15/16] 0.0, 128
    %1340 = vxpose.xlu0.b32.end [16/16] 0.0, 128
    %v1341 = vpop.trf.xlu0
    %v1342 = vpop.trf.xlu0
    %v1343 = vpop.trf.xlu0
    %v1344 = vpop.trf.xlu0
    %v1345 = vpop.trf.xlu0
    %v1346 = vpop.trf.xlu0
    %v1347 = vpop.trf.xlu0
    %v1348 = vpop.trf.xlu0
    %v1349 = vpop.trf.xlu0
    %v1350 = vpop.trf.xlu0
    %v1351 = vpop.trf.xlu0
    %v1352 = vpop.trf.xlu0
    %v1353 = vpop.trf.xlu0
    %v1354 = vpop.trf.xlu0
    %v1355 = vpop.trf.xlu0
    %v1356 = vpop.trf.xlu0
    %v1357 = vpack.c.bf16 %v1342, %v1341
    %v1358 = vpack.c.bf16 %v1344, %v1343
    %v1359 = vpack.c.bf16 %v1346, %v1345
    %v1360 = vpack.c.bf16 %v1348, %v1347
    %s1361 = scalar_lea.vmem %s5, 64
    %v1362 = vld [vmem:[%s1361] sm:$0xff]
    %v1363 = vld [vmem:[%s1361 + $0x8] sm:$0xff]
    %v1364 = vld [vmem:[%s1361 + $0x10] sm:$0xff]
    %v1365 = vld [vmem:[%s1361 + $0x18] sm:$0xff]
    %v1366 = vld [vmem:[%s1361 + $0x20] sm:$0xff]
    %v1367 = vld [vmem:[%s1361 + $0x28] sm:$0xff]
    %v1368 = vld [vmem:[%s1361 + $0x30] sm:$0xff]
    %v1369 = vld [vmem:[%s1361 + $0x38] sm:$0xff]
    %s1370 = scalar_lea.vmem %s9, 1
    %v1371 = vld [vmem:[%s1370] ss:$2 sm:$0x3]
    %v1373 = vlaneseq
    %v1374 = vshrl.u32 %v1373, 7
    %v1375 = vsub.s32 0, %v1374
    %v1376 = vrot.slane %v1371, %v1375
    %v1377 = vlaneseq
    %v1378 = vshrl.u32 %v1377, 7
    %v1379 = vsub.s32 1, %v1378
    %v1380 = vrot.slane %v1371, %v1379
    %v1391 = vunpack.c.l.b16 %v1362
    %v1392 = vunpack.c.h.b16 %v1362
    %v1393 = vunpack.c.l.b16 %v1363
    %v1394 = vunpack.c.h.b16 %v1363
    %v1395 = vunpack.c.l.b16 %v1364
    %v1396 = vunpack.c.h.b16 %v1364
    %v1397 = vunpack.c.l.b16 %v1365
    %v1398 = vunpack.c.h.b16 %v1365
    %v1399 = vunpack.c.l.b16 %v1366
    %v1400 = vunpack.c.h.b16 %v1366
    %v1401 = vunpack.c.l.b16 %v1367
    %v1402 = vunpack.c.h.b16 %v1367
    %v1403 = vunpack.c.l.b16 %v1368
    %v1404 = vunpack.c.h.b16 %v1368
    %v1405 = vunpack.c.l.b16 %v1369
    %v1406 = vunpack.c.h.b16 %v1369
    %v1407 = vpack.c.b16 %v1393, %v1391
    %v1408 = vpack.c.b16 %v1394, %v1392
    %v1409 = vpack.c.b16 %v1397, %v1395
    %v1410 = vpack.c.b16 %v1398, %v1396
    %v1411 = vpack.c.b16 %v1401, %v1399
    %v1412 = vpack.c.b16 %v1402, %v1400
    %v1413 = vpack.c.b16 %v1405, %v1403
    %v1414 = vpack.c.b16 %v1406, %v1404
    %v1424 = vsel %vm248, %v1324, 0
    %1426 = vmatprep.subr.bf16.mxu0 %v1408
    %1427 = vmatpush1.bf16.msra.mxu0 %v1407
    %1428 = vmatprep.subr.bf16.mxu0 %v1410
    %1429 = vmatpush1.bf16.msra.mxu0 %v1409
    %1430 = vmatprep.subr.bf16.mxu0 %v1412
    %1431 = vmatpush1.bf16.msra.mxu0 %v1411
    %1432 = vmatprep.subr.bf16.mxu0 %v1414
    %1433 = vmatpush1.bf16.msra.mxu0 %v1413
    %1434 = vmatprep.subr.bf16.mxu0 0
    %1435 = vmatpush1.bf16.msra.mxu0 0
    %1436 = vmatprep.subr.bf16.mxu0 0
    %1437 = vmatpush1.bf16.msra.mxu0 0
    %1438 = vmatprep.subr.bf16.mxu0 0
    %1439 = vmatpush1.bf16.msra.mxu0 0
    %1440 = vmatprep.subr.bf16.mxu0 0
    %1441 = vmatpush1.bf16.msra.mxu0 0
    %1442 = vmatprep.subr.bf16.mxu0 0
    %1443 = vmatpush1.bf16.msra.mxu0 0
    %1444 = vmatprep.subr.bf16.mxu0 0
    %1445 = vmatpush1.bf16.msra.mxu0 0
    %1446 = vmatprep.subr.bf16.mxu0 0
    %1447 = vmatpush1.bf16.msra.mxu0 0
    %1448 = vmatprep.subr.bf16.mxu0 0
    %1449 = vmatpush1.bf16.msra.mxu0 0
    %1450 = vmatprep.subr.bf16.mxu0 0
    %1451 = vmatpush1.bf16.msra.mxu0 0
    %1452 = vmatprep.subr.bf16.mxu0 0
    %1453 = vmatpush1.bf16.msra.mxu0 0
    %1454 = vmatprep.subr.bf16.mxu0 0
    %1455 = vmatpush1.bf16.msra.mxu0 0
    %1456 = vmatprep.subr.bf16.mxu0 0
    %1457 = vmatpush1.bf16.msra.mxu0 0
    %1458 = vmatprep.mubr.bf16.mxu0 0
    %1459 = vmatmul.mubr.bf16.gmra.mrb[0].mxu0 %v1424
    %v1460 = vpop.f32.mrb[0].mxu0
    %v1461 = vadd.f32 %v1376, %v1460
    %v1462 = vpop.f32.mrb[0].mxu0
    %v1463 = vadd.f32 %v1380, %v1462
    %v1464 = vpop.f32.mrb[0].mxu0
    %v1465 = vadd.f32 %v1376, %v1464
    %v1466 = vpop.f32.mrb[0].mxu0
    %v1467 = vadd.f32 %v1380, %v1466
    %1468 = vdwg.mxu0
    %v1469 = vpack.c.bf16 %v1465, %v1461
    %v1471 = vsel %vm248, %v1469, 0
    %1473 = vmatprep.subr.bf16.mxu0 0
    %1474 = vmatpush1.bf16.msra.mxu0 %v1357
    %1475 = vmatprep.subr.bf16.mxu0 0
    %1476 = vmatpush1.bf16.msra.mxu0 %v1358
    %1477 = vmatprep.subr.bf16.mxu0 0
    %1478 = vmatpush1.bf16.msra.mxu0 %v1359
    %1479 = vmatprep.subr.bf16.mxu0 0
    %1480 = vmatpush1.bf16.msra.mxu0 %v1360
    %1481 = vmatprep.subr.bf16.mxu0 0
    %1482 = vmatpush1.bf16.msra.mxu0 0
    %1483 = vmatprep.subr.bf16.mxu0 0
    %1484 = vmatpush1.bf16.msra.mxu0 0
    %1485 = vmatprep.subr.bf16.mxu0 0
    %1486 = vmatpush1.bf16.msra.mxu0 0
    %1487 = vmatprep.subr.bf16.mxu0 0
    %1488 = vmatpush1.bf16.msra.mxu0 0
    %1489 = vmatprep.subr.bf16.mxu0 0
    %1490 = vmatpush1.bf16.msra.mxu0 0
    %1491 = vmatprep.subr.bf16.mxu0 0
    %1492 = vmatpush1.bf16.msra.mxu0 0
    %1493 = vmatprep.subr.bf16.mxu0 0
    %1494 = vmatpush1.bf16.msra.mxu0 0
    %1495 = vmatprep.subr.bf16.mxu0 0
    %1496 = vmatpush1.bf16.msra.mxu0 0
    %1497 = vmatprep.subr.bf16.mxu0 0
    %1498 = vmatpush1.bf16.msra.mxu0 0
    %1499 = vmatprep.subr.bf16.mxu0 0
    %1500 = vmatpush1.bf16.msra.mxu0 0
    %1501 = vmatprep.subr.bf16.mxu0 0
    %1502 = vmatpush1.bf16.msra.mxu0 0
    %1503 = vmatprep.subr.bf16.mxu0 0
    %1504 = vmatpush1.bf16.msra.mxu0 0
    %1505 = vmatprep.mubr.bf16.mxu0 0
    %1506 = vmatmul.mubr.bf16.gmra.mrb[0].mxu0 %v1471
    %v1507 = vpop.f32.mrb[0].mxu0
    %v1508 = vadd.f32 %v46, %v1507
    %v1509 = vpop.f32.mrb[0].mxu0
    %v1510 = vpop.f32.mrb[0].mxu0
    %v1511 = vadd.f32 %v47, %v1510
    %v1512 = vpop.f32.mrb[0].mxu0
    %1513 = vdwg.mxu0
    %v1514 = vsel %vm340, %v1508, -inf
    %1515 = vmax.xlane.f32.xlu0 %v1514
    %v1516 = vpop.xlane.xlu0 %1515
    %v1517 = vsel %vm340, %v1511, -inf
    %1518 = vmax.xlane.f32.xlu0 %v1517
    %v1519 = vpop.xlane.xlu0 %1518
    %v1520 = vsub.f32 %v1508, %v1516
    %v1521 = vsub.f32 %v1511, %v1519
    %v1522 = vmul.f32 %v1520, 1.442695
    %v1523 = vpow.pop %v1522
    %v1524 = vmul.f32 %v1521, 1.442695
    %v1525 = vpow.pop %v1524
    %v1526 = vsel %vm340, %v1523, 0.0
    %1527 = vadd.xlane.f32.xlu0 %v1526
    %v1528 = vpop.xlane.xlu0 %1527
    %v1529 = vsel %vm340, %v1525, 0.0
    %1530 = vadd.xlane.f32.xlu0 %v1529
    %v1531 = vpop.xlane.xlu0 %1530
    %v1532 = vrcp.pop %v1528
    %v1533 = vrcp.pop %v1531
    %v1534 = vmul.f32 %v1523, %v1532
    %v1535 = vmul.f32 %v1525, %v1533
    %v1536 = vpack.c.bf16 %v1535, %v1534
    %v1538 = vsel %vm340, %v1536, 0
    %1540 = vmatprep.subr.bf16.mxu0 0
    %1541 = vmatpush1.bf16.msra.mxu0 %v1324
    %1542 = vmatprep.subr.bf16.mxu0 0
    %1543 = vmatpush1.bf16.msra.mxu0 0
    %1544 = vmatprep.subr.bf16.mxu0 0
    %1545 = vmatpush1.bf16.msra.mxu0 0
    %1546 = vmatprep.subr.bf16.mxu0 0
    %1547 = vmatpush1.bf16.msra.mxu0 0
    %1548 = vmatprep.subr.bf16.mxu0 0
    %1549 = vmatpush1.bf16.msra.mxu0 0
    %1550 = vmatprep.subr.bf16.mxu0 0
    %1551 = vmatpush1.bf16.msra.mxu0 0
    %1552 = vmatprep.subr.bf16.mxu0 0
    %1553 = vmatpush1.bf16.msra.mxu0 0
    %1554 = vmatprep.subr.bf16.mxu0 0
    %1555 = vmatpush1.bf16.msra.mxu0 0
    %1556 = vmatprep.subr.bf16.mxu0 0
    %1557 = vmatpush1.bf16.msra.mxu0 0
    %1558 = vmatprep.subr.bf16.mxu0 0
    %1559 = vmatpush1.bf16.msra.mxu0 0
    %1560 = vmatprep.subr.bf16.mxu0 0
    %1561 = vmatpush1.bf16.msra.mxu0 0
    %1562 = vmatprep.subr.bf16.mxu0 0
    %1563 = vmatpush1.bf16.msra.mxu0 0
    %1564 = vmatprep.subr.bf16.mxu0 0
    %1565 = vmatpush1.bf16.msra.mxu0 0
    %1566 = vmatprep.subr.bf16.mxu0 0
    %1567 = vmatpush1.bf16.msra.mxu0 0
    %1568 = vmatprep.subr.bf16.mxu0 0
    %1569 = vmatpush1.bf16.msra.mxu0 0
    %1570 = vmatprep.subr.bf16.mxu0 0
    %1571 = vmatpush1.bf16.msra.mxu0 0
    %1572 = vmatprep.mubr.bf16.mxu0 0
    %1573 = vmatmul.mubr.bf16.gmra.mrb[0].mxu0 %v1538
    %v1574 = vpop.f32.mrb[0].mxu0
    %v1575 = vadd.f32 0.0, %v1574
    %v1576 = vpop.f32.mrb[0].mxu0
    %v1577 = vpop.f32.mrb[0].mxu0
    %v1578 = vadd.f32 0.0, %v1577
    %v1579 = vpop.f32.mrb[0].mxu0
    %1580 = vdwg.mxu0
    %1582 = vrot.lane.b32.xlu0 %v1469, 64
    %v1583 = vpop.permute.xlu0 %1582
    %v1585 = vsel %vm248, %v1583, 0
    %1587 = vmatprep.subr.bf16.mxu0 0
    %1588 = vmatpush1.bf16.msra.mxu0 %v1357
    %1589 = vmatprep.subr.bf16.mxu0 0
    %1590 = vmatpush1.bf16.msra.mxu0 %v1358
    %1591 = vmatprep.subr.bf16.mxu0 0
    %1592 = vmatpush1.bf16.msra.mxu0 %v1359
    %1593 = vmatprep.subr.bf16.mxu0 0
    %1594 = vmatpush1.bf16.msra.mxu0 %v1360
    %1595 = vmatprep.subr.bf16.mxu0 0
    %1596 = vmatpush1.bf16.msra.mxu0 0
    %1597 = vmatprep.subr.bf16.mxu0 0
    %1598 = vmatpush1.bf16.msra.mxu0 0
    %1599 = vmatprep.subr.bf16.mxu0 0
    %1600 = vmatpush1.bf16.msra.mxu0 0
    %1601 = vmatprep.subr.bf16.mxu0 0
    %1602 = vmatpush1.bf16.msra.mxu0 0
    %1603 = vmatprep.subr.bf16.mxu0 0
    %1604 = vmatpush1.bf16.msra.mxu0 0
    %1605 = vmatprep.subr.bf16.mxu0 0
    %1606 = vmatpush1.bf16.msra.mxu0 0
    %1607 = vmatprep.subr.bf16.mxu0 0
    %1608 = vmatpush1.bf16.msra.mxu0 0
    %1609 = vmatprep.subr.bf16.mxu0 0
    %1610 = vmatpush1.bf16.msra.mxu0 0
    %1611 = vmatprep.subr.bf16.mxu0 0
    %1612 = vmatpush1.bf16.msra.mxu0 0
    %1613 = vmatprep.subr.bf16.mxu0 0
    %1614 = vmatpush1.bf16.msra.mxu0 0
    %1615 = vmatprep.subr.bf16.mxu0 0
    %1616 = vmatpush1.bf16.msra.mxu0 0
    %1617 = vmatprep.subr.bf16.mxu0 0
    %1618 = vmatpush1.bf16.msra.mxu0 0
    %1619 = vmatprep.mubr.bf16.mxu0 0
    %1620 = vmatmul.mubr.bf16.gmra.mrb[0].mxu0 %v1585
    %v1621 = vpop.f32.mrb[0].mxu0
    %v1622 = vadd.f32 %v46, %v1621
    %v1623 = vpop.f32.mrb[0].mxu0
    %v1624 = vpop.f32.mrb[0].mxu0
    %v1625 = vadd.f32 %v47, %v1624
    %v1626 = vpop.f32.mrb[0].mxu0
    %1627 = vdwg.mxu0
    %v1628 = vsel %vm340, %v1622, -inf
    %1629 = vmax.xlane.f32.xlu0 %v1628
    %v1630 = vpop.xlane.xlu0 %1629
    %v1631 = vsel %vm340, %v1625, -inf
    %1632 = vmax.xlane.f32.xlu0 %v1631
    %v1633 = vpop.xlane.xlu0 %1632
    %v1634 = vsub.f32 %v1622, %v1630
    %v1635 = vsub.f32 %v1625, %v1633
    %v1636 = vmul.f32 %v1634, 1.442695
    %v1637 = vpow.pop %v1636
    %v1638 = vmul.f32 %v1635, 1.442695
    %v1639 = vpow.pop %v1638
    %v1640 = vsel %vm340, %v1637, 0.0
    %1641 = vadd.xlane.f32.xlu0 %v1640
    %v1642 = vpop.xlane.xlu0 %1641
    %v1643 = vsel %vm340, %v1639, 0.0
    %1644 = vadd.xlane.f32.xlu0 %v1643
    %v1645 = vpop.xlane.xlu0 %1644
    %v1646 = vrcp.pop %v1642
    %v1647 = vrcp.pop %v1645
    %v1648 = vmul.f32 %v1637, %v1646
    %v1649 = vmul.f32 %v1639, %v1647
    %v1650 = vpack.c.bf16 %v1649, %v1648
    %v1652 = vsel %vm340, %v1650, 0
    %1654 = vmatprep.subr.bf16.mxu0 0
    %1655 = vmatpush1.bf16.msra.mxu0 %v1324
    %1656 = vmatprep.subr.bf16.mxu0 0
    %1657 = vmatpush1.bf16.msra.mxu0 0
    %1658 = vmatprep.subr.bf16.mxu0 0
    %1659 = vmatpush1.bf16.msra.mxu0 0
    %1660 = vmatprep.subr.bf16.mxu0 0
    %1661 = vmatpush1.bf16.msra.mxu0 0
    %1662 = vmatprep.subr.bf16.mxu0 0
    %1663 = vmatpush1.bf16.msra.mxu0 0
    %1664 = vmatprep.subr.bf16.mxu0 0
    %1665 = vmatpush1.bf16.msra.mxu0 0
    %1666 = vmatprep.subr.bf16.mxu0 0
    %1667 = vmatpush1.bf16.msra.mxu0 0
    %1668 = vmatprep.subr.bf16.mxu0 0
    %1669 = vmatpush1.bf16.msra.mxu0 0
    %1670 = vmatprep.subr.bf16.mxu0 0
    %1671 = vmatpush1.bf16.msra.mxu0 0
    %1672 = vmatprep.subr.bf16.mxu0 0
    %1673 = vmatpush1.bf16.msra.mxu0 0
    %1674 = vmatprep.subr.bf16.mxu0 0
    %1675 = vmatpush1.bf16.msra.mxu0 0
    %1676 = vmatprep.subr.bf16.mxu0 0
    %1677 = vmatpush1.bf16.msra.mxu0 0
    %1678 = vmatprep.subr.bf16.mxu0 0
    %1679 = vmatpush1.bf16.msra.mxu0 0
    %1680 = vmatprep.subr.bf16.mxu0 0
    %1681 = vmatpush1.bf16.msra.mxu0 0
    %1682 = vmatprep.subr.bf16.mxu0 0
    %1683 = vmatpush1.bf16.msra.mxu0 0
    %1684 = vmatprep.subr.bf16.mxu0 0
    %1685 = vmatpush1.bf16.msra.mxu0 0
    %1686 = vmatprep.mubr.bf16.mxu0 0
    %1687 = vmatmul.mubr.bf16.gmra.mrb[0].mxu0 %v1652
    %v1688 = vpop.f32.mrb[0].mxu0
    %v1689 = vadd.f32 0.0, %v1688
    %v1690 = vpop.f32.mrb[0].mxu0
    %v1691 = vpop.f32.mrb[0].mxu0
    %v1692 = vadd.f32 0.0, %v1691
    %v1693 = vpop.f32.mrb[0].mxu0
    %1694 = vdwg.mxu0
    %v1695 = vpack.c.bf16 %v1467, %v1463
    %v1697 = vsel %vm248, %v1695, 0
    %1699 = vmatprep.subr.bf16.mxu0 0
    %1700 = vmatpush1.bf16.msra.mxu0 %v1357
    %1701 = vmatprep.subr.bf16.mxu0 0
    %1702 = vmatpush1.bf16.msra.mxu0 %v1358
    %1703 = vmatprep.subr.bf16.mxu0 0
    %1704 = vmatpush1.bf16.msra.mxu0 %v1359
    %1705 = vmatprep.subr.bf16.mxu0 0
    %1706 = vmatpush1.bf16.msra.mxu0 %v1360
    %1707 = vmatprep.subr.bf16.mxu0 0
    %1708 = vmatpush1.bf16.msra.mxu0 0
    %1709 = vmatprep.subr.bf16.mxu0 0
    %1710 = vmatpush1.bf16.msra.mxu0 0
    %1711 = vmatprep.subr.bf16.mxu0 0
    %1712 = vmatpush1.bf16.msra.mxu0 0
    %1713 = vmatprep.subr.bf16.mxu0 0
    %1714 = vmatpush1.bf16.msra.mxu0 0
    %1715 = vmatprep.subr.bf16.mxu0 0
    %1716 = vmatpush1.bf16.msra.mxu0 0
    %1717 = vmatprep.subr.bf16.mxu0 0
    %1718 = vmatpush1.bf16.msra.mxu0 0
    %1719 = vmatprep.subr.bf16.mxu0 0
    %1720 = vmatpush1.bf16.msra.mxu0 0
    %1721 = vmatprep.subr.bf16.mxu0 0
    %1722 = vmatpush1.bf16.msra.mxu0 0
    %1723 = vmatprep.subr.bf16.mxu0 0
    %1724 = vmatpush1.bf16.msra.mxu0 0
    %1725 = vmatprep.subr.bf16.mxu0 0
    %1726 = vmatpush1.bf16.msra.mxu0 0
    %1727 = vmatprep.subr.bf16.mxu0 0
    %1728 = vmatpush1.bf16.msra.mxu0 0
    %1729 = vmatprep.subr.bf16.mxu0 0
    %1730 = vmatpush1.bf16.msra.mxu0 0
    %1731 = vmatprep.mubr.bf16.mxu0 0
    %1732 = vmatmul.mubr.bf16.gmra.mrb[0].mxu0 %v1697
    %v1733 = vpop.f32.mrb[0].mxu0
    %v1734 = vadd.f32 %v46, %v1733
    %v1735 = vpop.f32.mrb[0].mxu0
    %v1736 = vpop.f32.mrb[0].mxu0
    %v1737 = vadd.f32 %v47, %v1736
    %v1738 = vpop.f32.mrb[0].mxu0
    %1739 = vdwg.mxu0
    %v1740 = vsel %vm340, %v1734, -inf
    %1741 = vmax.xlane.f32.xlu0 %v1740
    %v1742 = vpop.xlane.xlu0 %1741
    %v1743 = vsel %vm340, %v1737, -inf
    %1744 = vmax.xlane.f32.xlu0 %v1743
    %v1745 = vpop.xlane.xlu0 %1744
    %v1746 = vsub.f32 %v1734, %v1742
    %v1747 = vsub.f32 %v1737, %v1745
    %v1748 = vmul.f32 %v1746, 1.442695
    %v1749 = vpow.pop %v1748
    %v1750 = vmul.f32 %v1747, 1.442695
    %v1751 = vpow.pop %v1750
    %v1752 = vsel %vm340, %v1749, 0.0
    %1753 = vadd.xlane.f32.xlu0 %v1752
    %v1754 = vpop.xlane.xlu0 %1753
    %v1755 = vsel %vm340, %v1751, 0.0
    %1756 = vadd.xlane.f32.xlu0 %v1755
    %v1757 = vpop.xlane.xlu0 %1756
    %v1758 = vrcp.pop %v1754
    %v1759 = vrcp.pop %v1757
    %v1760 = vmul.f32 %v1749, %v1758
    %v1761 = vmul.f32 %v1751, %v1759
    %v1762 = vpack.c.bf16 %v1761, %v1760
    %v1764 = vsel %vm340, %v1762, 0
    %1766 = vmatprep.subr.bf16.mxu0 0
    %1767 = vmatpush1.bf16.msra.mxu0 %v1324
    %1768 = vmatprep.subr.bf16.mxu0 0
    %1769 = vmatpush1.bf16.msra.mxu0 0
    %1770 = vmatprep.subr.bf16.mxu0 0
    %1771 = vmatpush1.bf16.msra.mxu0 0
    %1772 = vmatprep.subr.bf16.mxu0 0
    %1773 = vmatpush1.bf16.msra.mxu0 0
    %1774 = vmatprep.subr.bf16.mxu0 0
    %1775 = vmatpush1.bf16.msra.mxu0 0
    %1776 = vmatprep.subr.bf16.mxu0 0
    %1777 = vmatpush1.bf16.msra.mxu0 0
    %1778 = vmatprep.subr.bf16.mxu0 0
    %1779 = vmatpush1.bf16.msra.mxu0 0
    %1780 = vmatprep.subr.bf16.mxu0 0
    %1781 = vmatpush1.bf16.msra.mxu0 0
    %1782 = vmatprep.subr.bf16.mxu0 0
    %1783 = vmatpush1.bf16.msra.mxu0 0
    %1784 = vmatprep.subr.bf16.mxu0 0
    %1785 = vmatpush1.bf16.msra.mxu0 0
    %1786 = vmatprep.subr.bf16.mxu0 0
    %1787 = vmatpush1.bf16.msra.mxu0 0
    %1788 = vmatprep.subr.bf16.mxu0 0
    %1789 = vmatpush1.bf16.msra.mxu0 0
    %1790 = vmatprep.subr.bf16.mxu0 0
    %1791 = vmatpush1.bf16.msra.mxu0 0
    %1792 = vmatprep.subr.bf16.mxu0 0
    %1793 = vmatpush1.bf16.msra.mxu0 0
    %1794 = vmatprep.subr.bf16.mxu0 0
    %1795 = vmatpush1.bf16.msra.mxu0 0
    %1796 = vmatprep.subr.bf16.mxu0 0
    %1797 = vmatpush1.bf16.msra.mxu0 0
    %1798 = vmatprep.mubr.bf16.mxu0 0
    %1799 = vmatmul.mubr.bf16.gmra.mrb[0].mxu0 %v1764
    %v1800 = vpop.f32.mrb[0].mxu0
    %v1801 = vadd.f32 0.0, %v1800
    %v1802 = vpop.f32.mrb[0].mxu0
    %v1803 = vpop.f32.mrb[0].mxu0
    %v1804 = vadd.f32 0.0, %v1803
    %v1805 = vpop.f32.mrb[0].mxu0
    %1806 = vdwg.mxu0
    %1808 = vrot.lane.b32.xlu0 %v1695, 64
    %v1809 = vpop.permute.xlu0 %1808
    %v1811 = vsel %vm248, %v1809, 0
    %1813 = vmatprep.subr.bf16.mxu0 0
    %1814 = vmatpush1.bf16.msra.mxu0 %v1357
    %1815 = vmatprep.subr.bf16.mxu0 0
    %1816 = vmatpush1.bf16.msra.mxu0 %v1358
    %1817 = vmatprep.subr.bf16.mxu0 0
    %1818 = vmatpush1.bf16.msra.mxu0 %v1359
    %1819 = vmatprep.subr.bf16.mxu0 0
    %1820 = vmatpush1.bf16.msra.mxu0 %v1360
    %1821 = vmatprep.subr.bf16.mxu0 0
    %1822 = vmatpush1.bf16.msra.mxu0 0
    %1823 = vmatprep.subr.bf16.mxu0 0
    %1824 = vmatpush1.bf16.msra.mxu0 0
    %1825 = vmatprep.subr.bf16.mxu0 0
    %1826 = vmatpush1.bf16.msra.mxu0 0
    %1827 = vmatprep.subr.bf16.mxu0 0
    %1828 = vmatpush1.bf16.msra.mxu0 0
    %1829 = vmatprep.subr.bf16.mxu0 0
    %1830 = vmatpush1.bf16.msra.mxu0 0
    %1831 = vmatprep.subr.bf16.mxu0 0
    %1832 = vmatpush1.bf16.msra.mxu0 0
    %1833 = vmatprep.subr.bf16.mxu0 0
    %1834 = vmatpush1.bf16.msra.mxu0 0
    %1835 = vmatprep.subr.bf16.mxu0 0
    %1836 = vmatpush1.bf16.msra.mxu0 0
    %1837 = vmatprep.subr.bf16.mxu0 0
    %1838 = vmatpush1.bf16.msra.mxu0 0
    %1839 = vmatprep.subr.bf16.mxu0 0
    %1840 = vmatpush1.bf16.msra.mxu0 0
    %1841 = vmatprep.subr.bf16.mxu0 0
    %1842 = vmatpush1.bf16.msra.mxu0 0
    %1843 = vmatprep.subr.bf16.mxu0 0
    %1844 = vmatpush1.bf16.msra.mxu0 0
    %1845 = vmatprep.mubr.bf16.mxu0 0
    %1846 = vmatmul.mubr.bf16.gmra.mrb[0].mxu0 %v1811
    %v1847 = vpop.f32.mrb[0].mxu0
    %v1848 = vadd.f32 %v46, %v1847
    %v1849 = vpop.f32.mrb[0].mxu0
    %v1850 = vpop.f32.mrb[0].mxu0
    %v1851 = vadd.f32 %v47, %v1850
    %v1852 = vpop.f32.mrb[0].mxu0
    %1853 = vdwg.mxu0
    %v1854 = vsel %vm340, %v1848, -inf
    %1855 = vmax.xlane.f32.xlu0 %v1854
    %v1856 = vpop.xlane.xlu0 %1855
    %v1857 = vsel %vm340, %v1851, -inf
    %1858 = vmax.xlane.f32.xlu0 %v1857
    %v1859 = vpop.xlane.xlu0 %1858
    %v1860 = vsub.f32 %v1848, %v1856
    %v1861 = vsub.f32 %v1851, %v1859
    %v1862 = vmul.f32 %v1860, 1.442695
    %v1863 = vpow.pop %v1862
    %v1864 = vmul.f32 %v1861, 1.442695
    %v1865 = vpow.pop %v1864
    %v1866 = vsel %vm340, %v1863, 0.0
    %1867 = vadd.xlane.f32.xlu0 %v1866
    %v1868 = vpop.xlane.xlu0 %1867
    %v1869 = vsel %vm340, %v1865, 0.0
    %1870 = vadd.xlane.f32.xlu0 %v1869
    %v1871 = vpop.xlane.xlu0 %1870
    %v1872 = vrcp.pop %v1868
    %v1873 = vrcp.pop %v1871
    %v1874 = vmul.f32 %v1863, %v1872
    %v1875 = vmul.f32 %v1865, %v1873
    %v1876 = vpack.c.bf16 %v1875, %v1874
    %v1878 = vsel %vm340, %v1876, 0
    %1880 = vmatprep.subr.bf16.mxu0 0
    %1881 = vmatpush1.bf16.msra.mxu0 %v1324
    %1882 = vmatprep.subr.bf16.mxu0 0
    %1883 = vmatpush1.bf16.msra.mxu0 0
    %1884 = vmatprep.subr.bf16.mxu0 0
    %1885 = vmatpush1.bf16.msra.mxu0 0
    %1886 = vmatprep.subr.bf16.mxu0 0
    %1887 = vmatpush1.bf16.msra.mxu0 0
    %1888 = vmatprep.subr.bf16.mxu0 0
    %1889 = vmatpush1.bf16.msra.mxu0 0
    %1890 = vmatprep.subr.bf16.mxu0 0
    %1891 = vmatpush1.bf16.msra.mxu0 0
    %1892 = vmatprep.subr.bf16.mxu0 0
    %1893 = vmatpush1.bf16.msra.mxu0 0
    %1894 = vmatprep.subr.bf16.mxu0 0
    %1895 = vmatpush1.bf16.msra.mxu0 0
    %1896 = vmatprep.subr.bf16.mxu0 0
    %1897 = vmatpush1.bf16.msra.mxu0 0
    %1898 = vmatprep.subr.bf16.mxu0 0
    %1899 = vmatpush1.bf16.msra.mxu0 0
    %1900 = vmatprep.subr.bf16.mxu0 0
    %1901 = vmatpush1.bf16.msra.mxu0 0
    %1902 = vmatprep.subr.bf16.mxu0 0
    %1903 = vmatpush1.bf16.msra.mxu0 0
    %1904 = vmatprep.subr.bf16.mxu0 0
    %1905 = vmatpush1.bf16.msra.mxu0 0
    %1906 = vmatprep.subr.bf16.mxu0 0
    %1907 = vmatpush1.bf16.msra.mxu0 0
    %1908 = vmatprep.subr.bf16.mxu0 0
    %1909 = vmatpush1.bf16.msra.mxu0 0
    %1910 = vmatprep.subr.bf16.mxu0 0
    %1911 = vmatpush1.bf16.msra.mxu0 0
    %1912 = vmatprep.mubr.bf16.mxu0 0
    %1913 = vmatmul.mubr.bf16.gmra.mrb[0].mxu0 %v1878
    %v1914 = vpop.f32.mrb[0].mxu0
    %v1915 = vadd.f32 0.0, %v1914
    %v1916 = vpop.f32.mrb[0].mxu0
    %v1917 = vpop.f32.mrb[0].mxu0
    %v1918 = vadd.f32 0.0, %v1917
    %v1919 = vpop.f32.mrb[0].mxu0
    %1920 = vdwg.mxu0
    %1923 = vrot.lane.b32.xlu0 %v1689, 64
    %v1924 = vpop.permute.xlu0 %1923
    %1925 = vrot.lane.b32.xlu0 %v1692, 64
    %v1926 = vpop.permute.xlu0 %1925
    %1931 = vrot.lane.b32.xlu0 %v1915, 64
    %v1932 = vpop.permute.xlu0 %1931
    %1933 = vrot.lane.b32.xlu0 %v1918, 64
    %v1934 = vpop.permute.xlu0 %1933
    %v1937 = vsel %vm248, %v1575, %v1924
    %v1938 = vsel %vm248, %v1578, %v1926
    %v1939 = vsel %vm248, %v1801, %v1932
    %v1940 = vsel %vm248, %v1804, %v1934
    %v1941 = vpack.c.bf16 %v1938, %v1937
    %v1942 = vpack.c.bf16 %v1940, %v1939
    %s1943 = scalar_lea.vmem %s6, 128
    %v1944 = vld [vmem:[%s1943] sm:$0xf]
    %v1945 = vld [vmem:[%s1943 + $0x4] sm:$0xf]
    %v1946 = vld [vmem:[%s1943 + $0x8] sm:$0xf]
    %v1947 = vld [vmem:[%s1943 + $0xc] sm:$0xf]
    %v1948 = vld [vmem:[%s1943 + $0x10] sm:$0xf]
    %v1949 = vld [vmem:[%s1943 + $0x14] sm:$0xf]
    %v1950 = vld [vmem:[%s1943 + $0x18] sm:$0xf]
    %v1951 = vld [vmem:[%s1943 + $0x1c] sm:$0xf]
    %v1952 = vld [vmem:[%s1943 + $0x20] sm:$0xf]
    %v1953 = vld [vmem:[%s1943 + $0x24] sm:$0xf]
    %v1954 = vld [vmem:[%s1943 + $0x28] sm:$0xf]
    %v1955 = vld [vmem:[%s1943 + $0x2c] sm:$0xf]
    %v1956 = vld [vmem:[%s1943 + $0x30] sm:$0xf]
    %v1957 = vld [vmem:[%s1943 + $0x34] sm:$0xf]
    %v1958 = vld [vmem:[%s1943 + $0x38] sm:$0xf]
    %v1959 = vld [vmem:[%s1943 + $0x3c] sm:$0xf]
    %v1960 = vld [vmem:[%s1943 + $0x40] sm:$0xf]
    %v1961 = vld [vmem:[%s1943 + $0x44] sm:$0xf]
    %v1962 = vld [vmem:[%s1943 + $0x48] sm:$0xf]
    %v1963 = vld [vmem:[%s1943 + $0x4c] sm:$0xf]
    %v1964 = vld [vmem:[%s1943 + $0x50] sm:$0xf]
    %v1965 = vld [vmem:[%s1943 + $0x54] sm:$0xf]
    %v1966 = vld [vmem:[%s1943 + $0x58] sm:$0xf]
    %v1967 = vld [vmem:[%s1943 + $0x5c] sm:$0xf]
    %v1968 = vld [vmem:[%s1943 + $0x60] sm:$0xf]
    %v1969 = vld [vmem:[%s1943 + $0x64] sm:$0xf]
    %v1970 = vld [vmem:[%s1943 + $0x68] sm:$0xf]
    %v1971 = vld [vmem:[%s1943 + $0x6c] sm:$0xf]
    %v1972 = vld [vmem:[%s1943 + $0x70] sm:$0xf]
    %v1973 = vld [vmem:[%s1943 + $0x74] sm:$0xf]
    %v1974 = vld [vmem:[%s1943 + $0x78] sm:$0xf]
    %v1975 = vld [vmem:[%s1943 + $0x7c] sm:$0xf]
    %v1976 = vld [vmem:[%s11 + $0x6] sm:$0x1]
    %v1977 = vlaneseq
    %v1978 = vshrl.u32 %v1977, 7
    %v1979 = vsub.s32 0, %v1978
    %v1980 = vrot.slane %v1976, %v1979
    %v2013 = vunpack.c.l.b16 %v1944
    %v2014 = vunpack.c.l.b16 %v1945
    %v2015 = vunpack.c.l.b16 %v1946
    %v2016 = vunpack.c.l.b16 %v1947
    %v2017 = vunpack.c.l.b16 %v1948
    %v2018 = vunpack.c.l.b16 %v1949
    %v2019 = vunpack.c.l.b16 %v1950
    %v2020 = vunpack.c.l.b16 %v1951
    %v2021 = vunpack.c.l.b16 %v1952
    %v2022 = vunpack.c.l.b16 %v1953
    %v2023 = vunpack.c.l.b16 %v1954
    %v2024 = vunpack.c.l.b16 %v1955
    %v2025 = vunpack.c.l.b16 %v1956
    %v2026 = vunpack.c.l.b16 %v1957
    %v2027 = vunpack.c.l.b16 %v1958
    %v2028 = vunpack.c.l.b16 %v1959
    %v2029 = vunpack.c.l.b16 %v1960
    %v2030 = vunpack.c.l.b16 %v1961
    %v2031 = vunpack.c.l.b16 %v1962
    %v2032 = vunpack.c.l.b16 %v1963
    %v2033 = vunpack.c.l.b16 %v1964
    %v2034 = vunpack.c.l.b16 %v1965
    %v2035 = vunpack.c.l.b16 %v1966
    %v2036 = vunpack.c.l.b16 %v1967
    %v2037 = vunpack.c.l.b16 %v1968
    %v2038 = vunpack.c.l.b16 %v1969
    %v2039 = vunpack.c.l.b16 %v1970
    %v2040 = vunpack.c.l.b16 %v1971
    %v2041 = vunpack.c.l.b16 %v1972
    %v2042 = vunpack.c.l.b16 %v1973
    %v2043 = vunpack.c.l.b16 %v1974
    %v2044 = vunpack.c.l.b16 %v1975
    %v2045 = vpack.c.b16 %v2014, %v2013
    %v2046 = vpack.c.b16 %v2016, %v2015
    %v2047 = vpack.c.b16 %v2018, %v2017
    %v2048 = vpack.c.b16 %v2020, %v2019
    %v2049 = vpack.c.b16 %v2022, %v2021
    %v2050 = vpack.c.b16 %v2024, %v2023
    %v2051 = vpack.c.b16 %v2026, %v2025
    %v2052 = vpack.c.b16 %v2028, %v2027
    %v2053 = vpack.c.b16 %v2030, %v2029
    %v2054 = vpack.c.b16 %v2032, %v2031
    %v2055 = vpack.c.b16 %v2034, %v2033
    %v2056 = vpack.c.b16 %v2036, %v2035
    %v2057 = vpack.c.b16 %v2038, %v2037
    %v2058 = vpack.c.b16 %v2040, %v2039
    %v2059 = vpack.c.b16 %v2042, %v2041
    %v2060 = vpack.c.b16 %v2044, %v2043
    %2077 = vmatprep.subr.bf16.mxu0 0
    %2078 = vmatpush1.bf16.msra.mxu0 %v2045
    %2079 = vmatprep.subr.bf16.mxu0 0
    %2080 = vmatpush1.bf16.msra.mxu0 %v2046
    %2081 = vmatprep.subr.bf16.mxu0 0
    %2082 = vmatpush1.bf16.msra.mxu0 %v2047
    %2083 = vmatprep.subr.bf16.mxu0 0
    %2084 = vmatpush1.bf16.msra.mxu0 %v2048
    %2085 = vmatprep.subr.bf16.mxu0 0
    %2086 = vmatpush1.bf16.msra.mxu0 %v2049
    %2087 = vmatprep.subr.bf16.mxu0 0
    %2088 = vmatpush1.bf16.msra.mxu0 %v2050
    %2089 = vmatprep.subr.bf16.mxu0 0
    %2090 = vmatpush1.bf16.msra.mxu0 %v2051
    %2091 = vmatprep.subr.bf16.mxu0 0
    %2092 = vmatpush1.bf16.msra.mxu0 %v2052
    %2093 = vmatprep.subr.bf16.mxu0 0
    %2094 = vmatpush1.bf16.msra.mxu0 %v2053
    %2095 = vmatprep.subr.bf16.mxu0 0
    %2096 = vmatpush1.bf16.msra.mxu0 %v2054
    %2097 = vmatprep.subr.bf16.mxu0 0
    %2098 = vmatpush1.bf16.msra.mxu0 %v2055
    %2099 = vmatprep.subr.bf16.mxu0 0
    %2100 = vmatpush1.bf16.msra.mxu0 %v2056
    %2101 = vmatprep.subr.bf16.mxu0 0
    %2102 = vmatpush1.bf16.msra.mxu0 %v2057
    %2103 = vmatprep.subr.bf16.mxu0 0
    %2104 = vmatpush1.bf16.msra.mxu0 %v2058
    %2105 = vmatprep.subr.bf16.mxu0 0
    %2106 = vmatpush1.bf16.msra.mxu0 %v2059
    %2107 = vmatprep.subr.bf16.mxu0 0
    %2108 = vmatpush1.bf16.msra.mxu0 %v2060
    %2109 = vmatprep.mubr.bf16.mxu0 %v1942
    %2110 = vmatmul.mubr.bf16.gmra.mrb[0].mxu0 %v1941
    %v2111 = vpop.f32.mrb[0].mxu0
    %v2112 = vadd.f32 %v1980, %v2111
    %v2113 = vpop.f32.mrb[0].mxu0
    %v2114 = vpop.f32.mrb[0].mxu0
    %v2115 = vadd.f32 %v1980, %v2114
    %v2116 = vpop.f32.mrb[0].mxu0
    %2117 = vdwg.mxu0
    %v2118 = vadd.f32 %v1322, %v2112
    %v2119 = vadd.f32 %v1323, %v2115
    %v2120 = vld [vmem:[%s11 + $0x7] sm:$0x1]
    %v2121 = vld [vmem:[%s11 + $0x8] sm:$0x1]
    %v2122 = vsel %vm248, %v2118, 0.0
    %2123 = vadd.xlane.f32.xlu0 %v2122
    %v2124 = vpop.xlane.xlu0 %2123
    %v2125 = vsel %vm248, %v2119, 0.0
    %2126 = vadd.xlane.f32.xlu0 %v2125
    %v2127 = vpop.xlane.xlu0 %2126
    %v2128 = vmul.f32 %v2124, %v954
    %v2129 = vmul.f32 %v2127, %v954
    %v2130 = vmul.f32 %v2118, %v2118
    %v2131 = vmul.f32 %v2119, %v2119
    %v2132 = vsel %vm248, %v2130, 0.0
    %2133 = vadd.xlane.f32.xlu0 %v2132
    %v2134 = vpop.xlane.xlu0 %2133
    %v2135 = vsel %vm248, %v2131, 0.0
    %2136 = vadd.xlane.f32.xlu0 %v2135
    %v2137 = vpop.xlane.xlu0 %2136
    %v2138 = vmul.f32 %v2134, %v954
    %v2139 = vmul.f32 %v2137, %v954
    %v2140 = vsub.f32 %v2118, %v2128
    %v2141 = vsub.f32 %v2119, %v2129
    %v2142 = vmul.f32 %v2128, %v2128
    %v2143 = vmul.f32 %v2129, %v2129
    %v2144 = vsub.f32 %v2138, %v2142
    %v2145 = vsub.f32 %v2139, %v2143
    %v2146 = vadd.f32 %v2144, 1e-05
    %v2147 = vadd.f32 %v2145, 1e-05
    %v2148 = vrsqrt.pop %v2146
    %v2149 = vrsqrt.pop %v2147
    %v2150 = vmul.f32 %v2140, %v2148
    %v2151 = vmul.f32 %v2141, %v2149
    %v2152 = vlaneseq
    %v2153 = vshrl.u32 %v2152, 7
    %v2154 = vsub.s32 0, %v2153
    %v2155 = vrot.slane %v2120, %v2154
    %v2156 = vmul.f32 %v2150, %v2155
    %v2157 = vmul.f32 %v2151, %v2155
    %v2158 = vlaneseq
    %v2159 = vshrl.u32 %v2158, 7
    %v2160 = vsub.s32 0, %v2159
    %v2161 = vrot.slane %v2121, %v2160
    %v2162 = vadd.f32 %v2156, %v2161
    %v2163 = vadd.f32 %v2157, %v2161
    %v2164 = vpack.c.bf16 %v2163, %v2162
    %s2165 = scalar_lea.vmem %s7, 64
    %v2166 = vld [vmem:[%s2165] sm:$0xff]
    %v2167 = vld [vmem:[%s2165 + $0x8] sm:$0xff]
    %v2168 = vld [vmem:[%s2165 + $0x10] sm:$0xff]
    %v2169 = vld [vmem:[%s2165 + $0x18] sm:$0xff]
    %v2170 = vld [vmem:[%s2165 + $0x20] sm:$0xff]
    %v2171 = vld [vmem:[%s2165 + $0x28] sm:$0xff]
    %v2172 = vld [vmem:[%s2165 + $0x30] sm:$0xff]
    %v2173 = vld [vmem:[%s2165 + $0x38] sm:$0xff]
    %s2174 = scalar_lea.vmem %s10, 1
    %v2175 = vld [vmem:[%s2174] ss:$2 sm:$0x3]
    %v2177 = vlaneseq
    %v2178 = vshrl.u32 %v2177, 7
    %v2179 = vsub.s32 0, %v2178
    %v2180 = vrot.slane %v2175, %v2179
    %v2181 = vlaneseq
    %v2182 = vshrl.u32 %v2181, 7
    %v2183 = vsub.s32 1, %v2182
    %v2184 = vrot.slane %v2175, %v2183
    %v2195 = vunpack.c.l.b16 %v2166
    %v2196 = vunpack.c.h.b16 %v2166
    %v2197 = vunpack.c.l.b16 %v2167
    %v2198 = vunpack.c.h.b16 %v2167
    %v2199 = vunpack.c.l.b16 %v2168
    %v2200 = vunpack.c.h.b16 %v2168
    %v2201 = vunpack.c.l.b16 %v2169
    %v2202 = vunpack.c.h.b16 %v2169
    %v2203 = vunpack.c.l.b16 %v2170
    %v2204 = vunpack.c.h.b16 %v2170
    %v2205 = vunpack.c.l.b16 %v2171
    %v2206 = vunpack.c.h.b16 %v2171
    %v2207 = vunpack.c.l.b16 %v2172
    %v2208 = vunpack.c.h.b16 %v2172
    %v2209 = vunpack.c.l.b16 %v2173
    %v2210 = vunpack.c.h.b16 %v2173
    %v2211 = vpack.c.b16 %v2197, %v2195
    %v2212 = vpack.c.b16 %v2198, %v2196
    %v2213 = vpack.c.b16 %v2201, %v2199
    %v2214 = vpack.c.b16 %v2202, %v2200
    %v2215 = vpack.c.b16 %v2205, %v2203
    %v2216 = vpack.c.b16 %v2206, %v2204
    %v2217 = vpack.c.b16 %v2209, %v2207
    %v2218 = vpack.c.b16 %v2210, %v2208
    %v2228 = vsel %vm248, %v2164, 0
    %2230 = vmatprep.subr.bf16.mxu0 %v2212
    %2231 = vmatpush1.bf16.msra.mxu0 %v2211
    %2232 = vmatprep.subr.bf16.mxu0 %v2214
    %2233 = vmatpush1.bf16.msra.mxu0 %v2213
    %2234 = vmatprep.subr.bf16.mxu0 %v2216
    %2235 = vmatpush1.bf16.msra.mxu0 %v2215
    %2236 = vmatprep.subr.bf16.mxu0 %v2218
    %2237 = vmatpush1.bf16.msra.mxu0 %v2217
    %2238 = vmatprep.subr.bf16.mxu0 0
    %2239 = vmatpush1.bf16.msra.mxu0 0
    %2240 = vmatprep.subr.bf16.mxu0 0
    %2241 = vmatpush1.bf16.msra.mxu0 0
    %2242 = vmatprep.subr.bf16.mxu0 0
    %2243 = vmatpush1.bf16.msra.mxu0 0
    %2244 = vmatprep.subr.bf16.mxu0 0
    %2245 = vmatpush1.bf16.msra.mxu0 0
    %2246 = vmatprep.subr.bf16.mxu0 0
    %2247 = vmatpush1.bf16.msra.mxu0 0
    %2248 = vmatprep.subr.bf16.mxu0 0
    %2249 = vmatpush1.bf16.msra.mxu0 0
    %2250 = vmatprep.subr.bf16.mxu0 0
    %2251 = vmatpush1.bf16.msra.mxu0 0
    %2252 = vmatprep.subr.bf16.mxu0 0
    %2253 = vmatpush1.bf16.msra.mxu0 0
    %2254 = vmatprep.subr.bf16.mxu0 0
    %2255 = vmatpush1.bf16.msra.mxu0 0
    %2256 = vmatprep.subr.bf16.mxu0 0
    %2257 = vmatpush1.bf16.msra.mxu0 0
    %2258 = vmatprep.subr.bf16.mxu0 0
    %2259 = vmatpush1.bf16.msra.mxu0 0
    %2260 = vmatprep.subr.bf16.mxu0 0
    %2261 = vmatpush1.bf16.msra.mxu0 0
    %2262 = vmatprep.mubr.bf16.mxu0 0
    %2263 = vmatmul.mubr.bf16.gmra.mrb[0].mxu0 %v2228
    %v2264 = vpop.f32.mrb[0].mxu0
    %v2265 = vadd.f32 %v2180, %v2264
    %v2266 = vpop.f32.mrb[0].mxu0
    %v2267 = vadd.f32 %v2184, %v2266
    %v2268 = vpop.f32.mrb[0].mxu0
    %v2269 = vadd.f32 %v2180, %v2268
    %v2270 = vpop.f32.mrb[0].mxu0
    %v2271 = vadd.f32 %v2184, %v2270
    %2272 = vdwg.mxu0
    %v2273 = vmax.f32 %v2265, 0.0
    %v2274 = vmax.f32 %v2267, 0.0
    %v2275 = vmax.f32 %v2269, 0.0
    %v2276 = vmax.f32 %v2271, 0.0
    %v2277 = vpack.c.bf16 %v2275, %v2273
    %v2278 = vpack.c.bf16 %v2276, %v2274
    %s2279 = scalar_lea.vmem %s8, 128
    %v2280 = vld [vmem:[%s2279] sm:$0xf]
    %v2281 = vld [vmem:[%s2279 + $0x4] sm:$0xf]
    %v2282 = vld [vmem:[%s2279 + $0x8] sm:$0xf]
    %v2283 = vld [vmem:[%s2279 + $0xc] sm:$0xf]
    %v2284 = vld [vmem:[%s2279 + $0x10] sm:$0xf]
    %v2285 = vld [vmem:[%s2279 + $0x14] sm:$0xf]
    %v2286 = vld [vmem:[%s2279 + $0x18] sm:$0xf]
    %v2287 = vld [vmem:[%s2279 + $0x1c] sm:$0xf]
    %v2288 = vld [vmem:[%s2279 + $0x20] sm:$0xf]
    %v2289 = vld [vmem:[%s2279 + $0x24] sm:$0xf]
    %v2290 = vld [vmem:[%s2279 + $0x28] sm:$0xf]
    %v2291 = vld [vmem:[%s2279 + $0x2c] sm:$0xf]
    %v2292 = vld [vmem:[%s2279 + $0x30] sm:$0xf]
    %v2293 = vld [vmem:[%s2279 + $0x34] sm:$0xf]
    %v2294 = vld [vmem:[%s2279 + $0x38] sm:$0xf]
    %v2295 = vld [vmem:[%s2279 + $0x3c] sm:$0xf]
    %v2296 = vld [vmem:[%s2279 + $0x40] sm:$0xf]
    %v2297 = vld [vmem:[%s2279 + $0x44] sm:$0xf]
    %v2298 = vld [vmem:[%s2279 + $0x48] sm:$0xf]
    %v2299 = vld [vmem:[%s2279 + $0x4c] sm:$0xf]
    %v2300 = vld [vmem:[%s2279 + $0x50] sm:$0xf]
    %v2301 = vld [vmem:[%s2279 + $0x54] sm:$0xf]
    %v2302 = vld [vmem:[%s2279 + $0x58] sm:$0xf]
    %v2303 = vld [vmem:[%s2279 + $0x5c] sm:$0xf]
    %v2304 = vld [vmem:[%s2279 + $0x60] sm:$0xf]
    %v2305 = vld [vmem:[%s2279 + $0x64] sm:$0xf]
    %v2306 = vld [vmem:[%s2279 + $0x68] sm:$0xf]
    %v2307 = vld [vmem:[%s2279 + $0x6c] sm:$0xf]
    %v2308 = vld [vmem:[%s2279 + $0x70] sm:$0xf]
    %v2309 = vld [vmem:[%s2279 + $0x74] sm:$0xf]
    %v2310 = vld [vmem:[%s2279 + $0x78] sm:$0xf]
    %v2311 = vld [vmem:[%s2279 + $0x7c] sm:$0xf]
    %v2312 = vld [vmem:[%s11 + $0x9] sm:$0x1]
    %v2313 = vlaneseq
    %v2314 = vshrl.u32 %v2313, 7
    %v2315 = vsub.s32 0, %v2314
    %v2316 = vrot.slane %v2312, %v2315
    %v2349 = vunpack.c.l.b16 %v2280
    %v2350 = vunpack.c.l.b16 %v2281
    %v2351 = vunpack.c.l.b16 %v2282
    %v2352 = vunpack.c.l.b16 %v2283
    %v2353 = vunpack.c.l.b16 %v2284
    %v2354 = vunpack.c.l.b16 %v2285
    %v2355 = vunpack.c.l.b16 %v2286
    %v2356 = vunpack.c.l.b16 %v2287
    %v2357 = vunpack.c.l.b16 %v2288
    %v2358 = vunpack.c.l.b16 %v2289
    %v2359 = vunpack.c.l.b16 %v2290
    %v2360 = vunpack.c.l.b16 %v2291
    %v2361 = vunpack.c.l.b16 %v2292
    %v2362 = vunpack.c.l.b16 %v2293
    %v2363 = vunpack.c.l.b16 %v2294
    %v2364 = vunpack.c.l.b16 %v2295
    %v2365 = vunpack.c.l.b16 %v2296
    %v2366 = vunpack.c.l.b16 %v2297
    %v2367 = vunpack.c.l.b16 %v2298
    %v2368 = vunpack.c.l.b16 %v2299
    %v2369 = vunpack.c.l.b16 %v2300
    %v2370 = vunpack.c.l.b16 %v2301
    %v2371 = vunpack.c.l.b16 %v2302
    %v2372 = vunpack.c.l.b16 %v2303
    %v2373 = vunpack.c.l.b16 %v2304
    %v2374 = vunpack.c.l.b16 %v2305
    %v2375 = vunpack.c.l.b16 %v2306
    %v2376 = vunpack.c.l.b16 %v2307
    %v2377 = vunpack.c.l.b16 %v2308
    %v2378 = vunpack.c.l.b16 %v2309
    %v2379 = vunpack.c.l.b16 %v2310
    %v2380 = vunpack.c.l.b16 %v2311
    %v2381 = vpack.c.b16 %v2350, %v2349
    %v2382 = vpack.c.b16 %v2352, %v2351
    %v2383 = vpack.c.b16 %v2354, %v2353
    %v2384 = vpack.c.b16 %v2356, %v2355
    %v2385 = vpack.c.b16 %v2358, %v2357
    %v2386 = vpack.c.b16 %v2360, %v2359
    %v2387 = vpack.c.b16 %v2362, %v2361
    %v2388 = vpack.c.b16 %v2364, %v2363
    %v2389 = vpack.c.b16 %v2366, %v2365
    %v2390 = vpack.c.b16 %v2368, %v2367
    %v2391 = vpack.c.b16 %v2370, %v2369
    %v2392 = vpack.c.b16 %v2372, %v2371
    %v2393 = vpack.c.b16 %v2374, %v2373
    %v2394 = vpack.c.b16 %v2376, %v2375
    %v2395 = vpack.c.b16 %v2378, %v2377
    %v2396 = vpack.c.b16 %v2380, %v2379
    %2413 = vmatprep.subr.bf16.mxu0 0
    %2414 = vmatpush1.bf16.msra.mxu0 %v2381
    %2415 = vmatprep.subr.bf16.mxu0 0
    %2416 = vmatpush1.bf16.msra.mxu0 %v2382
    %2417 = vmatprep.subr.bf16.mxu0 0
    %2418 = vmatpush1.bf16.msra.mxu0 %v2383
    %2419 = vmatprep.subr.bf16.mxu0 0
    %2420 = vmatpush1.bf16.msra.mxu0 %v2384
    %2421 = vmatprep.subr.bf16.mxu0 0
    %2422 = vmatpush1.bf16.msra.mxu0 %v2385
    %2423 = vmatprep.subr.bf16.mxu0 0
    %2424 = vmatpush1.bf16.msra.mxu0 %v2386
    %2425 = vmatprep.subr.bf16.mxu0 0
    %2426 = vmatpush1.bf16.msra.mxu0 %v2387
    %2427 = vmatprep.subr.bf16.mxu0 0
    %2428 = vmatpush1.bf16.msra.mxu0 %v2388
    %2429 = vmatprep.subr.bf16.mxu0 0
    %2430 = vmatpush1.bf16.msra.mxu0 %v2389
    %2431 = vmatprep.subr.bf16.mxu0 0
    %2432 = vmatpush1.bf16.msra.mxu0 %v2390
    %2433 = vmatprep.subr.bf16.mxu0 0
    %2434 = vmatpush1.bf16.msra.mxu0 %v2391
    %2435 = vmatprep.subr.bf16.mxu0 0
    %2436 = vmatpush1.bf16.msra.mxu0 %v2392
    %2437 = vmatprep.subr.bf16.mxu0 0
    %2438 = vmatpush1.bf16.msra.mxu0 %v2393
    %2439 = vmatprep.subr.bf16.mxu0 0
    %2440 = vmatpush1.bf16.msra.mxu0 %v2394
    %2441 = vmatprep.subr.bf16.mxu0 0
    %2442 = vmatpush1.bf16.msra.mxu0 %v2395
    %2443 = vmatprep.subr.bf16.mxu0 0
    %2444 = vmatpush1.bf16.msra.mxu0 %v2396
    %2445 = vmatprep.mubr.bf16.mxu0 %v2278
    %2446 = vmatmul.mubr.bf16.gmra.mrb[0].mxu0 %v2277
    %v2447 = vpop.f32.mrb[0].mxu0
    %v2448 = vadd.f32 %v2316, %v2447
    %v2449 = vpop.f32.mrb[0].mxu0
    %v2450 = vpop.f32.mrb[0].mxu0
    %v2451 = vadd.f32 %v2316, %v2450
    %v2452 = vpop.f32.mrb[0].mxu0
    %2453 = vdwg.mxu0
    %v2454 = vadd.f32 %v2162, %v2448
    %v2455 = vadd.f32 %v2163, %v2451
    %v2456 = vld [vmem:[%s11 + $0xa] sm:$0x1]
    %v2457 = vld [vmem:[%s11 + $0xb] sm:$0x1]
    %v2458 = vsel %vm248, %v2454, 0.0
    %2459 = vadd.xlane.f32.xlu0 %v2458
    %v2460 = vpop.xlane.xlu0 %2459
    %v2461 = vsel %vm248, %v2455, 0.0
    %2462 = vadd.xlane.f32.xlu0 %v2461
    %v2463 = vpop.xlane.xlu0 %2462
    %v2464 = vmul.f32 %v2460, %v954
    %v2465 = vmul.f32 %v2463, %v954
    %v2466 = vmul.f32 %v2454, %v2454
    %v2467 = vmul.f32 %v2455, %v2455
    %v2468 = vsel %vm248, %v2466, 0.0
    %2469 = vadd.xlane.f32.xlu0 %v2468
    %v2470 = vpop.xlane.xlu0 %2469
    %v2471 = vsel %vm248, %v2467, 0.0
    %2472 = vadd.xlane.f32.xlu0 %v2471
    %v2473 = vpop.xlane.xlu0 %2472
    %v2474 = vmul.f32 %v2470, %v954
    %v2475 = vmul.f32 %v2473, %v954
    %v2476 = vsub.f32 %v2454, %v2464
    %v2477 = vsub.f32 %v2455, %v2465
    %v2478 = vmul.f32 %v2464, %v2464
    %v2479 = vmul.f32 %v2465, %v2465
    %v2480 = vsub.f32 %v2474, %v2478
    %v2481 = vsub.f32 %v2475, %v2479
    %v2482 = vadd.f32 %v2480, 1e-05
    %v2483 = vadd.f32 %v2481, 1e-05
    %v2484 = vrsqrt.pop %v2482
    %v2485 = vrsqrt.pop %v2483
    %v2486 = vmul.f32 %v2476, %v2484
    %v2487 = vmul.f32 %v2477, %v2485
    %v2488 = vlaneseq
    %v2489 = vshrl.u32 %v2488, 7
    %v2490 = vsub.s32 0, %v2489
    %v2491 = vrot.slane %v2456, %v2490
    %v2492 = vmul.f32 %v2486, %v2491
    %v2493 = vmul.f32 %v2487, %v2491
    %v2494 = vlaneseq
    %v2495 = vshrl.u32 %v2494, 7
    %v2496 = vsub.s32 0, %v2495
    %v2497 = vrot.slane %v2457, %v2496
    %v2498 = vadd.f32 %v2492, %v2497
    %v2499 = vadd.f32 %v2493, %v2497
    %v2500 = vld [vmem:[%s3] sm:$0x3]
    %v2502 = vsel %vm340, %v2500, 0
    %2504 = vmatprep.subr.mxu0 0.0
    %2505 = vmatpush1.msra.mxu0 %v2498
    %2506 = vmatprep.subr.mxu0 0.0
    %2507 = vmatpush1.msra.mxu0 %v2499
    %2508 = vmatprep.subr.mxu0 0.0
    %2509 = vmatpush1.msra.mxu0 0.0
    %2510 = vmatprep.subr.mxu0 0.0
    %2511 = vmatpush1.msra.mxu0 0.0
    %2512 = vmatprep.subr.mxu0 0.0
    %2513 = vmatpush1.msra.mxu0 0.0
    %2514 = vmatprep.subr.mxu0 0.0
    %2515 = vmatpush1.msra.mxu0 0.0
    %2516 = vmatprep.subr.mxu0 0.0
    %2517 = vmatpush1.msra.mxu0 0.0
    %2518 = vmatprep.subr.mxu0 0.0
    %2519 = vmatpush1.msra.mxu0 0.0
    %2520 = vmatprep.subr.mxu0 0.0
    %2521 = vmatpush1.msra.mxu0 0.0
    %2522 = vmatprep.subr.mxu0 0.0
    %2523 = vmatpush1.msra.mxu0 0.0
    %2524 = vmatprep.subr.mxu0 0.0
    %2525 = vmatpush1.msra.mxu0 0.0
    %2526 = vmatprep.subr.mxu0 0.0
    %2527 = vmatpush1.msra.mxu0 0.0
    %2528 = vmatprep.subr.mxu0 0.0
    %2529 = vmatpush1.msra.mxu0 0.0
    %2530 = vmatprep.subr.mxu0 0.0
    %2531 = vmatpush1.msra.mxu0 0.0
    %2532 = vmatprep.subr.mxu0 0.0
    %2533 = vmatpush1.msra.mxu0 0.0
    %2534 = vmatprep.subr.mxu0 0.0
    %2535 = vmatpush1.msra.mxu0 0.0
    %2536 = vmatprep.subr.mxu0 0.0
    %2537 = vmatpush1.msra.mxu0 0.0
    %2538 = vmatprep.subr.mxu0 0.0
    %2539 = vmatpush1.msra.mxu0 0.0
    %2540 = vmatprep.subr.mxu0 0.0
    %2541 = vmatpush1.msra.mxu0 0.0
    %2542 = vmatprep.subr.mxu0 0.0
    %2543 = vmatpush1.msra.mxu0 0.0
    %2544 = vmatprep.subr.mxu0 0.0
    %2545 = vmatpush1.msra.mxu0 0.0
    %2546 = vmatprep.subr.mxu0 0.0
    %2547 = vmatpush1.msra.mxu0 0.0
    %2548 = vmatprep.subr.mxu0 0.0
    %2549 = vmatpush1.msra.mxu0 0.0
    %2550 = vmatprep.subr.mxu0 0.0
    %2551 = vmatpush1.msra.mxu0 0.0
    %2552 = vmatprep.subr.mxu0 0.0
    %2553 = vmatpush1.msra.mxu0 0.0
    %2554 = vmatprep.subr.mxu0 0.0
    %2555 = vmatpush1.msra.mxu0 0.0
    %2556 = vmatprep.subr.mxu0 0.0
    %2557 = vmatpush1.msra.mxu0 0.0
    %2558 = vmatprep.subr.mxu0 0.0
    %2559 = vmatpush1.msra.mxu0 0.0
    %2560 = vmatprep.subr.mxu0 0.0
    %2561 = vmatpush1.msra.mxu0 0.0
    %2562 = vmatprep.subr.mxu0 0.0
    %2563 = vmatpush1.msra.mxu0 0.0
    %2564 = vmatprep.subr.mxu0 0.0
    %2565 = vmatpush1.msra.mxu0 0.0
    %2566 = vmatprep.subr.mxu0 0.0
    %2567 = vmatpush1.msra.mxu0 0.0
    %2568 = vmatprep.mubr.f32.mxu0 0.0
    %2569 = vmatmul.mubr.f32.gmra.mrb[0].mxu0 %v2502
    %v2570 = vpop.f32.mrb[0].mxu0
    %v2571 = vadd.f32 0.0, %v2570
    %v2572 = vpop.f32.mrb[0].mxu0
    %2573 = vdwg.mxu0
    %v2574 = vld [vmem:[%s11 + $0xc] sm:$0x1]
    %v2575 = vld [vmem:[%s11 + $0xd] sm:$0x1]
    %vm2576 = vcmask 517120
    %v2577 = vsel %vm2576, %v2571, 0.0
    %2578 = vadd.xlane.f32.xlu0 %v2577
    %v2579 = vpop.xlane.xlu0 %2578
    %v2580 = vmul.f32 %v2579, %v954
    %v2581 = vmul.f32 %v2571, %v2571
    %v2582 = vsel %vm2576, %v2581, 0.0
    %2583 = vadd.xlane.f32.xlu0 %v2582
    %v2584 = vpop.xlane.xlu0 %2583
    %v2585 = vmul.f32 %v2584, %v954
    %v2586 = vsub.f32 %v2571, %v2580
    %v2587 = vmul.f32 %v2580, %v2580
    %v2588 = vsub.f32 %v2585, %v2587
    %v2589 = vadd.f32 %v2588, 1e-05
    %v2590 = vrsqrt.pop %v2589
    %v2591 = vmul.f32 %v2586, %v2590
    %v2592 = vlaneseq
    %v2593 = vshrl.u32 %v2592, 7
    %v2594 = vsub.s32 0, %v2593
    %v2595 = vrot.slane %v2574, %v2594
    %v2596 = vmul.f32 %v2591, %v2595
    %v2597 = vlaneseq
    %v2598 = vshrl.u32 %v2597, 7
    %v2599 = vsub.s32 0, %v2598
    %v2600 = vrot.slane %v2575, %v2599
    %v2601 = vadd.f32 %v2596, %v2600
    %v2602 = vld [vmem:[%s12] sm:$0xff]
    %v2603 = vld [vmem:[%s12 + $0x8] sm:$0xff]
    %v2604 = vld [vmem:[%s12 + $0x10] sm:$0xff]
    %v2605 = vld [vmem:[%s12 + $0x18] sm:$0xff]
    %v2606 = vld [vmem:[%s12 + $0x20] sm:$0xff]
    %v2607 = vld [vmem:[%s12 + $0x28] sm:$0xff]
    %v2608 = vld [vmem:[%s12 + $0x30] sm:$0xff]
    %v2609 = vld [vmem:[%s12 + $0x38] sm:$0xff]
    %v2610 = vld [vmem:[%s12 + $0x40] sm:$0x1]
    %v2611 = vlaneseq
    %v2612 = vshrl.u32 %v2611, 7
    %v2613 = vsub.s32 0, %v2612
    %v2614 = vrot.slane %v2610, %v2613
    %v2616 = vsel %vm248, %v2601, 0
    %2618 = vmatprep.subr.mxu0 0.0
    %2619 = vmatpush1.msra.mxu0 %v2602
    %2620 = vmatprep.subr.mxu0 0.0
    %2621 = vmatpush1.msra.mxu0 %v2603
    %2622 = vmatprep.subr.mxu0 0.0
    %2623 = vmatpush1.msra.mxu0 %v2604
    %2624 = vmatprep.subr.mxu0 0.0
    %2625 = vmatpush1.msra.mxu0 %v2605
    %2626 = vmatprep.subr.mxu0 0.0
    %2627 = vmatpush1.msra.mxu0 %v2606
    %2628 = vmatprep.subr.mxu0 0.0
    %2629 = vmatpush1.msra.mxu0 %v2607
    %2630 = vmatprep.subr.mxu0 0.0
    %2631 = vmatpush1.msra.mxu0 %v2608
    %2632 = vmatprep.subr.mxu0 0.0
    %2633 = vmatpush1.msra.mxu0 %v2609
    %2634 = vmatprep.subr.mxu0 0.0
    %2635 = vmatpush1.msra.mxu0 0.0
    %2636 = vmatprep.subr.mxu0 0.0
    %2637 = vmatpush1.msra.mxu0 0.0
    %2638 = vmatprep.subr.mxu0 0.0
    %2639 = vmatpush1.msra.mxu0 0.0
    %2640 = vmatprep.subr.mxu0 0.0
    %2641 = vmatpush1.msra.mxu0 0.0
    %2642 = vmatprep.subr.mxu0 0.0
    %2643 = vmatpush1.msra.mxu0 0.0
    %2644 = vmatprep.subr.mxu0 0.0
    %2645 = vmatpush1.msra.mxu0 0.0
    %2646 = vmatprep.subr.mxu0 0.0
    %2647 = vmatpush1.msra.mxu0 0.0
    %2648 = vmatprep.subr.mxu0 0.0
    %2649 = vmatpush1.msra.mxu0 0.0
    %2650 = vmatprep.subr.mxu0 0.0
    %2651 = vmatpush1.msra.mxu0 0.0
    %2652 = vmatprep.subr.mxu0 0.0
    %2653 = vmatpush1.msra.mxu0 0.0
    %2654 = vmatprep.subr.mxu0 0.0
    %2655 = vmatpush1.msra.mxu0 0.0
    %2656 = vmatprep.subr.mxu0 0.0
    %2657 = vmatpush1.msra.mxu0 0.0
    %2658 = vmatprep.subr.mxu0 0.0
    %2659 = vmatpush1.msra.mxu0 0.0
    %2660 = vmatprep.subr.mxu0 0.0
    %2661 = vmatpush1.msra.mxu0 0.0
    %2662 = vmatprep.subr.mxu0 0.0
    %2663 = vmatpush1.msra.mxu0 0.0
    %2664 = vmatprep.subr.mxu0 0.0
    %2665 = vmatpush1.msra.mxu0 0.0
    %2666 = vmatprep.subr.mxu0 0.0
    %2667 = vmatpush1.msra.mxu0 0.0
    %2668 = vmatprep.subr.mxu0 0.0
    %2669 = vmatpush1.msra.mxu0 0.0
    %2670 = vmatprep.subr.mxu0 0.0
    %2671 = vmatpush1.msra.mxu0 0.0
    %2672 = vmatprep.subr.mxu0 0.0
    %2673 = vmatpush1.msra.mxu0 0.0
    %2674 = vmatprep.subr.mxu0 0.0
    %2675 = vmatpush1.msra.mxu0 0.0
    %2676 = vmatprep.subr.mxu0 0.0
    %2677 = vmatpush1.msra.mxu0 0.0
    %2678 = vmatprep.subr.mxu0 0.0
    %2679 = vmatpush1.msra.mxu0 0.0
    %2680 = vmatprep.subr.mxu0 0.0
    %2681 = vmatpush1.msra.mxu0 0.0
    %2682 = vmatprep.mubr.f32.mxu0 0.0
    %2683 = vmatmul.mubr.f32.gmra.mrb[0].mxu0 %v2616
    %v2684 = vpop.f32.mrb[0].mxu0
    %v2685 = vadd.f32 %v2614, %v2684
    %v2686 = vpop.f32.mrb[0].mxu0
    %2687 = vdwg.mxu0
    %vm2688 = vcmask 58368
    %2689 = vst.msk [vmem:[#allocation2] sm:$0x3] %vm2688, %v2685
    // Predicated region
    $region54: #{tpu_custom_call.1} parent=1 // pred_check
      _
    $region55: #{tpu_custom_call.1} parent=1 // pred_check_branch
      %2691 = sbr.rel (0) target = $region57
    $region56: #{tpu_custom_call.1} parent=1 // pred_region
      %s2693 = ssub.s32 32, 32
      %2694 = vsyncadd [#allocation3], %s2693
      %s2696 = sshll.u32 [#allocation2], 4
      %s2697 = int_to_ptr.vmem [resolvable:$true] %s2696
      %2699 = dma.vmem_to_hbm [thread:$0]  %s2697, 32, %s13, [#allocation3]
    $region57: #{tpu_custom_call.1} parent=1 // pred_fallthru
      _
    // Predicated region
    $region58: #{tpu_custom_call.1} parent=1 // pred_check
      _
    $region59: #{tpu_custom_call.1} parent=1 // pred_check_branch
      %2701 = sbr.rel (0) target = $region61
    $region60: #{tpu_custom_call.1} parent=1 // pred_region
      %2702 = dma.done [#allocation3], 32
    $region61: #{tpu_custom_call.1} parent=1 // pred_fallthru
      _
    %2703 = vsyncpa [#allocation3], 1

</llo_original>
